<compile_context>
chip_gen: v7x
topology: tpu7x:2x2x1
jax: 0.10.0
libtpu: 0.0.40
codegen_flags: <defaults>
</compile_context>

<pallas_src>
import jax
import jax.numpy as jnp
from jax import lax
from jax.experimental import pallas as pl
from jax.experimental.pallas import tpu as pltpu


def _conv3x3(x, w, bias):
    """Zero-padded 3x3 single-channel conv on (n, R, C) maps.

    Shifted-adds on the VPU; shifts via pltpu.roll (XLU) + iota boundary masks
    instead of concatenate-padding.  `w` is a 3x3 nested list of hoisted SMEM
    scalars, `bias` a scalar.
    """
    n, R, Cc = x.shape
    row = lax.broadcasted_iota(jnp.int32, (n, R, Cc), 1)
    col = lax.broadcasted_iota(jnp.int32, (n, R, Cc), 2)

    # Row-shifted, zero-filled copies (built once, reused for all column taps).
    x_m1 = jnp.where(row >= 1, pltpu.roll(x, shift=1, axis=1), 0.0)          # x[r-1, c]
    x_p1 = jnp.where(row < R - 1, pltpu.roll(x, shift=R - 1, axis=1), 0.0)   # x[r+1, c]
    rows3 = (x_m1, x, x_p1)                                                  # index di+1

    cmask_m1 = col >= 1
    cmask_p1 = col < Cc - 1

    # Two interleaved accumulators shorten the 9-deep add chain.
    acc = [jnp.full((n, R, Cc), bias, dtype=jnp.float32),
           jnp.zeros((n, R, Cc), dtype=jnp.float32)]
    t = 0
    for di in (-1, 0, 1):
        xr = rows3[di + 1]
        for dj in (-1, 0, 1):
            if dj == 0:
                y = xr
            elif dj == -1:
                y = jnp.where(cmask_m1, pltpu.roll(xr, shift=1, axis=2), 0.0)
            else:
                y = jnp.where(cmask_p1, pltpu.roll(xr, shift=Cc - 1, axis=2), 0.0)
            acc[t % 2] = acc[t % 2] + w[di + 1][dj + 1] * y
            t += 1
    return acc[0] + acc[1]


def _wavelet_level_kernel(pw_ref, pb_ref, uw_ref, ub_ref, x_ref, out_ref):
    """One full wavelet level for a (Bb, C, H, W) block -> (Bb, 4C, H/2, W/2)."""
    Bb, C, Hd, Wd = x_ref.shape
    H2, W2 = Hd // 2, Wd // 2
    n = Bb * C

    # Hoist all SMEM weight / bias reads out of the tap loops.
    pw = [[pw_ref[i, j] for j in range(3)] for i in range(3)]
    uw = [[uw_ref[i, j] for j in range(3)] for i in range(3)]
    pwT = [[pw[j][i] for j in range(3)] for i in range(3)]
    uwT = [[uw[j][i] for j in range(3)] for i in range(3)]
    pb = pb_ref[0]
    ub = ub_ref[0]

    # channel2batch: every map is single-channel; leading-dim merge is free.
    x = x_ref[...].astype(jnp.float32).reshape(n, Hd, Wd)

    # ---- even/odd ROW split (constant 0/1 selector matmuls on the idle MXU) --
    r_i = lax.broadcasted_iota(jnp.int32, (H2, Hd), 0)
    h_i = lax.broadcasted_iota(jnp.int32, (H2, Hd), 1)
    e_even = jnp.broadcast_to((h_i == 2 * r_i).astype(jnp.float32), (n, H2, Hd))
    e_odd = jnp.broadcast_to((h_i == 2 * r_i + 1).astype(jnp.float32), (n, H2, Hd))
    L = jnp.einsum('nrh,nhw->nrw', e_even, x, preferred_element_type=jnp.float32)
    Hh = jnp.einsum('nrh,nhw->nrw', e_odd, x, preferred_element_type=jnp.float32)

    # ---- row lifting:  H' = H - P(L) ;  L' = L + U(H') -----------------------
    Hn = Hh - _conv3x3(L, pw, pb)
    Ln = L + _conv3x3(Hn, uw, ub)

    # ---- even/odd COLUMN split selectors -------------------------------------
    w_i = lax.broadcasted_iota(jnp.int32, (Wd, W2), 0)
    k_i = lax.broadcasted_iota(jnp.int32, (Wd, W2), 1)
    s_even = jnp.broadcast_to((w_i == 2 * k_i).astype(jnp.float32), (n, Wd, W2))
    s_odd = jnp.broadcast_to((w_i == 2 * k_i + 1).astype(jnp.float32), (n, Wd, W2))

    def col_lift(a):
        # Column lifting on untransposed maps with transposed conv weights:
        # identical to the reference's permute -> lift -> permute-back.
        ae = jnp.einsum('nhw,nwk->nhk', a, s_even, preferred_element_type=jnp.float32)
        ao = jnp.einsum('nhw,nwk->nhk', a, s_odd, preferred_element_type=jnp.float32)
        hi = ao - _conv3x3(ae, pwT, pb)
        lo = ae + _conv3x3(hi, uwT, ub)
        return lo, hi

    LL, HL = col_lift(Ln)
    LH, HH = col_lift(Hn)

    # ---- batch2channel + direct sub-band writes into the final layout --------
    od = out_ref.dtype
    out_ref[:, 0 * C:1 * C, :, :] = LL.reshape(Bb, C, H2, W2).astype(od)
    out_ref[:, 1 * C:2 * C, :, :] = HL.reshape(Bb, C, H2, W2).astype(od)
    out_ref[:, 2 * C:3 * C, :, :] = LH.reshape(Bb, C, H2, W2).astype(od)
    out_ref[:, 3 * C:4 * C, :, :] = HH.reshape(Bb, C, H2, W2).astype(od)


def _choose_block_batch(B, C, Hd, Wd, budget_bytes=8 * 1024 * 1024):
    """Largest batch block keeping (I/O double buffers + live temporaries) small."""
    per_b = C * Hd * Wd * 4 * 16          # ~16x: in+out double buffers + temps
    bb = max(1, min(B, budget_bytes // max(per_b, 1)))
    while B % bb:
        bb -= 1
    return bb


def learn_wavelet_forward(x, params):
    """One learn_wavelet level: (B, C, H, W) -> (B, 4C, H//2, W//2), rev=False."""
    pw, pb, uw, ub = params
    B, C, Hd, Wd = x.shape
    assert Hd % 2 == 0 and Wd % 2 == 0, "spatial dims must be even"
    H2, W2 = Hd // 2, Wd // 2
    Bb = _choose_block_batch(B, C, Hd, Wd)

    smem_spec = pl.BlockSpec(memory_space=pltpu.SMEM)
    in_spec = pl.BlockSpec((Bb, C, Hd, Wd), lambda i: (i, 0, 0, 0))
    out_spec = pl.BlockSpec((Bb, 4 * C, H2, W2), lambda i: (i, 0, 0, 0))

    return pl.pallas_call(
        _wavelet_level_kernel,
        out_shape=jax.ShapeDtypeStruct((B, 4 * C, H2, W2), x.dtype),
        grid_spec=pltpu.PrefetchScalarGridSpec(
            num_scalar_prefetch=0,
            grid=(B // Bb,),
            in_specs=[smem_spec, smem_spec, smem_spec, smem_spec, in_spec],
            out_specs=out_spec),
        compiler_params=pltpu.CompilerParams(
            dimension_semantics=("parallel",),
            vmem_limit_bytes=32 * 1024 * 1024),
    )(pw, pb, uw, ub, x)


def wavenet_forward(x, params_list, rev=False):
    """WaveNet.forward with down_num = len(params_list) (rev=False path only)."""
    if rev:
        # TODO(synk): inverse (rev=True) path not implemented.
        raise NotImplementedError("rev=True not implemented")
    out = x
    for p in params_list:
        out = learn_wavelet_forward(out, p)
    return out


def init_lifting_params(key):
    kp, kb, ku, kub = jax.random.split(key, 4)
    pw = 0.1 * jax.random.normal(kp, (3, 3), jnp.float32)
    pb = 0.01 * jax.random.normal(kb, (1,), jnp.float32)
    uw = 0.1 * jax.random.normal(ku, (3, 3), jnp.float32)
    ub = 0.01 * jax.random.normal(kub, (1,), jnp.float32)
    return (pw, pb, uw, ub)


if __name__ == "__main__":
    key = jax.random.PRNGKey(0)
    kx, kw = jax.random.split(key)

    B, C, Hd, Wd = 2, 3, 16, 16              # WaveNet input: (b, 3, h, w)
    down_num = 1
    x = jax.random.normal(kx, (B, C, Hd, Wd), jnp.float32)
    params_list = [init_lifting_params(jax.random.fold_in(kw, i))
                   for i in range(down_num)]

    fwd = jax.jit(wavenet_forward)
    out = jax.block_until_ready(fwd(x, params_list))

    expected = (B, C * (4 ** down_num), Hd // (2 ** down_num), Wd // (2 ** down_num))
    assert out.shape == expected, (out.shape, expected)
    assert bool(jnp.all(jnp.isfinite(out)))
    print("KERNEL_OK")
</pallas_src>

<mosaic_0001>
module attributes {stable_mosaic.version = 11 : i64} {
  func.func @_wavelet_level_kernel(%arg0: i32, %arg1: memref<3x3xf32, #tpu.memory_space<smem>>, %arg2: memref<1xf32, #tpu.memory_space<smem>>, %arg3: memref<3x3xf32, #tpu.memory_space<smem>>, %arg4: memref<1xf32, #tpu.memory_space<smem>>, %arg5: memref<2x3x16x16xf32, #tpu.memory_space<vmem>>, %arg6: memref<2x12x8x8xf32, #tpu.memory_space<vmem>>) attributes {dimension_semantics = [#tpu.dimension_semantics<parallel>], iteration_bounds = array<i64: 1>, scalar_prefetch = 0 : i64, scratch_operands = 0 : i64, tpu.core_type = #tpu.core_type<tc>, window_params = [{transform_indices = @transform_0, window_bounds = array<i64: 3, 3>}, {transform_indices = @transform_1, window_bounds = array<i64: 1>}, {transform_indices = @transform_2, window_bounds = array<i64: 3, 3>}, {transform_indices = @transform_3, window_bounds = array<i64: 1>}, {transform_indices = @transform_4, window_bounds = array<i64: 2, 3, 16, 16>}, {transform_indices = @transform_5, window_bounds = array<i64: 2, 12, 8, 8>}]} {
    %c0 = arith.constant 0 : index
    %c0_0 = arith.constant 0 : index
    %0 = memref.load %arg1[%c0, %c0_0] : memref<3x3xf32, #tpu.memory_space<smem>>
    %c0_1 = arith.constant 0 : index
    %c1 = arith.constant 1 : index
    %1 = memref.load %arg1[%c0_1, %c1] : memref<3x3xf32, #tpu.memory_space<smem>>
    %c0_2 = arith.constant 0 : index
    %c2 = arith.constant 2 : index
    %2 = memref.load %arg1[%c0_2, %c2] : memref<3x3xf32, #tpu.memory_space<smem>>
    %c1_3 = arith.constant 1 : index
    %c0_4 = arith.constant 0 : index
    %3 = memref.load %arg1[%c1_3, %c0_4] : memref<3x3xf32, #tpu.memory_space<smem>>
    %c1_5 = arith.constant 1 : index
    %c1_6 = arith.constant 1 : index
    %4 = memref.load %arg1[%c1_5, %c1_6] : memref<3x3xf32, #tpu.memory_space<smem>>
    %c1_7 = arith.constant 1 : index
    %c2_8 = arith.constant 2 : index
    %5 = memref.load %arg1[%c1_7, %c2_8] : memref<3x3xf32, #tpu.memory_space<smem>>
    %c2_9 = arith.constant 2 : index
    %c0_10 = arith.constant 0 : index
    %6 = memref.load %arg1[%c2_9, %c0_10] : memref<3x3xf32, #tpu.memory_space<smem>>
    %c2_11 = arith.constant 2 : index
    %c1_12 = arith.constant 1 : index
    %7 = memref.load %arg1[%c2_11, %c1_12] : memref<3x3xf32, #tpu.memory_space<smem>>
    %c2_13 = arith.constant 2 : index
    %c2_14 = arith.constant 2 : index
    %8 = memref.load %arg1[%c2_13, %c2_14] : memref<3x3xf32, #tpu.memory_space<smem>>
    %c0_15 = arith.constant 0 : index
    %c0_16 = arith.constant 0 : index
    %9 = memref.load %arg3[%c0_15, %c0_16] : memref<3x3xf32, #tpu.memory_space<smem>>
    %c0_17 = arith.constant 0 : index
    %c1_18 = arith.constant 1 : index
    %10 = memref.load %arg3[%c0_17, %c1_18] : memref<3x3xf32, #tpu.memory_space<smem>>
    %c0_19 = arith.constant 0 : index
    %c2_20 = arith.constant 2 : index
    %11 = memref.load %arg3[%c0_19, %c2_20] : memref<3x3xf32, #tpu.memory_space<smem>>
    %c1_21 = arith.constant 1 : index
    %c0_22 = arith.constant 0 : index
    %12 = memref.load %arg3[%c1_21, %c0_22] : memref<3x3xf32, #tpu.memory_space<smem>>
    %c1_23 = arith.constant 1 : index
    %c1_24 = arith.constant 1 : index
    %13 = memref.load %arg3[%c1_23, %c1_24] : memref<3x3xf32, #tpu.memory_space<smem>>
    %c1_25 = arith.constant 1 : index
    %c2_26 = arith.constant 2 : index
    %14 = memref.load %arg3[%c1_25, %c2_26] : memref<3x3xf32, #tpu.memory_space<smem>>
    %c2_27 = arith.constant 2 : index
    %c0_28 = arith.constant 0 : index
    %15 = memref.load %arg3[%c2_27, %c0_28] : memref<3x3xf32, #tpu.memory_space<smem>>
    %c2_29 = arith.constant 2 : index
    %c1_30 = arith.constant 1 : index
    %16 = memref.load %arg3[%c2_29, %c1_30] : memref<3x3xf32, #tpu.memory_space<smem>>
    %c2_31 = arith.constant 2 : index
    %c2_32 = arith.constant 2 : index
    %17 = memref.load %arg3[%c2_31, %c2_32] : memref<3x3xf32, #tpu.memory_space<smem>>
    %c0_33 = arith.constant 0 : index
    %18 = memref.load %arg2[%c0_33] : memref<1xf32, #tpu.memory_space<smem>>
    %c0_34 = arith.constant 0 : index
    %19 = memref.load %arg4[%c0_34] : memref<1xf32, #tpu.memory_space<smem>>
    %c0_35 = arith.constant 0 : index
    %c0_36 = arith.constant 0 : index
    %c0_37 = arith.constant 0 : index
    %c0_38 = arith.constant 0 : index
    %20 = vector.load %arg5[%c0_35, %c0_36, %c0_37, %c0_38] : memref<2x3x16x16xf32, #tpu.memory_space<vmem>>, vector<2x3x16x16xf32>
    %21 = vector.shape_cast %20 : vector<2x3x16x16xf32> to vector<6x16x16xf32>
    %22 = tpu.iota {dimensions = array<i32: 0>} : vector<8x16xi32>
    %23 = tpu.iota {dimensions = array<i32: 1>} : vector<8x16xi32>
    %c2_i32 = arith.constant 2 : i32
    %24 = vector.broadcast %c2_i32 : i32 to vector<8x16xi32>
    %25 = arith.muli %24, %22 : vector<8x16xi32>
    %26 = arith.cmpi eq, %23, %25 : vector<8x16xi32>
    %27 = arith.extui %26 : vector<8x16xi1> to vector<8x16xi32>
    %28 = arith.sitofp %27 : vector<8x16xi32> to vector<8x16xf32>
    %29 = vector.shape_cast %28 : vector<8x16xf32> to vector<1x8x16xf32>
    %30 = vector.broadcast %29 : vector<1x8x16xf32> to vector<6x8x16xf32>
    %c2_i32_39 = arith.constant 2 : i32
    %31 = vector.broadcast %c2_i32_39 : i32 to vector<8x16xi32>
    %32 = arith.muli %31, %22 : vector<8x16xi32>
    %c1_i32 = arith.constant 1 : i32
    %33 = vector.broadcast %c1_i32 : i32 to vector<8x16xi32>
    %34 = arith.addi %32, %33 : vector<8x16xi32>
    %35 = arith.cmpi eq, %23, %34 : vector<8x16xi32>
    %36 = arith.extui %35 : vector<8x16xi1> to vector<8x16xi32>
    %37 = arith.sitofp %36 : vector<8x16xi32> to vector<8x16xf32>
    %38 = vector.shape_cast %37 : vector<8x16xf32> to vector<1x8x16xf32>
    %39 = vector.broadcast %38 : vector<1x8x16xf32> to vector<6x8x16xf32>
    "tpu.trace_start"() <{level = 10 : i32, message = "nrh,nhw->nrw"}> : () -> ()
    %cst = arith.constant dense<0.000000e+00> : vector<6x8x16xf32>
    %40 = tpu.matmul %30, %21, %cst {dimension_numbers = #tpu.dot_dimension_numbers<[2], [1], [1], [2], [0, 0, 0, 1, 1, 2], [0], [0]>} : vector<6x8x16xf32>, vector<6x16x16xf32>, vector<6x8x16xf32> -> vector<6x8x16xf32>
    %cst_40 = arith.constant dense<0.000000e+00> : vector<6x8x16xf32>
    %41 = tpu.matmul %39, %21, %cst_40 {dimension_numbers = #tpu.dot_dimension_numbers<[2], [1], [1], [2], [0, 0, 0, 1, 1, 2], [0], [0]>} : vector<6x8x16xf32>, vector<6x16x16xf32>, vector<6x8x16xf32> -> vector<6x8x16xf32>
    "tpu.trace_stop"() : () -> ()
    %42 = tpu.iota {dimensions = array<i32: 1>} : vector<6x8x16xi32>
    %43 = tpu.iota {dimensions = array<i32: 2>} : vector<6x8x16xi32>
    %c1_i32_41 = arith.constant 1 : i32
    %44 = vector.broadcast %c1_i32_41 : i32 to vector<6x8x16xi32>
    %45 = arith.cmpi sge, %42, %44 : vector<6x8x16xi32>
    %c1_i32_42 = arith.constant 1 : i32
    %46 = tpu.dynamic_rotate %40 by %c1_i32_42 dim 1 : vector<6x8x16xf32>, i32 -> vector<6x8x16xf32>
    %cst_43 = arith.constant 0.000000e+00 : f32
    %47 = vector.broadcast %cst_43 : f32 to vector<6x8x16xf32>
    %48 = arith.select %45, %46, %47 : vector<6x8x16xi1>, vector<6x8x16xf32>
    %c7_i32 = arith.constant 7 : i32
    %49 = vector.broadcast %c7_i32 : i32 to vector<6x8x16xi32>
    %50 = arith.cmpi slt, %42, %49 : vector<6x8x16xi32>
    %c7_i32_44 = arith.constant 7 : i32
    %51 = tpu.dynamic_rotate %40 by %c7_i32_44 dim 1 : vector<6x8x16xf32>, i32 -> vector<6x8x16xf32>
    %cst_45 = arith.constant 0.000000e+00 : f32
    %52 = vector.broadcast %cst_45 : f32 to vector<6x8x16xf32>
    %53 = arith.select %50, %51, %52 : vector<6x8x16xi1>, vector<6x8x16xf32>
    %c1_i32_46 = arith.constant 1 : i32
    %54 = vector.broadcast %c1_i32_46 : i32 to vector<6x8x16xi32>
    %55 = arith.cmpi sge, %43, %54 : vector<6x8x16xi32>
    %c15_i32 = arith.constant 15 : i32
    %56 = vector.broadcast %c15_i32 : i32 to vector<6x8x16xi32>
    %57 = arith.cmpi slt, %43, %56 : vector<6x8x16xi32>
    %58 = vector.broadcast %18 : f32 to vector<6x8x16xf32>
    %cst_47 = arith.constant 0.000000e+00 : f32
    %59 = vector.broadcast %cst_47 : f32 to vector<6x8x16xf32>
    %c1_i32_48 = arith.constant 1 : i32
    %60 = tpu.dynamic_rotate %48 by %c1_i32_48 dim 2 : vector<6x8x16xf32>, i32 -> vector<6x8x16xf32>
    %cst_49 = arith.constant 0.000000e+00 : f32
    %61 = vector.broadcast %cst_49 : f32 to vector<6x8x16xf32>
    %62 = arith.select %55, %60, %61 : vector<6x8x16xi1>, vector<6x8x16xf32>
    %63 = vector.broadcast %0 : f32 to vector<6x8x16xf32>
    %64 = arith.mulf %63, %62 : vector<6x8x16xf32>
    %65 = arith.addf %58, %64 : vector<6x8x16xf32>
    %66 = vector.broadcast %1 : f32 to vector<6x8x16xf32>
    %67 = arith.mulf %66, %48 : vector<6x8x16xf32>
    %68 = arith.addf %59, %67 : vector<6x8x16xf32>
    %c15_i32_50 = arith.constant 15 : i32
    %69 = tpu.dynamic_rotate %48 by %c15_i32_50 dim 2 : vector<6x8x16xf32>, i32 -> vector<6x8x16xf32>
    %cst_51 = arith.constant 0.000000e+00 : f32
    %70 = vector.broadcast %cst_51 : f32 to vector<6x8x16xf32>
    %71 = arith.select %57, %69, %70 : vector<6x8x16xi1>, vector<6x8x16xf32>
    %72 = vector.broadcast %2 : f32 to vector<6x8x16xf32>
    %73 = arith.mulf %72, %71 : vector<6x8x16xf32>
    %74 = arith.addf %65, %73 : vector<6x8x16xf32>
    %c1_i32_52 = arith.constant 1 : i32
    %75 = tpu.dynamic_rotate %40 by %c1_i32_52 dim 2 : vector<6x8x16xf32>, i32 -> vector<6x8x16xf32>
    %cst_53 = arith.constant 0.000000e+00 : f32
    %76 = vector.broadcast %cst_53 : f32 to vector<6x8x16xf32>
    %77 = arith.select %55, %75, %76 : vector<6x8x16xi1>, vector<6x8x16xf32>
    %78 = vector.broadcast %3 : f32 to vector<6x8x16xf32>
    %79 = arith.mulf %78, %77 : vector<6x8x16xf32>
    %80 = arith.addf %68, %79 : vector<6x8x16xf32>
    %81 = vector.broadcast %4 : f32 to vector<6x8x16xf32>
    %82 = arith.mulf %81, %40 : vector<6x8x16xf32>
    %83 = arith.addf %74, %82 : vector<6x8x16xf32>
    %c15_i32_54 = arith.constant 15 : i32
    %84 = tpu.dynamic_rotate %40 by %c15_i32_54 dim 2 : vector<6x8x16xf32>, i32 -> vector<6x8x16xf32>
    %cst_55 = arith.constant 0.000000e+00 : f32
    %85 = vector.broadcast %cst_55 : f32 to vector<6x8x16xf32>
    %86 = arith.select %57, %84, %85 : vector<6x8x16xi1>, vector<6x8x16xf32>
    %87 = vector.broadcast %5 : f32 to vector<6x8x16xf32>
    %88 = arith.mulf %87, %86 : vector<6x8x16xf32>
    %89 = arith.addf %80, %88 : vector<6x8x16xf32>
    %c1_i32_56 = arith.constant 1 : i32
    %90 = tpu.dynamic_rotate %53 by %c1_i32_56 dim 2 : vector<6x8x16xf32>, i32 -> vector<6x8x16xf32>
    %cst_57 = arith.constant 0.000000e+00 : f32
    %91 = vector.broadcast %cst_57 : f32 to vector<6x8x16xf32>
    %92 = arith.select %55, %90, %91 : vector<6x8x16xi1>, vector<6x8x16xf32>
    %93 = vector.broadcast %6 : f32 to vector<6x8x16xf32>
    %94 = arith.mulf %93, %92 : vector<6x8x16xf32>
    %95 = arith.addf %83, %94 : vector<6x8x16xf32>
    %96 = vector.broadcast %7 : f32 to vector<6x8x16xf32>
    %97 = arith.mulf %96, %53 : vector<6x8x16xf32>
    %98 = arith.addf %89, %97 : vector<6x8x16xf32>
    %c15_i32_58 = arith.constant 15 : i32
    %99 = tpu.dynamic_rotate %53 by %c15_i32_58 dim 2 : vector<6x8x16xf32>, i32 -> vector<6x8x16xf32>
    %cst_59 = arith.constant 0.000000e+00 : f32
    %100 = vector.broadcast %cst_59 : f32 to vector<6x8x16xf32>
    %101 = arith.select %57, %99, %100 : vector<6x8x16xi1>, vector<6x8x16xf32>
    %102 = vector.broadcast %8 : f32 to vector<6x8x16xf32>
    %103 = arith.mulf %102, %101 : vector<6x8x16xf32>
    %104 = arith.addf %95, %103 : vector<6x8x16xf32>
    %105 = arith.addf %104, %98 : vector<6x8x16xf32>
    %106 = arith.subf %41, %105 : vector<6x8x16xf32>
    %107 = tpu.iota {dimensions = array<i32: 1>} : vector<6x8x16xi32>
    %108 = tpu.iota {dimensions = array<i32: 2>} : vector<6x8x16xi32>
    %c1_i32_60 = arith.constant 1 : i32
    %109 = vector.broadcast %c1_i32_60 : i32 to vector<6x8x16xi32>
    %110 = arith.cmpi sge, %107, %109 : vector<6x8x16xi32>
    %c1_i32_61 = arith.constant 1 : i32
    %111 = tpu.dynamic_rotate %106 by %c1_i32_61 dim 1 : vector<6x8x16xf32>, i32 -> vector<6x8x16xf32>
    %cst_62 = arith.constant 0.000000e+00 : f32
    %112 = vector.broadcast %cst_62 : f32 to vector<6x8x16xf32>
    %113 = arith.select %110, %111, %112 : vector<6x8x16xi1>, vector<6x8x16xf32>
    %c7_i32_63 = arith.constant 7 : i32
    %114 = vector.broadcast %c7_i32_63 : i32 to vector<6x8x16xi32>
    %115 = arith.cmpi slt, %107, %114 : vector<6x8x16xi32>
    %c7_i32_64 = arith.constant 7 : i32
    %116 = tpu.dynamic_rotate %106 by %c7_i32_64 dim 1 : vector<6x8x16xf32>, i32 -> vector<6x8x16xf32>
    %cst_65 = arith.constant 0.000000e+00 : f32
    %117 = vector.broadcast %cst_65 : f32 to vector<6x8x16xf32>
    %118 = arith.select %115, %116, %117 : vector<6x8x16xi1>, vector<6x8x16xf32>
    %c1_i32_66 = arith.constant 1 : i32
    %119 = vector.broadcast %c1_i32_66 : i32 to vector<6x8x16xi32>
    %120 = arith.cmpi sge, %108, %119 : vector<6x8x16xi32>
    %c15_i32_67 = arith.constant 15 : i32
    %121 = vector.broadcast %c15_i32_67 : i32 to vector<6x8x16xi32>
    %122 = arith.cmpi slt, %108, %121 : vector<6x8x16xi32>
    %123 = vector.broadcast %19 : f32 to vector<6x8x16xf32>
    %cst_68 = arith.constant 0.000000e+00 : f32
    %124 = vector.broadcast %cst_68 : f32 to vector<6x8x16xf32>
    %c1_i32_69 = arith.constant 1 : i32
    %125 = tpu.dynamic_rotate %113 by %c1_i32_69 dim 2 : vector<6x8x16xf32>, i32 -> vector<6x8x16xf32>
    %cst_70 = arith.constant 0.000000e+00 : f32
    %126 = vector.broadcast %cst_70 : f32 to vector<6x8x16xf32>
    %127 = arith.select %120, %125, %126 : vector<6x8x16xi1>, vector<6x8x16xf32>
    %128 = vector.broadcast %9 : f32 to vector<6x8x16xf32>
    %129 = arith.mulf %128, %127 : vector<6x8x16xf32>
    %130 = arith.addf %123, %129 : vector<6x8x16xf32>
    %131 = vector.broadcast %10 : f32 to vector<6x8x16xf32>
    %132 = arith.mulf %131, %113 : vector<6x8x16xf32>
    %133 = arith.addf %124, %132 : vector<6x8x16xf32>
    %c15_i32_71 = arith.constant 15 : i32
    %134 = tpu.dynamic_rotate %113 by %c15_i32_71 dim 2 : vector<6x8x16xf32>, i32 -> vector<6x8x16xf32>
    %cst_72 = arith.constant 0.000000e+00 : f32
    %135 = vector.broadcast %cst_72 : f32 to vector<6x8x16xf32>
    %136 = arith.select %122, %134, %135 : vector<6x8x16xi1>, vector<6x8x16xf32>
    %137 = vector.broadcast %11 : f32 to vector<6x8x16xf32>
    %138 = arith.mulf %137, %136 : vector<6x8x16xf32>
    %139 = arith.addf %130, %138 : vector<6x8x16xf32>
    %c1_i32_73 = arith.constant 1 : i32
    %140 = tpu.dynamic_rotate %106 by %c1_i32_73 dim 2 : vector<6x8x16xf32>, i32 -> vector<6x8x16xf32>
    %cst_74 = arith.constant 0.000000e+00 : f32
    %141 = vector.broadcast %cst_74 : f32 to vector<6x8x16xf32>
    %142 = arith.select %120, %140, %141 : vector<6x8x16xi1>, vector<6x8x16xf32>
    %143 = vector.broadcast %12 : f32 to vector<6x8x16xf32>
    %144 = arith.mulf %143, %142 : vector<6x8x16xf32>
    %145 = arith.addf %133, %144 : vector<6x8x16xf32>
    %146 = vector.broadcast %13 : f32 to vector<6x8x16xf32>
    %147 = arith.mulf %146, %106 : vector<6x8x16xf32>
    %148 = arith.addf %139, %147 : vector<6x8x16xf32>
    %c15_i32_75 = arith.constant 15 : i32
    %149 = tpu.dynamic_rotate %106 by %c15_i32_75 dim 2 : vector<6x8x16xf32>, i32 -> vector<6x8x16xf32>
    %cst_76 = arith.constant 0.000000e+00 : f32
    %150 = vector.broadcast %cst_76 : f32 to vector<6x8x16xf32>
    %151 = arith.select %122, %149, %150 : vector<6x8x16xi1>, vector<6x8x16xf32>
    %152 = vector.broadcast %14 : f32 to vector<6x8x16xf32>
    %153 = arith.mulf %152, %151 : vector<6x8x16xf32>
    %154 = arith.addf %145, %153 : vector<6x8x16xf32>
    %c1_i32_77 = arith.constant 1 : i32
    %155 = tpu.dynamic_rotate %118 by %c1_i32_77 dim 2 : vector<6x8x16xf32>, i32 -> vector<6x8x16xf32>
    %cst_78 = arith.constant 0.000000e+00 : f32
    %156 = vector.broadcast %cst_78 : f32 to vector<6x8x16xf32>
    %157 = arith.select %120, %155, %156 : vector<6x8x16xi1>, vector<6x8x16xf32>
    %158 = vector.broadcast %15 : f32 to vector<6x8x16xf32>
    %159 = arith.mulf %158, %157 : vector<6x8x16xf32>
    %160 = arith.addf %148, %159 : vector<6x8x16xf32>
    %161 = vector.broadcast %16 : f32 to vector<6x8x16xf32>
    %162 = arith.mulf %161, %118 : vector<6x8x16xf32>
    %163 = arith.addf %154, %162 : vector<6x8x16xf32>
    %c15_i32_79 = arith.constant 15 : i32
    %164 = tpu.dynamic_rotate %118 by %c15_i32_79 dim 2 : vector<6x8x16xf32>, i32 -> vector<6x8x16xf32>
    %cst_80 = arith.constant 0.000000e+00 : f32
    %165 = vector.broadcast %cst_80 : f32 to vector<6x8x16xf32>
    %166 = arith.select %122, %164, %165 : vector<6x8x16xi1>, vector<6x8x16xf32>
    %167 = vector.broadcast %17 : f32 to vector<6x8x16xf32>
    %168 = arith.mulf %167, %166 : vector<6x8x16xf32>
    %169 = arith.addf %160, %168 : vector<6x8x16xf32>
    %170 = arith.addf %169, %163 : vector<6x8x16xf32>
    %171 = arith.addf %40, %170 : vector<6x8x16xf32>
    %172 = tpu.iota {dimensions = array<i32: 0>} : vector<16x8xi32>
    %173 = tpu.iota {dimensions = array<i32: 1>} : vector<16x8xi32>
    %c2_i32_81 = arith.constant 2 : i32
    %174 = vector.broadcast %c2_i32_81 : i32 to vector<16x8xi32>
    %175 = arith.muli %174, %173 : vector<16x8xi32>
    %176 = arith.cmpi eq, %172, %175 : vector<16x8xi32>
    %177 = arith.extui %176 : vector<16x8xi1> to vector<16x8xi32>
    %178 = arith.sitofp %177 : vector<16x8xi32> to vector<16x8xf32>
    %179 = vector.shape_cast %178 : vector<16x8xf32> to vector<1x16x8xf32>
    %180 = vector.broadcast %179 : vector<1x16x8xf32> to vector<6x16x8xf32>
    %c2_i32_82 = arith.constant 2 : i32
    %181 = vector.broadcast %c2_i32_82 : i32 to vector<16x8xi32>
    %182 = arith.muli %181, %173 : vector<16x8xi32>
    %c1_i32_83 = arith.constant 1 : i32
    %183 = vector.broadcast %c1_i32_83 : i32 to vector<16x8xi32>
    %184 = arith.addi %182, %183 : vector<16x8xi32>
    %185 = arith.cmpi eq, %172, %184 : vector<16x8xi32>
    %186 = arith.extui %185 : vector<16x8xi1> to vector<16x8xi32>
    %187 = arith.sitofp %186 : vector<16x8xi32> to vector<16x8xf32>
    %188 = vector.shape_cast %187 : vector<16x8xf32> to vector<1x16x8xf32>
    %189 = vector.broadcast %188 : vector<1x16x8xf32> to vector<6x16x8xf32>
    "tpu.trace_start"() <{level = 10 : i32, message = "nhw,nwk->nhk"}> : () -> ()
    %cst_84 = arith.constant dense<0.000000e+00> : vector<6x8x8xf32>
    %190 = tpu.matmul %171, %180, %cst_84 {dimension_numbers = #tpu.dot_dimension_numbers<[2], [1], [1], [2], [0, 0, 0, 1, 1, 2], [0], [0]>} : vector<6x8x16xf32>, vector<6x16x8xf32>, vector<6x8x8xf32> -> vector<6x8x8xf32>
    %cst_85 = arith.constant dense<0.000000e+00> : vector<6x8x8xf32>
    %191 = tpu.matmul %171, %189, %cst_85 {dimension_numbers = #tpu.dot_dimension_numbers<[2], [1], [1], [2], [0, 0, 0, 1, 1, 2], [0], [0]>} : vector<6x8x16xf32>, vector<6x16x8xf32>, vector<6x8x8xf32> -> vector<6x8x8xf32>
    "tpu.trace_stop"() : () -> ()
    %192 = tpu.iota {dimensions = array<i32: 1>} : vector<6x8x8xi32>
    %193 = tpu.iota {dimensions = array<i32: 2>} : vector<6x8x8xi32>
    %c1_i32_86 = arith.constant 1 : i32
    %194 = vector.broadcast %c1_i32_86 : i32 to vector<6x8x8xi32>
    %195 = arith.cmpi sge, %192, %194 : vector<6x8x8xi32>
    %c1_i32_87 = arith.constant 1 : i32
    %196 = tpu.dynamic_rotate %190 by %c1_i32_87 dim 1 : vector<6x8x8xf32>, i32 -> vector<6x8x8xf32>
    %cst_88 = arith.constant 0.000000e+00 : f32
    %197 = vector.broadcast %cst_88 : f32 to vector<6x8x8xf32>
    %198 = arith.select %195, %196, %197 : vector<6x8x8xi1>, vector<6x8x8xf32>
    %c7_i32_89 = arith.constant 7 : i32
    %199 = vector.broadcast %c7_i32_89 : i32 to vector<6x8x8xi32>
    %200 = arith.cmpi slt, %192, %199 : vector<6x8x8xi32>
    %c7_i32_90 = arith.constant 7 : i32
    %201 = tpu.dynamic_rotate %190 by %c7_i32_90 dim 1 : vector<6x8x8xf32>, i32 -> vector<6x8x8xf32>
    %cst_91 = arith.constant 0.000000e+00 : f32
    %202 = vector.broadcast %cst_91 : f32 to vector<6x8x8xf32>
    %203 = arith.select %200, %201, %202 : vector<6x8x8xi1>, vector<6x8x8xf32>
    %c1_i32_92 = arith.constant 1 : i32
    %204 = vector.broadcast %c1_i32_92 : i32 to vector<6x8x8xi32>
    %205 = arith.cmpi sge, %193, %204 : vector<6x8x8xi32>
    %c7_i32_93 = arith.constant 7 : i32
    %206 = vector.broadcast %c7_i32_93 : i32 to vector<6x8x8xi32>
    %207 = arith.cmpi slt, %193, %206 : vector<6x8x8xi32>
    %208 = vector.broadcast %18 : f32 to vector<6x8x8xf32>
    %cst_94 = arith.constant 0.000000e+00 : f32
    %209 = vector.broadcast %cst_94 : f32 to vector<6x8x8xf32>
    %c1_i32_95 = arith.constant 1 : i32
    %210 = tpu.dynamic_rotate %198 by %c1_i32_95 dim 2 : vector<6x8x8xf32>, i32 -> vector<6x8x8xf32>
    %cst_96 = arith.constant 0.000000e+00 : f32
    %211 = vector.broadcast %cst_96 : f32 to vector<6x8x8xf32>
    %212 = arith.select %205, %210, %211 : vector<6x8x8xi1>, vector<6x8x8xf32>
    %213 = vector.broadcast %0 : f32 to vector<6x8x8xf32>
    %214 = arith.mulf %213, %212 : vector<6x8x8xf32>
    %215 = arith.addf %208, %214 : vector<6x8x8xf32>
    %216 = vector.broadcast %3 : f32 to vector<6x8x8xf32>
    %217 = arith.mulf %216, %198 : vector<6x8x8xf32>
    %218 = arith.addf %209, %217 : vector<6x8x8xf32>
    %c7_i32_97 = arith.constant 7 : i32
    %219 = tpu.dynamic_rotate %198 by %c7_i32_97 dim 2 : vector<6x8x8xf32>, i32 -> vector<6x8x8xf32>
    %cst_98 = arith.constant 0.000000e+00 : f32
    %220 = vector.broadcast %cst_98 : f32 to vector<6x8x8xf32>
    %221 = arith.select %207, %219, %220 : vector<6x8x8xi1>, vector<6x8x8xf32>
    %222 = vector.broadcast %6 : f32 to vector<6x8x8xf32>
    %223 = arith.mulf %222, %221 : vector<6x8x8xf32>
    %224 = arith.addf %215, %223 : vector<6x8x8xf32>
    %c1_i32_99 = arith.constant 1 : i32
    %225 = tpu.dynamic_rotate %190 by %c1_i32_99 dim 2 : vector<6x8x8xf32>, i32 -> vector<6x8x8xf32>
    %cst_100 = arith.constant 0.000000e+00 : f32
    %226 = vector.broadcast %cst_100 : f32 to vector<6x8x8xf32>
    %227 = arith.select %205, %225, %226 : vector<6x8x8xi1>, vector<6x8x8xf32>
    %228 = vector.broadcast %1 : f32 to vector<6x8x8xf32>
    %229 = arith.mulf %228, %227 : vector<6x8x8xf32>
    %230 = arith.addf %218, %229 : vector<6x8x8xf32>
    %231 = vector.broadcast %4 : f32 to vector<6x8x8xf32>
    %232 = arith.mulf %231, %190 : vector<6x8x8xf32>
    %233 = arith.addf %224, %232 : vector<6x8x8xf32>
    %c7_i32_101 = arith.constant 7 : i32
    %234 = tpu.dynamic_rotate %190 by %c7_i32_101 dim 2 : vector<6x8x8xf32>, i32 -> vector<6x8x8xf32>
    %cst_102 = arith.constant 0.000000e+00 : f32
    %235 = vector.broadcast %cst_102 : f32 to vector<6x8x8xf32>
    %236 = arith.select %207, %234, %235 : vector<6x8x8xi1>, vector<6x8x8xf32>
    %237 = vector.broadcast %7 : f32 to vector<6x8x8xf32>
    %238 = arith.mulf %237, %236 : vector<6x8x8xf32>
    %239 = arith.addf %230, %238 : vector<6x8x8xf32>
    %c1_i32_103 = arith.constant 1 : i32
    %240 = tpu.dynamic_rotate %203 by %c1_i32_103 dim 2 : vector<6x8x8xf32>, i32 -> vector<6x8x8xf32>
    %cst_104 = arith.constant 0.000000e+00 : f32
    %241 = vector.broadcast %cst_104 : f32 to vector<6x8x8xf32>
    %242 = arith.select %205, %240, %241 : vector<6x8x8xi1>, vector<6x8x8xf32>
    %243 = vector.broadcast %2 : f32 to vector<6x8x8xf32>
    %244 = arith.mulf %243, %242 : vector<6x8x8xf32>
    %245 = arith.addf %233, %244 : vector<6x8x8xf32>
    %246 = vector.broadcast %5 : f32 to vector<6x8x8xf32>
    %247 = arith.mulf %246, %203 : vector<6x8x8xf32>
    %248 = arith.addf %239, %247 : vector<6x8x8xf32>
    %c7_i32_105 = arith.constant 7 : i32
    %249 = tpu.dynamic_rotate %203 by %c7_i32_105 dim 2 : vector<6x8x8xf32>, i32 -> vector<6x8x8xf32>
    %cst_106 = arith.constant 0.000000e+00 : f32
    %250 = vector.broadcast %cst_106 : f32 to vector<6x8x8xf32>
    %251 = arith.select %207, %249, %250 : vector<6x8x8xi1>, vector<6x8x8xf32>
    %252 = vector.broadcast %8 : f32 to vector<6x8x8xf32>
    %253 = arith.mulf %252, %251 : vector<6x8x8xf32>
    %254 = arith.addf %245, %253 : vector<6x8x8xf32>
    %255 = arith.addf %254, %248 : vector<6x8x8xf32>
    %256 = arith.subf %191, %255 : vector<6x8x8xf32>
    %257 = tpu.iota {dimensions = array<i32: 1>} : vector<6x8x8xi32>
    %258 = tpu.iota {dimensions = array<i32: 2>} : vector<6x8x8xi32>
    %c1_i32_107 = arith.constant 1 : i32
    %259 = vector.broadcast %c1_i32_107 : i32 to vector<6x8x8xi32>
    %260 = arith.cmpi sge, %257, %259 : vector<6x8x8xi32>
    %c1_i32_108 = arith.constant 1 : i32
    %261 = tpu.dynamic_rotate %256 by %c1_i32_108 dim 1 : vector<6x8x8xf32>, i32 -> vector<6x8x8xf32>
    %cst_109 = arith.constant 0.000000e+00 : f32
    %262 = vector.broadcast %cst_109 : f32 to vector<6x8x8xf32>
    %263 = arith.select %260, %261, %262 : vector<6x8x8xi1>, vector<6x8x8xf32>
    %c7_i32_110 = arith.constant 7 : i32
    %264 = vector.broadcast %c7_i32_110 : i32 to vector<6x8x8xi32>
    %265 = arith.cmpi slt, %257, %264 : vector<6x8x8xi32>
    %c7_i32_111 = arith.constant 7 : i32
    %266 = tpu.dynamic_rotate %256 by %c7_i32_111 dim 1 : vector<6x8x8xf32>, i32 -> vector<6x8x8xf32>
    %cst_112 = arith.constant 0.000000e+00 : f32
    %267 = vector.broadcast %cst_112 : f32 to vector<6x8x8xf32>
    %268 = arith.select %265, %266, %267 : vector<6x8x8xi1>, vector<6x8x8xf32>
    %c1_i32_113 = arith.constant 1 : i32
    %269 = vector.broadcast %c1_i32_113 : i32 to vector<6x8x8xi32>
    %270 = arith.cmpi sge, %258, %269 : vector<6x8x8xi32>
    %c7_i32_114 = arith.constant 7 : i32
    %271 = vector.broadcast %c7_i32_114 : i32 to vector<6x8x8xi32>
    %272 = arith.cmpi slt, %258, %271 : vector<6x8x8xi32>
    %273 = vector.broadcast %19 : f32 to vector<6x8x8xf32>
    %cst_115 = arith.constant 0.000000e+00 : f32
    %274 = vector.broadcast %cst_115 : f32 to vector<6x8x8xf32>
    %c1_i32_116 = arith.constant 1 : i32
    %275 = tpu.dynamic_rotate %263 by %c1_i32_116 dim 2 : vector<6x8x8xf32>, i32 -> vector<6x8x8xf32>
    %cst_117 = arith.constant 0.000000e+00 : f32
    %276 = vector.broadcast %cst_117 : f32 to vector<6x8x8xf32>
    %277 = arith.select %270, %275, %276 : vector<6x8x8xi1>, vector<6x8x8xf32>
    %278 = vector.broadcast %9 : f32 to vector<6x8x8xf32>
    %279 = arith.mulf %278, %277 : vector<6x8x8xf32>
    %280 = arith.addf %273, %279 : vector<6x8x8xf32>
    %281 = vector.broadcast %12 : f32 to vector<6x8x8xf32>
    %282 = arith.mulf %281, %263 : vector<6x8x8xf32>
    %283 = arith.addf %274, %282 : vector<6x8x8xf32>
    %c7_i32_118 = arith.constant 7 : i32
    %284 = tpu.dynamic_rotate %263 by %c7_i32_118 dim 2 : vector<6x8x8xf32>, i32 -> vector<6x8x8xf32>
    %cst_119 = arith.constant 0.000000e+00 : f32
    %285 = vector.broadcast %cst_119 : f32 to vector<6x8x8xf32>
    %286 = arith.select %272, %284, %285 : vector<6x8x8xi1>, vector<6x8x8xf32>
    %287 = vector.broadcast %15 : f32 to vector<6x8x8xf32>
    %288 = arith.mulf %287, %286 : vector<6x8x8xf32>
    %289 = arith.addf %280, %288 : vector<6x8x8xf32>
    %c1_i32_120 = arith.constant 1 : i32
    %290 = tpu.dynamic_rotate %256 by %c1_i32_120 dim 2 : vector<6x8x8xf32>, i32 -> vector<6x8x8xf32>
    %cst_121 = arith.constant 0.000000e+00 : f32
    %291 = vector.broadcast %cst_121 : f32 to vector<6x8x8xf32>
    %292 = arith.select %270, %290, %291 : vector<6x8x8xi1>, vector<6x8x8xf32>
    %293 = vector.broadcast %10 : f32 to vector<6x8x8xf32>
    %294 = arith.mulf %293, %292 : vector<6x8x8xf32>
    %295 = arith.addf %283, %294 : vector<6x8x8xf32>
    %296 = vector.broadcast %13 : f32 to vector<6x8x8xf32>
    %297 = arith.mulf %296, %256 : vector<6x8x8xf32>
    %298 = arith.addf %289, %297 : vector<6x8x8xf32>
    %c7_i32_122 = arith.constant 7 : i32
    %299 = tpu.dynamic_rotate %256 by %c7_i32_122 dim 2 : vector<6x8x8xf32>, i32 -> vector<6x8x8xf32>
    %cst_123 = arith.constant 0.000000e+00 : f32
    %300 = vector.broadcast %cst_123 : f32 to vector<6x8x8xf32>
    %301 = arith.select %272, %299, %300 : vector<6x8x8xi1>, vector<6x8x8xf32>
    %302 = vector.broadcast %16 : f32 to vector<6x8x8xf32>
    %303 = arith.mulf %302, %301 : vector<6x8x8xf32>
    %304 = arith.addf %295, %303 : vector<6x8x8xf32>
    %c1_i32_124 = arith.constant 1 : i32
    %305 = tpu.dynamic_rotate %268 by %c1_i32_124 dim 2 : vector<6x8x8xf32>, i32 -> vector<6x8x8xf32>
    %cst_125 = arith.constant 0.000000e+00 : f32
    %306 = vector.broadcast %cst_125 : f32 to vector<6x8x8xf32>
    %307 = arith.select %270, %305, %306 : vector<6x8x8xi1>, vector<6x8x8xf32>
    %308 = vector.broadcast %11 : f32 to vector<6x8x8xf32>
    %309 = arith.mulf %308, %307 : vector<6x8x8xf32>
    %310 = arith.addf %298, %309 : vector<6x8x8xf32>
    %311 = vector.broadcast %14 : f32 to vector<6x8x8xf32>
    %312 = arith.mulf %311, %268 : vector<6x8x8xf32>
    %313 = arith.addf %304, %312 : vector<6x8x8xf32>
    %c7_i32_126 = arith.constant 7 : i32
    %314 = tpu.dynamic_rotate %268 by %c7_i32_126 dim 2 : vector<6x8x8xf32>, i32 -> vector<6x8x8xf32>
    %cst_127 = arith.constant 0.000000e+00 : f32
    %315 = vector.broadcast %cst_127 : f32 to vector<6x8x8xf32>
    %316 = arith.select %272, %314, %315 : vector<6x8x8xi1>, vector<6x8x8xf32>
    %317 = vector.broadcast %17 : f32 to vector<6x8x8xf32>
    %318 = arith.mulf %317, %316 : vector<6x8x8xf32>
    %319 = arith.addf %310, %318 : vector<6x8x8xf32>
    %320 = arith.addf %319, %313 : vector<6x8x8xf32>
    %321 = arith.addf %190, %320 : vector<6x8x8xf32>
    "tpu.trace_start"() <{level = 10 : i32, message = "nhw,nwk->nhk"}> : () -> ()
    %cst_128 = arith.constant dense<0.000000e+00> : vector<6x8x8xf32>
    %322 = tpu.matmul %106, %180, %cst_128 {dimension_numbers = #tpu.dot_dimension_numbers<[2], [1], [1], [2], [0, 0, 0, 1, 1, 2], [0], [0]>} : vector<6x8x16xf32>, vector<6x16x8xf32>, vector<6x8x8xf32> -> vector<6x8x8xf32>
    %cst_129 = arith.constant dense<0.000000e+00> : vector<6x8x8xf32>
    %323 = tpu.matmul %106, %189, %cst_129 {dimension_numbers = #tpu.dot_dimension_numbers<[2], [1], [1], [2], [0, 0, 0, 1, 1, 2], [0], [0]>} : vector<6x8x16xf32>, vector<6x16x8xf32>, vector<6x8x8xf32> -> vector<6x8x8xf32>
    "tpu.trace_stop"() : () -> ()
    %324 = tpu.iota {dimensions = array<i32: 1>} : vector<6x8x8xi32>
    %325 = tpu.iota {dimensions = array<i32: 2>} : vector<6x8x8xi32>
    %c1_i32_130 = arith.constant 1 : i32
    %326 = vector.broadcast %c1_i32_130 : i32 to vector<6x8x8xi32>
    %327 = arith.cmpi sge, %324, %326 : vector<6x8x8xi32>
    %c1_i32_131 = arith.constant 1 : i32
    %328 = tpu.dynamic_rotate %322 by %c1_i32_131 dim 1 : vector<6x8x8xf32>, i32 -> vector<6x8x8xf32>
    %cst_132 = arith.constant 0.000000e+00 : f32
    %329 = vector.broadcast %cst_132 : f32 to vector<6x8x8xf32>
    %330 = arith.select %327, %328, %329 : vector<6x8x8xi1>, vector<6x8x8xf32>
    %c7_i32_133 = arith.constant 7 : i32
    %331 = vector.broadcast %c7_i32_133 : i32 to vector<6x8x8xi32>
    %332 = arith.cmpi slt, %324, %331 : vector<6x8x8xi32>
    %c7_i32_134 = arith.constant 7 : i32
    %333 = tpu.dynamic_rotate %322 by %c7_i32_134 dim 1 : vector<6x8x8xf32>, i32 -> vector<6x8x8xf32>
    %cst_135 = arith.constant 0.000000e+00 : f32
    %334 = vector.broadcast %cst_135 : f32 to vector<6x8x8xf32>
    %335 = arith.select %332, %333, %334 : vector<6x8x8xi1>, vector<6x8x8xf32>
    %c1_i32_136 = arith.constant 1 : i32
    %336 = vector.broadcast %c1_i32_136 : i32 to vector<6x8x8xi32>
    %337 = arith.cmpi sge, %325, %336 : vector<6x8x8xi32>
    %c7_i32_137 = arith.constant 7 : i32
    %338 = vector.broadcast %c7_i32_137 : i32 to vector<6x8x8xi32>
    %339 = arith.cmpi slt, %325, %338 : vector<6x8x8xi32>
    %340 = vector.broadcast %18 : f32 to vector<6x8x8xf32>
    %cst_138 = arith.constant 0.000000e+00 : f32
    %341 = vector.broadcast %cst_138 : f32 to vector<6x8x8xf32>
    %c1_i32_139 = arith.constant 1 : i32
    %342 = tpu.dynamic_rotate %330 by %c1_i32_139 dim 2 : vector<6x8x8xf32>, i32 -> vector<6x8x8xf32>
    %cst_140 = arith.constant 0.000000e+00 : f32
    %343 = vector.broadcast %cst_140 : f32 to vector<6x8x8xf32>
    %344 = arith.select %337, %342, %343 : vector<6x8x8xi1>, vector<6x8x8xf32>
    %345 = vector.broadcast %0 : f32 to vector<6x8x8xf32>
    %346 = arith.mulf %345, %344 : vector<6x8x8xf32>
    %347 = arith.addf %340, %346 : vector<6x8x8xf32>
    %348 = vector.broadcast %3 : f32 to vector<6x8x8xf32>
    %349 = arith.mulf %348, %330 : vector<6x8x8xf32>
    %350 = arith.addf %341, %349 : vector<6x8x8xf32>
    %c7_i32_141 = arith.constant 7 : i32
    %351 = tpu.dynamic_rotate %330 by %c7_i32_141 dim 2 : vector<6x8x8xf32>, i32 -> vector<6x8x8xf32>
    %cst_142 = arith.constant 0.000000e+00 : f32
    %352 = vector.broadcast %cst_142 : f32 to vector<6x8x8xf32>
    %353 = arith.select %339, %351, %352 : vector<6x8x8xi1>, vector<6x8x8xf32>
    %354 = vector.broadcast %6 : f32 to vector<6x8x8xf32>
    %355 = arith.mulf %354, %353 : vector<6x8x8xf32>
    %356 = arith.addf %347, %355 : vector<6x8x8xf32>
    %c1_i32_143 = arith.constant 1 : i32
    %357 = tpu.dynamic_rotate %322 by %c1_i32_143 dim 2 : vector<6x8x8xf32>, i32 -> vector<6x8x8xf32>
    %cst_144 = arith.constant 0.000000e+00 : f32
    %358 = vector.broadcast %cst_144 : f32 to vector<6x8x8xf32>
    %359 = arith.select %337, %357, %358 : vector<6x8x8xi1>, vector<6x8x8xf32>
    %360 = vector.broadcast %1 : f32 to vector<6x8x8xf32>
    %361 = arith.mulf %360, %359 : vector<6x8x8xf32>
    %362 = arith.addf %350, %361 : vector<6x8x8xf32>
    %363 = vector.broadcast %4 : f32 to vector<6x8x8xf32>
    %364 = arith.mulf %363, %322 : vector<6x8x8xf32>
    %365 = arith.addf %356, %364 : vector<6x8x8xf32>
    %c7_i32_145 = arith.constant 7 : i32
    %366 = tpu.dynamic_rotate %322 by %c7_i32_145 dim 2 : vector<6x8x8xf32>, i32 -> vector<6x8x8xf32>
    %cst_146 = arith.constant 0.000000e+00 : f32
    %367 = vector.broadcast %cst_146 : f32 to vector<6x8x8xf32>
    %368 = arith.select %339, %366, %367 : vector<6x8x8xi1>, vector<6x8x8xf32>
    %369 = vector.broadcast %7 : f32 to vector<6x8x8xf32>
    %370 = arith.mulf %369, %368 : vector<6x8x8xf32>
    %371 = arith.addf %362, %370 : vector<6x8x8xf32>
    %c1_i32_147 = arith.constant 1 : i32
    %372 = tpu.dynamic_rotate %335 by %c1_i32_147 dim 2 : vector<6x8x8xf32>, i32 -> vector<6x8x8xf32>
    %cst_148 = arith.constant 0.000000e+00 : f32
    %373 = vector.broadcast %cst_148 : f32 to vector<6x8x8xf32>
    %374 = arith.select %337, %372, %373 : vector<6x8x8xi1>, vector<6x8x8xf32>
    %375 = vector.broadcast %2 : f32 to vector<6x8x8xf32>
    %376 = arith.mulf %375, %374 : vector<6x8x8xf32>
    %377 = arith.addf %365, %376 : vector<6x8x8xf32>
    %378 = vector.broadcast %5 : f32 to vector<6x8x8xf32>
    %379 = arith.mulf %378, %335 : vector<6x8x8xf32>
    %380 = arith.addf %371, %379 : vector<6x8x8xf32>
    %c7_i32_149 = arith.constant 7 : i32
    %381 = tpu.dynamic_rotate %335 by %c7_i32_149 dim 2 : vector<6x8x8xf32>, i32 -> vector<6x8x8xf32>
    %cst_150 = arith.constant 0.000000e+00 : f32
    %382 = vector.broadcast %cst_150 : f32 to vector<6x8x8xf32>
    %383 = arith.select %339, %381, %382 : vector<6x8x8xi1>, vector<6x8x8xf32>
    %384 = vector.broadcast %8 : f32 to vector<6x8x8xf32>
    %385 = arith.mulf %384, %383 : vector<6x8x8xf32>
    %386 = arith.addf %377, %385 : vector<6x8x8xf32>
    %387 = arith.addf %386, %380 : vector<6x8x8xf32>
    %388 = arith.subf %323, %387 : vector<6x8x8xf32>
    %389 = tpu.iota {dimensions = array<i32: 1>} : vector<6x8x8xi32>
    %390 = tpu.iota {dimensions = array<i32: 2>} : vector<6x8x8xi32>
    %c1_i32_151 = arith.constant 1 : i32
    %391 = vector.broadcast %c1_i32_151 : i32 to vector<6x8x8xi32>
    %392 = arith.cmpi sge, %389, %391 : vector<6x8x8xi32>
    %c1_i32_152 = arith.constant 1 : i32
    %393 = tpu.dynamic_rotate %388 by %c1_i32_152 dim 1 : vector<6x8x8xf32>, i32 -> vector<6x8x8xf32>
    %cst_153 = arith.constant 0.000000e+00 : f32
    %394 = vector.broadcast %cst_153 : f32 to vector<6x8x8xf32>
    %395 = arith.select %392, %393, %394 : vector<6x8x8xi1>, vector<6x8x8xf32>
    %c7_i32_154 = arith.constant 7 : i32
    %396 = vector.broadcast %c7_i32_154 : i32 to vector<6x8x8xi32>
    %397 = arith.cmpi slt, %389, %396 : vector<6x8x8xi32>
    %c7_i32_155 = arith.constant 7 : i32
    %398 = tpu.dynamic_rotate %388 by %c7_i32_155 dim 1 : vector<6x8x8xf32>, i32 -> vector<6x8x8xf32>
    %cst_156 = arith.constant 0.000000e+00 : f32
    %399 = vector.broadcast %cst_156 : f32 to vector<6x8x8xf32>
    %400 = arith.select %397, %398, %399 : vector<6x8x8xi1>, vector<6x8x8xf32>
    %c1_i32_157 = arith.constant 1 : i32
    %401 = vector.broadcast %c1_i32_157 : i32 to vector<6x8x8xi32>
    %402 = arith.cmpi sge, %390, %401 : vector<6x8x8xi32>
    %c7_i32_158 = arith.constant 7 : i32
    %403 = vector.broadcast %c7_i32_158 : i32 to vector<6x8x8xi32>
    %404 = arith.cmpi slt, %390, %403 : vector<6x8x8xi32>
    %405 = vector.broadcast %19 : f32 to vector<6x8x8xf32>
    %cst_159 = arith.constant 0.000000e+00 : f32
    %406 = vector.broadcast %cst_159 : f32 to vector<6x8x8xf32>
    %c1_i32_160 = arith.constant 1 : i32
    %407 = tpu.dynamic_rotate %395 by %c1_i32_160 dim 2 : vector<6x8x8xf32>, i32 -> vector<6x8x8xf32>
    %cst_161 = arith.constant 0.000000e+00 : f32
    %408 = vector.broadcast %cst_161 : f32 to vector<6x8x8xf32>
    %409 = arith.select %402, %407, %408 : vector<6x8x8xi1>, vector<6x8x8xf32>
    %410 = vector.broadcast %9 : f32 to vector<6x8x8xf32>
    %411 = arith.mulf %410, %409 : vector<6x8x8xf32>
    %412 = arith.addf %405, %411 : vector<6x8x8xf32>
    %413 = vector.broadcast %12 : f32 to vector<6x8x8xf32>
    %414 = arith.mulf %413, %395 : vector<6x8x8xf32>
    %415 = arith.addf %406, %414 : vector<6x8x8xf32>
    %c7_i32_162 = arith.constant 7 : i32
    %416 = tpu.dynamic_rotate %395 by %c7_i32_162 dim 2 : vector<6x8x8xf32>, i32 -> vector<6x8x8xf32>
    %cst_163 = arith.constant 0.000000e+00 : f32
    %417 = vector.broadcast %cst_163 : f32 to vector<6x8x8xf32>
    %418 = arith.select %404, %416, %417 : vector<6x8x8xi1>, vector<6x8x8xf32>
    %419 = vector.broadcast %15 : f32 to vector<6x8x8xf32>
    %420 = arith.mulf %419, %418 : vector<6x8x8xf32>
    %421 = arith.addf %412, %420 : vector<6x8x8xf32>
    %c1_i32_164 = arith.constant 1 : i32
    %422 = tpu.dynamic_rotate %388 by %c1_i32_164 dim 2 : vector<6x8x8xf32>, i32 -> vector<6x8x8xf32>
    %cst_165 = arith.constant 0.000000e+00 : f32
    %423 = vector.broadcast %cst_165 : f32 to vector<6x8x8xf32>
    %424 = arith.select %402, %422, %423 : vector<6x8x8xi1>, vector<6x8x8xf32>
    %425 = vector.broadcast %10 : f32 to vector<6x8x8xf32>
    %426 = arith.mulf %425, %424 : vector<6x8x8xf32>
    %427 = arith.addf %415, %426 : vector<6x8x8xf32>
    %428 = vector.broadcast %13 : f32 to vector<6x8x8xf32>
    %429 = arith.mulf %428, %388 : vector<6x8x8xf32>
    %430 = arith.addf %421, %429 : vector<6x8x8xf32>
    %c7_i32_166 = arith.constant 7 : i32
    %431 = tpu.dynamic_rotate %388 by %c7_i32_166 dim 2 : vector<6x8x8xf32>, i32 -> vector<6x8x8xf32>
    %cst_167 = arith.constant 0.000000e+00 : f32
    %432 = vector.broadcast %cst_167 : f32 to vector<6x8x8xf32>
    %433 = arith.select %404, %431, %432 : vector<6x8x8xi1>, vector<6x8x8xf32>
    %434 = vector.broadcast %16 : f32 to vector<6x8x8xf32>
    %435 = arith.mulf %434, %433 : vector<6x8x8xf32>
    %436 = arith.addf %427, %435 : vector<6x8x8xf32>
    %c1_i32_168 = arith.constant 1 : i32
    %437 = tpu.dynamic_rotate %400 by %c1_i32_168 dim 2 : vector<6x8x8xf32>, i32 -> vector<6x8x8xf32>
    %cst_169 = arith.constant 0.000000e+00 : f32
    %438 = vector.broadcast %cst_169 : f32 to vector<6x8x8xf32>
    %439 = arith.select %402, %437, %438 : vector<6x8x8xi1>, vector<6x8x8xf32>
    %440 = vector.broadcast %11 : f32 to vector<6x8x8xf32>
    %441 = arith.mulf %440, %439 : vector<6x8x8xf32>
    %442 = arith.addf %430, %441 : vector<6x8x8xf32>
    %443 = vector.broadcast %14 : f32 to vector<6x8x8xf32>
    %444 = arith.mulf %443, %400 : vector<6x8x8xf32>
    %445 = arith.addf %436, %444 : vector<6x8x8xf32>
    %c7_i32_170 = arith.constant 7 : i32
    %446 = tpu.dynamic_rotate %400 by %c7_i32_170 dim 2 : vector<6x8x8xf32>, i32 -> vector<6x8x8xf32>
    %cst_171 = arith.constant 0.000000e+00 : f32
    %447 = vector.broadcast %cst_171 : f32 to vector<6x8x8xf32>
    %448 = arith.select %404, %446, %447 : vector<6x8x8xi1>, vector<6x8x8xf32>
    %449 = vector.broadcast %17 : f32 to vector<6x8x8xf32>
    %450 = arith.mulf %449, %448 : vector<6x8x8xf32>
    %451 = arith.addf %442, %450 : vector<6x8x8xf32>
    %452 = arith.addf %451, %445 : vector<6x8x8xf32>
    %453 = arith.addf %322, %452 : vector<6x8x8xf32>
    %454 = vector.shape_cast %321 : vector<6x8x8xf32> to vector<2x3x8x8xf32>
    %c0_172 = arith.constant 0 : index
    %c0_173 = arith.constant 0 : index
    %c0_174 = arith.constant 0 : index
    %c0_175 = arith.constant 0 : index
    %455 = vector.load %arg6[%c0_172, %c0_173, %c0_174, %c0_175] : memref<2x12x8x8xf32, #tpu.memory_space<vmem>>, vector<2x3x8x8xf32>
    tpu.vector_store %arg6[%c0_172, %c0_173, %c0_174, %c0_175], %454 {strides = array<i32>} : memref<2x12x8x8xf32, #tpu.memory_space<vmem>>, vector<2x3x8x8xf32>,
    %456 = vector.shape_cast %256 : vector<6x8x8xf32> to vector<2x3x8x8xf32>
    %c0_176 = arith.constant 0 : index
    %c3 = arith.constant 3 : index
    %c0_177 = arith.constant 0 : index
    %c0_178 = arith.constant 0 : index
    %457 = vector.load %arg6[%c0_176, %c3, %c0_177, %c0_178] : memref<2x12x8x8xf32, #tpu.memory_space<vmem>>, vector<2x3x8x8xf32>
    tpu.vector_store %arg6[%c0_176, %c3, %c0_177, %c0_178], %456 {strides = array<i32>} : memref<2x12x8x8xf32, #tpu.memory_space<vmem>>, vector<2x3x8x8xf32>,
    %458 = vector.shape_cast %453 : vector<6x8x8xf32> to vector<2x3x8x8xf32>
    %c0_179 = arith.constant 0 : index
    %c6 = arith.constant 6 : index
    %c0_180 = arith.constant 0 : index
    %c0_181 = arith.constant 0 : index
    %459 = vector.load %arg6[%c0_179, %c6, %c0_180, %c0_181] : memref<2x12x8x8xf32, #tpu.memory_space<vmem>>, vector<2x3x8x8xf32>
    tpu.vector_store %arg6[%c0_179, %c6, %c0_180, %c0_181], %458 {strides = array<i32>} : memref<2x12x8x8xf32, #tpu.memory_space<vmem>>, vector<2x3x8x8xf32>,
    %460 = vector.shape_cast %388 : vector<6x8x8xf32> to vector<2x3x8x8xf32>
    %c0_182 = arith.constant 0 : index
    %c9 = arith.constant 9 : index
    %c0_183 = arith.constant 0 : index
    %c0_184 = arith.constant 0 : index
    %461 = vector.load %arg6[%c0_182, %c9, %c0_183, %c0_184] : memref<2x12x8x8xf32, #tpu.memory_space<vmem>>, vector<2x3x8x8xf32>
    tpu.vector_store %arg6[%c0_182, %c9, %c0_183, %c0_184], %460 {strides = array<i32>} : memref<2x12x8x8xf32, #tpu.memory_space<vmem>>, vector<2x3x8x8xf32>,
    return
  }
  func.func @transform_0(%arg0: i32) -> (i32, i32) {
    %c0_i32 = arith.constant 0 : i32
    %c0_i32_0 = arith.constant 0 : i32
    %c0_i32_1 = arith.constant 0 : i32
    return %c0_i32, %c0_i32_0 : i32, i32
  }
  func.func @transform_1(%arg0: i32) -> i32 {
    %c0_i32 = arith.constant 0 : i32
    %c0_i32_0 = arith.constant 0 : i32
    return %c0_i32 : i32
  }
  func.func @transform_2(%arg0: i32) -> (i32, i32) {
    %c0_i32 = arith.constant 0 : i32
    %c0_i32_0 = arith.constant 0 : i32
    %c0_i32_1 = arith.constant 0 : i32
    return %c0_i32, %c0_i32_0 : i32, i32
  }
  func.func @transform_3(%arg0: i32) -> i32 {
    %c0_i32 = arith.constant 0 : i32
    %c0_i32_0 = arith.constant 0 : i32
    return %c0_i32 : i32
  }
  func.func @transform_4(%arg0: i32) -> (i32, i32, i32, i32) {
    %c0_i32 = arith.constant 0 : i32
    %c0_i32_0 = arith.constant 0 : i32
    %c0_i32_1 = arith.constant 0 : i32
    %c0_i32_2 = arith.constant 0 : i32
    return %arg0, %c0_i32, %c0_i32_0, %c0_i32_1 : i32, i32, i32, i32
  }
  func.func @transform_5(%arg0: i32) -> (i32, i32, i32, i32) {
    %c0_i32 = arith.constant 0 : i32
    %c0_i32_0 = arith.constant 0 : i32
    %c0_i32_1 = arith.constant 0 : i32
    %c0_i32_2 = arith.constant 0 : i32
    return %arg0, %c0_i32, %c0_i32_0, %c0_i32_1 : i32, i32, i32, i32
  }
}

</mosaic_0001>

<llo_original>
// kernel: wavenet_forward.1
$region0: #{wavenet_forward.1}
  #allocation0 [shape = 'u32[]', space=smem, size = 0x4, offset = 0x4, fixed_abs, tag = 'smem constant byte address 0x4 - core index']
  #allocation1 [shape = 'u32[144,128]{1,0:T(1,128)}', space=vmem, size = 0x12000, scoped, tag = 'internal scratch']
  #allocation2 [shape = 'f32[1]{0:T(128)S(6)}', space=smem, size = 0x200, scoped, tag = 'scoped memory for wavenet_forward.1']
  #allocation3 [shape = 'f32[1]{0:T(128)S(6)}', space=smem, size = 0x200, scoped, tag = 'scoped memory for wavenet_forward.1']
  %s0 = inlined_call_operand.vmem [shape: f32[3,3], index: 0, kind: input, shape index: {}]
  %s1 = inlined_call_operand.<no memory space> [shape: f32[1], index: 1, kind: input, shape index: {}]
  %s2 = inlined_call_operand.vmem [shape: f32[3,3], index: 2, kind: input, shape index: {}]
  %s3 = inlined_call_operand.<no memory space> [shape: f32[1], index: 3, kind: input, shape index: {}]
  %s4 = inlined_call_operand.hbm [shape: f32[2,3,16,16], index: 4, kind: input, shape index: {}]
  %s5 = inlined_call_operand.vmem [shape: f32[2,12,8,8], index: 5, kind: output, shape index: {}]
  %s6 = sld [smem:[#allocation0]]
  $region42: #{wavenet_forward.1} parent=0
    _
  %s8 = ssub.s32 1, %s6
  %s9 = scalar_select 0, %s8, %s6
  %10 = sst [smem:[#allocation2]] %s1
  %11 = sst [smem:[#allocation3]] %s3
  $region1: #{wavenet_forward.1} parent=0
    #allocation4 [shape = 'u8[2048]{0}', space=smem, size = 0x800, scoped, tag = 'input window, operand 0, single buffered']
    #allocation5 [shape = 's32[1]{0}', space=sflag, size = 0x4, scoped, tag = 'scoped memory for wavenet_forward.1']
    #allocation6 [shape = 's32[1]{0}', space=sflag, size = 0x4, scoped, tag = 'scoped memory for wavenet_forward.1']
    #allocation7 [shape = 'u8[2048]{0}', space=smem, size = 0x800, scoped, tag = 'input window, operand 2, single buffered']
    #allocation8 [shape = 's32[1]{0}', space=sflag, size = 0x4, scoped, tag = 'scoped memory for wavenet_forward.1']
    #allocation9 [shape = 'u8[49152]{0}', space=vmem, size = 0xc000, scoped, tag = 'input window, operand 4, single buffered']
    %12 = vsyncpa [#allocation6], 0
    %13 = vsyncpa [#allocation8], 0
    %14 = vsyncpa [#allocation5], 0
    // Predicated region
    $region2: #{wavenet_forward.1} parent=1 // pred_check
      _
    $region3: #{wavenet_forward.1} parent=1 // pred_check_branch
      %16 = sbr.rel (0) target = $region5
    $region4: #{wavenet_forward.1} parent=1 // pred_region
      %s18 = ssub.s32 64, 64
      %19 = vsyncadd [#allocation6], %s18
      %s21 = sshll.u32 %s0, 4
      %s22 = int_to_ptr.vmem [resolvable:$true] %s21
      %24 = dma.vmem_to_smem %s22, 64, [#allocation4], [#allocation6]
    $region5: #{wavenet_forward.1} parent=1 // pred_fallthru
      _
    // Predicated region
    $region6: #{wavenet_forward.1} parent=1 // pred_check
      _
    $region7: #{wavenet_forward.1} parent=1 // pred_check_branch
      %26 = sbr.rel (0) target = $region9
    $region8: #{wavenet_forward.1} parent=1 // pred_region
      _
    $region9: #{wavenet_forward.1} parent=1 // pred_fallthru
      _
    // Predicated region
    $region10: #{wavenet_forward.1} parent=1 // pred_check
      _
    $region11: #{wavenet_forward.1} parent=1 // pred_check_branch
      %28 = sbr.rel (0) target = $region13
    $region12: #{wavenet_forward.1} parent=1 // pred_region
      %s30 = ssub.s32 64, 64
      %31 = vsyncadd [#allocation8], %s30
      %s33 = sshll.u32 %s2, 4
      %s34 = int_to_ptr.vmem [resolvable:$true] %s33
      %36 = dma.vmem_to_smem %s34, 64, [#allocation7], [#allocation8]
    $region13: #{wavenet_forward.1} parent=1 // pred_fallthru
      _
    // Predicated region
    $region14: #{wavenet_forward.1} parent=1 // pred_check
      _
    $region15: #{wavenet_forward.1} parent=1 // pred_check_branch
      %38 = sbr.rel (0) target = $region17
    $region16: #{wavenet_forward.1} parent=1 // pred_region
      _
    $region17: #{wavenet_forward.1} parent=1 // pred_fallthru
      _
    // Predicated region
    $region18: #{wavenet_forward.1} parent=1 // pred_check
      _
    $region19: #{wavenet_forward.1} parent=1 // pred_check_branch
      %40 = sbr.rel (0) target = $region21
    $region20: #{wavenet_forward.1} parent=1 // pred_region
      %s42 = ssub.s32 1536, 1536
      %43 = vsyncadd [#allocation5], %s42
      %s44 = sshll.u32 [#allocation9], 4
      %s45 = int_to_ptr.vmem [resolvable:$true] %s44
      %50 = dma.hbm_to_vmem [thread:$0]  %s4, 1536, %s45, [#allocation5], 128, 128, 8
    $region21: #{wavenet_forward.1} parent=1 // pred_fallthru
      _
    // Predicated region
    $region22: #{wavenet_forward.1} parent=1 // pred_check
      _
    $region23: #{wavenet_forward.1} parent=1 // pred_check_branch
      %52 = sbr.rel (0) target = $region25
    $region24: #{wavenet_forward.1} parent=1 // pred_region
      %53 = dma.done [#allocation6], 64
    $region25: #{wavenet_forward.1} parent=1 // pred_fallthru
      _
    // Predicated region
    $region26: #{wavenet_forward.1} parent=1 // pred_check
      _
    $region27: #{wavenet_forward.1} parent=1 // pred_check_branch
      %55 = sbr.rel (0) target = $region29
    $region28: #{wavenet_forward.1} parent=1 // pred_region
      %56 = dma.done [#allocation8], 64
    $region29: #{wavenet_forward.1} parent=1 // pred_fallthru
      _
    // Predicated region
    $region30: #{wavenet_forward.1} parent=1 // pred_check
      _
    $region31: #{wavenet_forward.1} parent=1 // pred_check_branch
      %58 = sbr.rel (0) target = $region33
    $region32: #{wavenet_forward.1} parent=1 // pred_region
      %59 = dma.done [#allocation5], 1536
    $region33: #{wavenet_forward.1} parent=1 // pred_fallthru
      _
    %60 = sfence
    %s61 = sld [smem:[#allocation4]]
    %s62 = sld [smem:[#allocation4 + $0x1]]
    %s63 = sld [smem:[#allocation4 + $0x2]]
    %s64 = sld [smem:[#allocation4 + $0x80]]
    %s65 = sld [smem:[#allocation4 + $0x81]]
    %s66 = sld [smem:[#allocation4 + $0x82]]
    %s67 = sld [smem:[#allocation4 + $0x100]]
    %s68 = sld [smem:[#allocation4 + $0x101]]
    %s69 = sld [smem:[#allocation4 + $0x102]]
    %s70 = sld [smem:[#allocation7]]
    %s71 = sld [smem:[#allocation7 + $0x1]]
    %s72 = sld [smem:[#allocation7 + $0x2]]
    %s73 = sld [smem:[#allocation7 + $0x80]]
    %s74 = sld [smem:[#allocation7 + $0x81]]
    %s75 = sld [smem:[#allocation7 + $0x82]]
    %s76 = sld [smem:[#allocation7 + $0x100]]
    %s77 = sld [smem:[#allocation7 + $0x101]]
    %s78 = sld [smem:[#allocation7 + $0x102]]
    %s79 = sld [smem:[#allocation2]]
    %s80 = sld [smem:[#allocation3]]
    %v81 = vld [vmem:[#allocation9] sm:$0xff]
    %v82 = vld [vmem:[#allocation9 + $0x8] sm:$0xff]
    %v83 = vld [vmem:[#allocation9 + $0x10] sm:$0xff]
    %v84 = vld [vmem:[#allocation9 + $0x18] sm:$0xff]
    %v85 = vld [vmem:[#allocation9 + $0x20] sm:$0xff]
    %v86 = vld [vmem:[#allocation9 + $0x28] sm:$0xff]
    %v87 = vld [vmem:[#allocation9 + $0x30] sm:$0xff]
    %v88 = vld [vmem:[#allocation9 + $0x38] sm:$0xff]
    %v89 = vld [vmem:[#allocation9 + $0x40] sm:$0xff]
    %v90 = vld [vmem:[#allocation9 + $0x48] sm:$0xff]
    %v91 = vld [vmem:[#allocation9 + $0x50] sm:$0xff]
    %v92 = vld [vmem:[#allocation9 + $0x58] sm:$0xff]
    %v93 = vlaneseq
    %v94 = vshrl.u32 %v93, 7
    %v95 = vlaneseq
    %v96 = vand.u32 %v95, 127
    %v97 = vmul.u32 %v94, 2
    %vm98 = vcmp.eq.s32.totalorder %v96, %v97
    %v99 = vsel %vm98, 1, 0
    %v100 = vcvt.s32.f32 %v99
    %v101 = vadd.s32 %v97, 1
    %vm102 = vcmp.eq.s32.totalorder %v96, %v101
    %v103 = vsel %vm102, 1, 0
    %v104 = vcvt.s32.f32 %v103
    %vm105 = vcmask 130048
    %v107 = vsel %vm105, %v100, 0
    %109 = vmatprep.subr.mxu0 0.0
    %110 = vmatpush1.msra.mxu0 %v81
    %111 = vmatprep.subr.mxu0 0.0
    %112 = vmatpush1.msra.mxu0 %v82
    %113 = vmatprep.subr.mxu0 0.0
    %114 = vmatpush1.msra.mxu0 0.0
    %115 = vmatprep.subr.mxu0 0.0
    %116 = vmatpush1.msra.mxu0 0.0
    %117 = vmatprep.subr.mxu0 0.0
    %118 = vmatpush1.msra.mxu0 0.0
    %119 = vmatprep.subr.mxu0 0.0
    %120 = vmatpush1.msra.mxu0 0.0
    %121 = vmatprep.subr.mxu0 0.0
    %122 = vmatpush1.msra.mxu0 0.0
    %123 = vmatprep.subr.mxu0 0.0
    %124 = vmatpush1.msra.mxu0 0.0
    %125 = vmatprep.subr.mxu0 0.0
    %126 = vmatpush1.msra.mxu0 0.0
    %127 = vmatprep.subr.mxu0 0.0
    %128 = vmatpush1.msra.mxu0 0.0
    %129 = vmatprep.subr.mxu0 0.0
    %130 = vmatpush1.msra.mxu0 0.0
    %131 = vmatprep.subr.mxu0 0.0
    %132 = vmatpush1.msra.mxu0 0.0
    %133 = vmatprep.subr.mxu0 0.0
    %134 = vmatpush1.msra.mxu0 0.0
    %135 = vmatprep.subr.mxu0 0.0
    %136 = vmatpush1.msra.mxu0 0.0
    %137 = vmatprep.subr.mxu0 0.0
    %138 = vmatpush1.msra.mxu0 0.0
    %139 = vmatprep.subr.mxu0 0.0
    %140 = vmatpush1.msra.mxu0 0.0
    %141 = vmatprep.subr.mxu0 0.0
    %142 = vmatpush1.msra.mxu0 0.0
    %143 = vmatprep.subr.mxu0 0.0
    %144 = vmatpush1.msra.mxu0 0.0
    %145 = vmatprep.subr.mxu0 0.0
    %146 = vmatpush1.msra.mxu0 0.0
    %147 = vmatprep.subr.mxu0 0.0
    %148 = vmatpush1.msra.mxu0 0.0
    %149 = vmatprep.subr.mxu0 0.0
    %150 = vmatpush1.msra.mxu0 0.0
    %151 = vmatprep.subr.mxu0 0.0
    %152 = vmatpush1.msra.mxu0 0.0
    %153 = vmatprep.subr.mxu0 0.0
    %154 = vmatpush1.msra.mxu0 0.0
    %155 = vmatprep.subr.mxu0 0.0
    %156 = vmatpush1.msra.mxu0 0.0
    %157 = vmatprep.subr.mxu0 0.0
    %158 = vmatpush1.msra.mxu0 0.0
    %159 = vmatprep.subr.mxu0 0.0
    %160 = vmatpush1.msra.mxu0 0.0
    %161 = vmatprep.subr.mxu0 0.0
    %162 = vmatpush1.msra.mxu0 0.0
    %163 = vmatprep.subr.mxu0 0.0
    %164 = vmatpush1.msra.mxu0 0.0
    %165 = vmatprep.subr.mxu0 0.0
    %166 = vmatpush1.msra.mxu0 0.0
    %167 = vmatprep.subr.mxu0 0.0
    %168 = vmatpush1.msra.mxu0 0.0
    %169 = vmatprep.subr.mxu0 0.0
    %170 = vmatpush1.msra.mxu0 0.0
    %171 = vmatprep.subr.mxu0 0.0
    %172 = vmatpush1.msra.mxu0 0.0
    %173 = vmatprep.mubr.f32.mxu0 0.0
    %174 = vmatmul.mubr.f32.gmra.mrb[0].mxu0 %v107
    %v175 = vpop.f32.mrb[0].mxu0
    %v176 = vadd.f32 0.0, %v175
    %v177 = vpop.f32.mrb[0].mxu0
    %178 = vdwg.mxu0
    %179 = vmatprep.subr.mxu0 0.0
    %180 = vmatpush1.msra.mxu0 %v83
    %181 = vmatprep.subr.mxu0 0.0
    %182 = vmatpush1.msra.mxu0 %v84
    %183 = vmatprep.subr.mxu0 0.0
    %184 = vmatpush1.msra.mxu0 0.0
    %185 = vmatprep.subr.mxu0 0.0
    %186 = vmatpush1.msra.mxu0 0.0
    %187 = vmatprep.subr.mxu0 0.0
    %188 = vmatpush1.msra.mxu0 0.0
    %189 = vmatprep.subr.mxu0 0.0
    %190 = vmatpush1.msra.mxu0 0.0
    %191 = vmatprep.subr.mxu0 0.0
    %192 = vmatpush1.msra.mxu0 0.0
    %193 = vmatprep.subr.mxu0 0.0
    %194 = vmatpush1.msra.mxu0 0.0
    %195 = vmatprep.subr.mxu0 0.0
    %196 = vmatpush1.msra.mxu0 0.0
    %197 = vmatprep.subr.mxu0 0.0
    %198 = vmatpush1.msra.mxu0 0.0
    %199 = vmatprep.subr.mxu0 0.0
    %200 = vmatpush1.msra.mxu0 0.0
    %201 = vmatprep.subr.mxu0 0.0
    %202 = vmatpush1.msra.mxu0 0.0
    %203 = vmatprep.subr.mxu0 0.0
    %204 = vmatpush1.msra.mxu0 0.0
    %205 = vmatprep.subr.mxu0 0.0
    %206 = vmatpush1.msra.mxu0 0.0
    %207 = vmatprep.subr.mxu0 0.0
    %208 = vmatpush1.msra.mxu0 0.0
    %209 = vmatprep.subr.mxu0 0.0
    %210 = vmatpush1.msra.mxu0 0.0
    %211 = vmatprep.subr.mxu0 0.0
    %212 = vmatpush1.msra.mxu0 0.0
    %213 = vmatprep.subr.mxu0 0.0
    %214 = vmatpush1.msra.mxu0 0.0
    %215 = vmatprep.subr.mxu0 0.0
    %216 = vmatpush1.msra.mxu0 0.0
    %217 = vmatprep.subr.mxu0 0.0
    %218 = vmatpush1.msra.mxu0 0.0
    %219 = vmatprep.subr.mxu0 0.0
    %220 = vmatpush1.msra.mxu0 0.0
    %221 = vmatprep.subr.mxu0 0.0
    %222 = vmatpush1.msra.mxu0 0.0
    %223 = vmatprep.subr.mxu0 0.0
    %224 = vmatpush1.msra.mxu0 0.0
    %225 = vmatprep.subr.mxu0 0.0
    %226 = vmatpush1.msra.mxu0 0.0
    %227 = vmatprep.subr.mxu0 0.0
    %228 = vmatpush1.msra.mxu0 0.0
    %229 = vmatprep.subr.mxu0 0.0
    %230 = vmatpush1.msra.mxu0 0.0
    %231 = vmatprep.subr.mxu0 0.0
    %232 = vmatpush1.msra.mxu0 0.0
    %233 = vmatprep.subr.mxu0 0.0
    %234 = vmatpush1.msra.mxu0 0.0
    %235 = vmatprep.subr.mxu0 0.0
    %236 = vmatpush1.msra.mxu0 0.0
    %237 = vmatprep.subr.mxu0 0.0
    %238 = vmatpush1.msra.mxu0 0.0
    %239 = vmatprep.subr.mxu0 0.0
    %240 = vmatpush1.msra.mxu0 0.0
    %241 = vmatprep.subr.mxu0 0.0
    %242 = vmatpush1.msra.mxu0 0.0
    %243 = vmatprep.mubr.f32.mxu0 0.0
    %244 = vmatmul.mubr.f32.gmra.mrb[0].mxu0 %v107
    %v245 = vpop.f32.mrb[0].mxu0
    %v246 = vadd.f32 0.0, %v245
    %v247 = vpop.f32.mrb[0].mxu0
    %248 = vdwg.mxu0
    %249 = vmatprep.subr.mxu0 0.0
    %250 = vmatpush1.msra.mxu0 %v85
    %251 = vmatprep.subr.mxu0 0.0
    %252 = vmatpush1.msra.mxu0 %v86
    %253 = vmatprep.subr.mxu0 0.0
    %254 = vmatpush1.msra.mxu0 0.0
    %255 = vmatprep.subr.mxu0 0.0
    %256 = vmatpush1.msra.mxu0 0.0
    %257 = vmatprep.subr.mxu0 0.0
    %258 = vmatpush1.msra.mxu0 0.0
    %259 = vmatprep.subr.mxu0 0.0
    %260 = vmatpush1.msra.mxu0 0.0
    %261 = vmatprep.subr.mxu0 0.0
    %262 = vmatpush1.msra.mxu0 0.0
    %263 = vmatprep.subr.mxu0 0.0
    %264 = vmatpush1.msra.mxu0 0.0
    %265 = vmatprep.subr.mxu0 0.0
    %266 = vmatpush1.msra.mxu0 0.0
    %267 = vmatprep.subr.mxu0 0.0
    %268 = vmatpush1.msra.mxu0 0.0
    %269 = vmatprep.subr.mxu0 0.0
    %270 = vmatpush1.msra.mxu0 0.0
    %271 = vmatprep.subr.mxu0 0.0
    %272 = vmatpush1.msra.mxu0 0.0
    %273 = vmatprep.subr.mxu0 0.0
    %274 = vmatpush1.msra.mxu0 0.0
    %275 = vmatprep.subr.mxu0 0.0
    %276 = vmatpush1.msra.mxu0 0.0
    %277 = vmatprep.subr.mxu0 0.0
    %278 = vmatpush1.msra.mxu0 0.0
    %279 = vmatprep.subr.mxu0 0.0
    %280 = vmatpush1.msra.mxu0 0.0
    %281 = vmatprep.subr.mxu0 0.0
    %282 = vmatpush1.msra.mxu0 0.0
    %283 = vmatprep.subr.mxu0 0.0
    %284 = vmatpush1.msra.mxu0 0.0
    %285 = vmatprep.subr.mxu0 0.0
    %286 = vmatpush1.msra.mxu0 0.0
    %287 = vmatprep.subr.mxu0 0.0
    %288 = vmatpush1.msra.mxu0 0.0
    %289 = vmatprep.subr.mxu0 0.0
    %290 = vmatpush1.msra.mxu0 0.0
    %291 = vmatprep.subr.mxu0 0.0
    %292 = vmatpush1.msra.mxu0 0.0
    %293 = vmatprep.subr.mxu0 0.0
    %294 = vmatpush1.msra.mxu0 0.0
    %295 = vmatprep.subr.mxu0 0.0
    %296 = vmatpush1.msra.mxu0 0.0
    %297 = vmatprep.subr.mxu0 0.0
    %298 = vmatpush1.msra.mxu0 0.0
    %299 = vmatprep.subr.mxu0 0.0
    %300 = vmatpush1.msra.mxu0 0.0
    %301 = vmatprep.subr.mxu0 0.0
    %302 = vmatpush1.msra.mxu0 0.0
    %303 = vmatprep.subr.mxu0 0.0
    %304 = vmatpush1.msra.mxu0 0.0
    %305 = vmatprep.subr.mxu0 0.0
    %306 = vmatpush1.msra.mxu0 0.0
    %307 = vmatprep.subr.mxu0 0.0
    %308 = vmatpush1.msra.mxu0 0.0
    %309 = vmatprep.subr.mxu0 0.0
    %310 = vmatpush1.msra.mxu0 0.0
    %311 = vmatprep.subr.mxu0 0.0
    %312 = vmatpush1.msra.mxu0 0.0
    %313 = vmatprep.mubr.f32.mxu0 0.0
    %314 = vmatmul.mubr.f32.gmra.mrb[0].mxu0 %v107
    %v315 = vpop.f32.mrb[0].mxu0
    %v316 = vadd.f32 0.0, %v315
    %v317 = vpop.f32.mrb[0].mxu0
    %318 = vdwg.mxu0
    %319 = vmatprep.subr.mxu0 0.0
    %320 = vmatpush1.msra.mxu0 %v87
    %321 = vmatprep.subr.mxu0 0.0
    %322 = vmatpush1.msra.mxu0 %v88
    %323 = vmatprep.subr.mxu0 0.0
    %324 = vmatpush1.msra.mxu0 0.0
    %325 = vmatprep.subr.mxu0 0.0
    %326 = vmatpush1.msra.mxu0 0.0
    %327 = vmatprep.subr.mxu0 0.0
    %328 = vmatpush1.msra.mxu0 0.0
    %329 = vmatprep.subr.mxu0 0.0
    %330 = vmatpush1.msra.mxu0 0.0
    %331 = vmatprep.subr.mxu0 0.0
    %332 = vmatpush1.msra.mxu0 0.0
    %333 = vmatprep.subr.mxu0 0.0
    %334 = vmatpush1.msra.mxu0 0.0
    %335 = vmatprep.subr.mxu0 0.0
    %336 = vmatpush1.msra.mxu0 0.0
    %337 = vmatprep.subr.mxu0 0.0
    %338 = vmatpush1.msra.mxu0 0.0
    %339 = vmatprep.subr.mxu0 0.0
    %340 = vmatpush1.msra.mxu0 0.0
    %341 = vmatprep.subr.mxu0 0.0
    %342 = vmatpush1.msra.mxu0 0.0
    %343 = vmatprep.subr.mxu0 0.0
    %344 = vmatpush1.msra.mxu0 0.0
    %345 = vmatprep.subr.mxu0 0.0
    %346 = vmatpush1.msra.mxu0 0.0
    %347 = vmatprep.subr.mxu0 0.0
    %348 = vmatpush1.msra.mxu0 0.0
    %349 = vmatprep.subr.mxu0 0.0
    %350 = vmatpush1.msra.mxu0 0.0
    %351 = vmatprep.subr.mxu0 0.0
    %352 = vmatpush1.msra.mxu0 0.0
    %353 = vmatprep.subr.mxu0 0.0
    %354 = vmatpush1.msra.mxu0 0.0
    %355 = vmatprep.subr.mxu0 0.0
    %356 = vmatpush1.msra.mxu0 0.0
    %357 = vmatprep.subr.mxu0 0.0
    %358 = vmatpush1.msra.mxu0 0.0
    %359 = vmatprep.subr.mxu0 0.0
    %360 = vmatpush1.msra.mxu0 0.0
    %361 = vmatprep.subr.mxu0 0.0
    %362 = vmatpush1.msra.mxu0 0.0
    %363 = vmatprep.subr.mxu0 0.0
    %364 = vmatpush1.msra.mxu0 0.0
    %365 = vmatprep.subr.mxu0 0.0
    %366 = vmatpush1.msra.mxu0 0.0
    %367 = vmatprep.subr.mxu0 0.0
    %368 = vmatpush1.msra.mxu0 0.0
    %369 = vmatprep.subr.mxu0 0.0
    %370 = vmatpush1.msra.mxu0 0.0
    %371 = vmatprep.subr.mxu0 0.0
    %372 = vmatpush1.msra.mxu0 0.0
    %373 = vmatprep.subr.mxu0 0.0
    %374 = vmatpush1.msra.mxu0 0.0
    %375 = vmatprep.subr.mxu0 0.0
    %376 = vmatpush1.msra.mxu0 0.0
    %377 = vmatprep.subr.mxu0 0.0
    %378 = vmatpush1.msra.mxu0 0.0
    %379 = vmatprep.subr.mxu0 0.0
    %380 = vmatpush1.msra.mxu0 0.0
    %381 = vmatprep.subr.mxu0 0.0
    %382 = vmatpush1.msra.mxu0 0.0
    %383 = vmatprep.mubr.f32.mxu0 0.0
    %384 = vmatmul.mubr.f32.gmra.mrb[0].mxu0 %v107
    %v385 = vpop.f32.mrb[0].mxu0
    %v386 = vadd.f32 0.0, %v385
    %v387 = vpop.f32.mrb[0].mxu0
    %388 = vdwg.mxu0
    %389 = vmatprep.subr.mxu0 0.0
    %390 = vmatpush1.msra.mxu0 %v89
    %391 = vmatprep.subr.mxu0 0.0
    %392 = vmatpush1.msra.mxu0 %v90
    %393 = vmatprep.subr.mxu0 0.0
    %394 = vmatpush1.msra.mxu0 0.0
    %395 = vmatprep.subr.mxu0 0.0
    %396 = vmatpush1.msra.mxu0 0.0
    %397 = vmatprep.subr.mxu0 0.0
    %398 = vmatpush1.msra.mxu0 0.0
    %399 = vmatprep.subr.mxu0 0.0
    %400 = vmatpush1.msra.mxu0 0.0
    %401 = vmatprep.subr.mxu0 0.0
    %402 = vmatpush1.msra.mxu0 0.0
    %403 = vmatprep.subr.mxu0 0.0
    %404 = vmatpush1.msra.mxu0 0.0
    %405 = vmatprep.subr.mxu0 0.0
    %406 = vmatpush1.msra.mxu0 0.0
    %407 = vmatprep.subr.mxu0 0.0
    %408 = vmatpush1.msra.mxu0 0.0
    %409 = vmatprep.subr.mxu0 0.0
    %410 = vmatpush1.msra.mxu0 0.0
    %411 = vmatprep.subr.mxu0 0.0
    %412 = vmatpush1.msra.mxu0 0.0
    %413 = vmatprep.subr.mxu0 0.0
    %414 = vmatpush1.msra.mxu0 0.0
    %415 = vmatprep.subr.mxu0 0.0
    %416 = vmatpush1.msra.mxu0 0.0
    %417 = vmatprep.subr.mxu0 0.0
    %418 = vmatpush1.msra.mxu0 0.0
    %419 = vmatprep.subr.mxu0 0.0
    %420 = vmatpush1.msra.mxu0 0.0
    %421 = vmatprep.subr.mxu0 0.0
    %422 = vmatpush1.msra.mxu0 0.0
    %423 = vmatprep.subr.mxu0 0.0
    %424 = vmatpush1.msra.mxu0 0.0
    %425 = vmatprep.subr.mxu0 0.0
    %426 = vmatpush1.msra.mxu0 0.0
    %427 = vmatprep.subr.mxu0 0.0
    %428 = vmatpush1.msra.mxu0 0.0
    %429 = vmatprep.subr.mxu0 0.0
    %430 = vmatpush1.msra.mxu0 0.0
    %431 = vmatprep.subr.mxu0 0.0
    %432 = vmatpush1.msra.mxu0 0.0
    %433 = vmatprep.subr.mxu0 0.0
    %434 = vmatpush1.msra.mxu0 0.0
    %435 = vmatprep.subr.mxu0 0.0
    %436 = vmatpush1.msra.mxu0 0.0
    %437 = vmatprep.subr.mxu0 0.0
    %438 = vmatpush1.msra.mxu0 0.0
    %439 = vmatprep.subr.mxu0 0.0
    %440 = vmatpush1.msra.mxu0 0.0
    %441 = vmatprep.subr.mxu0 0.0
    %442 = vmatpush1.msra.mxu0 0.0
    %443 = vmatprep.subr.mxu0 0.0
    %444 = vmatpush1.msra.mxu0 0.0
    %445 = vmatprep.subr.mxu0 0.0
    %446 = vmatpush1.msra.mxu0 0.0
    %447 = vmatprep.subr.mxu0 0.0
    %448 = vmatpush1.msra.mxu0 0.0
    %449 = vmatprep.subr.mxu0 0.0
    %450 = vmatpush1.msra.mxu0 0.0
    %451 = vmatprep.subr.mxu0 0.0
    %452 = vmatpush1.msra.mxu0 0.0
    %453 = vmatprep.mubr.f32.mxu0 0.0
    %454 = vmatmul.mubr.f32.gmra.mrb[0].mxu0 %v107
    %v455 = vpop.f32.mrb[0].mxu0
    %v456 = vadd.f32 0.0, %v455
    %v457 = vpop.f32.mrb[0].mxu0
    %458 = vdwg.mxu0
    %459 = vmatprep.subr.mxu0 0.0
    %460 = vmatpush1.msra.mxu0 %v91
    %461 = vmatprep.subr.mxu0 0.0
    %462 = vmatpush1.msra.mxu0 %v92
    %463 = vmatprep.subr.mxu0 0.0
    %464 = vmatpush1.msra.mxu0 0.0
    %465 = vmatprep.subr.mxu0 0.0
    %466 = vmatpush1.msra.mxu0 0.0
    %467 = vmatprep.subr.mxu0 0.0
    %468 = vmatpush1.msra.mxu0 0.0
    %469 = vmatprep.subr.mxu0 0.0
    %470 = vmatpush1.msra.mxu0 0.0
    %471 = vmatprep.subr.mxu0 0.0
    %472 = vmatpush1.msra.mxu0 0.0
    %473 = vmatprep.subr.mxu0 0.0
    %474 = vmatpush1.msra.mxu0 0.0
    %475 = vmatprep.subr.mxu0 0.0
    %476 = vmatpush1.msra.mxu0 0.0
    %477 = vmatprep.subr.mxu0 0.0
    %478 = vmatpush1.msra.mxu0 0.0
    %479 = vmatprep.subr.mxu0 0.0
    %480 = vmatpush1.msra.mxu0 0.0
    %481 = vmatprep.subr.mxu0 0.0
    %482 = vmatpush1.msra.mxu0 0.0
    %483 = vmatprep.subr.mxu0 0.0
    %484 = vmatpush1.msra.mxu0 0.0
    %485 = vmatprep.subr.mxu0 0.0
    %486 = vmatpush1.msra.mxu0 0.0
    %487 = vmatprep.subr.mxu0 0.0
    %488 = vmatpush1.msra.mxu0 0.0
    %489 = vmatprep.subr.mxu0 0.0
    %490 = vmatpush1.msra.mxu0 0.0
    %491 = vmatprep.subr.mxu0 0.0
    %492 = vmatpush1.msra.mxu0 0.0
    %493 = vmatprep.subr.mxu0 0.0
    %494 = vmatpush1.msra.mxu0 0.0
    %495 = vmatprep.subr.mxu0 0.0
    %496 = vmatpush1.msra.mxu0 0.0
    %497 = vmatprep.subr.mxu0 0.0
    %498 = vmatpush1.msra.mxu0 0.0
    %499 = vmatprep.subr.mxu0 0.0
    %500 = vmatpush1.msra.mxu0 0.0
    %501 = vmatprep.subr.mxu0 0.0
    %502 = vmatpush1.msra.mxu0 0.0
    %503 = vmatprep.subr.mxu0 0.0
    %504 = vmatpush1.msra.mxu0 0.0
    %505 = vmatprep.subr.mxu0 0.0
    %506 = vmatpush1.msra.mxu0 0.0
    %507 = vmatprep.subr.mxu0 0.0
    %508 = vmatpush1.msra.mxu0 0.0
    %509 = vmatprep.subr.mxu0 0.0
    %510 = vmatpush1.msra.mxu0 0.0
    %511 = vmatprep.subr.mxu0 0.0
    %512 = vmatpush1.msra.mxu0 0.0
    %513 = vmatprep.subr.mxu0 0.0
    %514 = vmatpush1.msra.mxu0 0.0
    %515 = vmatprep.subr.mxu0 0.0
    %516 = vmatpush1.msra.mxu0 0.0
    %517 = vmatprep.subr.mxu0 0.0
    %518 = vmatpush1.msra.mxu0 0.0
    %519 = vmatprep.subr.mxu0 0.0
    %520 = vmatpush1.msra.mxu0 0.0
    %521 = vmatprep.subr.mxu0 0.0
    %522 = vmatpush1.msra.mxu0 0.0
    %523 = vmatprep.mubr.f32.mxu0 0.0
    %524 = vmatmul.mubr.f32.gmra.mrb[0].mxu0 %v107
    %v525 = vpop.f32.mrb[0].mxu0
    %v526 = vadd.f32 0.0, %v525
    %v527 = vpop.f32.mrb[0].mxu0
    %528 = vdwg.mxu0
    %v530 = vsel %vm105, %v104, 0
    %532 = vmatprep.subr.mxu0 0.0
    %533 = vmatpush1.msra.mxu0 %v81
    %534 = vmatprep.subr.mxu0 0.0
    %535 = vmatpush1.msra.mxu0 %v82
    %536 = vmatprep.subr.mxu0 0.0
    %537 = vmatpush1.msra.mxu0 0.0
    %538 = vmatprep.subr.mxu0 0.0
    %539 = vmatpush1.msra.mxu0 0.0
    %540 = vmatprep.subr.mxu0 0.0
    %541 = vmatpush1.msra.mxu0 0.0
    %542 = vmatprep.subr.mxu0 0.0
    %543 = vmatpush1.msra.mxu0 0.0
    %544 = vmatprep.subr.mxu0 0.0
    %545 = vmatpush1.msra.mxu0 0.0
    %546 = vmatprep.subr.mxu0 0.0
    %547 = vmatpush1.msra.mxu0 0.0
    %548 = vmatprep.subr.mxu0 0.0
    %549 = vmatpush1.msra.mxu0 0.0
    %550 = vmatprep.subr.mxu0 0.0
    %551 = vmatpush1.msra.mxu0 0.0
    %552 = vmatprep.subr.mxu0 0.0
    %553 = vmatpush1.msra.mxu0 0.0
    %554 = vmatprep.subr.mxu0 0.0
    %555 = vmatpush1.msra.mxu0 0.0
    %556 = vmatprep.subr.mxu0 0.0
    %557 = vmatpush1.msra.mxu0 0.0
    %558 = vmatprep.subr.mxu0 0.0
    %559 = vmatpush1.msra.mxu0 0.0
    %560 = vmatprep.subr.mxu0 0.0
    %561 = vmatpush1.msra.mxu0 0.0
    %562 = vmatprep.subr.mxu0 0.0
    %563 = vmatpush1.msra.mxu0 0.0
    %564 = vmatprep.subr.mxu0 0.0
    %565 = vmatpush1.msra.mxu0 0.0
    %566 = vmatprep.subr.mxu0 0.0
    %567 = vmatpush1.msra.mxu0 0.0
    %568 = vmatprep.subr.mxu0 0.0
    %569 = vmatpush1.msra.mxu0 0.0
    %570 = vmatprep.subr.mxu0 0.0
    %571 = vmatpush1.msra.mxu0 0.0
    %572 = vmatprep.subr.mxu0 0.0
    %573 = vmatpush1.msra.mxu0 0.0
    %574 = vmatprep.subr.mxu0 0.0
    %575 = vmatpush1.msra.mxu0 0.0
    %576 = vmatprep.subr.mxu0 0.0
    %577 = vmatpush1.msra.mxu0 0.0
    %578 = vmatprep.subr.mxu0 0.0
    %579 = vmatpush1.msra.mxu0 0.0
    %580 = vmatprep.subr.mxu0 0.0
    %581 = vmatpush1.msra.mxu0 0.0
    %582 = vmatprep.subr.mxu0 0.0
    %583 = vmatpush1.msra.mxu0 0.0
    %584 = vmatprep.subr.mxu0 0.0
    %585 = vmatpush1.msra.mxu0 0.0
    %586 = vmatprep.subr.mxu0 0.0
    %587 = vmatpush1.msra.mxu0 0.0
    %588 = vmatprep.subr.mxu0 0.0
    %589 = vmatpush1.msra.mxu0 0.0
    %590 = vmatprep.subr.mxu0 0.0
    %591 = vmatpush1.msra.mxu0 0.0
    %592 = vmatprep.subr.mxu0 0.0
    %593 = vmatpush1.msra.mxu0 0.0
    %594 = vmatprep.subr.mxu0 0.0
    %595 = vmatpush1.msra.mxu0 0.0
    %596 = vmatprep.mubr.f32.mxu0 0.0
    %597 = vmatmul.mubr.f32.gmra.mrb[0].mxu0 %v530
    %v598 = vpop.f32.mrb[0].mxu0
    %v599 = vadd.f32 0.0, %v598
    %v600 = vpop.f32.mrb[0].mxu0
    %601 = vdwg.mxu0
    %602 = vmatprep.subr.mxu0 0.0
    %603 = vmatpush1.msra.mxu0 %v83
    %604 = vmatprep.subr.mxu0 0.0
    %605 = vmatpush1.msra.mxu0 %v84
    %606 = vmatprep.subr.mxu0 0.0
    %607 = vmatpush1.msra.mxu0 0.0
    %608 = vmatprep.subr.mxu0 0.0
    %609 = vmatpush1.msra.mxu0 0.0
    %610 = vmatprep.subr.mxu0 0.0
    %611 = vmatpush1.msra.mxu0 0.0
    %612 = vmatprep.subr.mxu0 0.0
    %613 = vmatpush1.msra.mxu0 0.0
    %614 = vmatprep.subr.mxu0 0.0
    %615 = vmatpush1.msra.mxu0 0.0
    %616 = vmatprep.subr.mxu0 0.0
    %617 = vmatpush1.msra.mxu0 0.0
    %618 = vmatprep.subr.mxu0 0.0
    %619 = vmatpush1.msra.mxu0 0.0
    %620 = vmatprep.subr.mxu0 0.0
    %621 = vmatpush1.msra.mxu0 0.0
    %622 = vmatprep.subr.mxu0 0.0
    %623 = vmatpush1.msra.mxu0 0.0
    %624 = vmatprep.subr.mxu0 0.0
    %625 = vmatpush1.msra.mxu0 0.0
    %626 = vmatprep.subr.mxu0 0.0
    %627 = vmatpush1.msra.mxu0 0.0
    %628 = vmatprep.subr.mxu0 0.0
    %629 = vmatpush1.msra.mxu0 0.0
    %630 = vmatprep.subr.mxu0 0.0
    %631 = vmatpush1.msra.mxu0 0.0
    %632 = vmatprep.subr.mxu0 0.0
    %633 = vmatpush1.msra.mxu0 0.0
    %634 = vmatprep.subr.mxu0 0.0
    %635 = vmatpush1.msra.mxu0 0.0
    %636 = vmatprep.subr.mxu0 0.0
    %637 = vmatpush1.msra.mxu0 0.0
    %638 = vmatprep.subr.mxu0 0.0
    %639 = vmatpush1.msra.mxu0 0.0
    %640 = vmatprep.subr.mxu0 0.0
    %641 = vmatpush1.msra.mxu0 0.0
    %642 = vmatprep.subr.mxu0 0.0
    %643 = vmatpush1.msra.mxu0 0.0
    %644 = vmatprep.subr.mxu0 0.0
    %645 = vmatpush1.msra.mxu0 0.0
    %646 = vmatprep.subr.mxu0 0.0
    %647 = vmatpush1.msra.mxu0 0.0
    %648 = vmatprep.subr.mxu0 0.0
    %649 = vmatpush1.msra.mxu0 0.0
    %650 = vmatprep.subr.mxu0 0.0
    %651 = vmatpush1.msra.mxu0 0.0
    %652 = vmatprep.subr.mxu0 0.0
    %653 = vmatpush1.msra.mxu0 0.0
    %654 = vmatprep.subr.mxu0 0.0
    %655 = vmatpush1.msra.mxu0 0.0
    %656 = vmatprep.subr.mxu0 0.0
    %657 = vmatpush1.msra.mxu0 0.0
    %658 = vmatprep.subr.mxu0 0.0
    %659 = vmatpush1.msra.mxu0 0.0
    %660 = vmatprep.subr.mxu0 0.0
    %661 = vmatpush1.msra.mxu0 0.0
    %662 = vmatprep.subr.mxu0 0.0
    %663 = vmatpush1.msra.mxu0 0.0
    %664 = vmatprep.subr.mxu0 0.0
    %665 = vmatpush1.msra.mxu0 0.0
    %666 = vmatprep.mubr.f32.mxu0 0.0
    %667 = vmatmul.mubr.f32.gmra.mrb[0].mxu0 %v530
    %v668 = vpop.f32.mrb[0].mxu0
    %v669 = vadd.f32 0.0, %v668
    %v670 = vpop.f32.mrb[0].mxu0
    %671 = vdwg.mxu0
    %672 = vmatprep.subr.mxu0 0.0
    %673 = vmatpush1.msra.mxu0 %v85
    %674 = vmatprep.subr.mxu0 0.0
    %675 = vmatpush1.msra.mxu0 %v86
    %676 = vmatprep.subr.mxu0 0.0
    %677 = vmatpush1.msra.mxu0 0.0
    %678 = vmatprep.subr.mxu0 0.0
    %679 = vmatpush1.msra.mxu0 0.0
    %680 = vmatprep.subr.mxu0 0.0
    %681 = vmatpush1.msra.mxu0 0.0
    %682 = vmatprep.subr.mxu0 0.0
    %683 = vmatpush1.msra.mxu0 0.0
    %684 = vmatprep.subr.mxu0 0.0
    %685 = vmatpush1.msra.mxu0 0.0
    %686 = vmatprep.subr.mxu0 0.0
    %687 = vmatpush1.msra.mxu0 0.0
    %688 = vmatprep.subr.mxu0 0.0
    %689 = vmatpush1.msra.mxu0 0.0
    %690 = vmatprep.subr.mxu0 0.0
    %691 = vmatpush1.msra.mxu0 0.0
    %692 = vmatprep.subr.mxu0 0.0
    %693 = vmatpush1.msra.mxu0 0.0
    %694 = vmatprep.subr.mxu0 0.0
    %695 = vmatpush1.msra.mxu0 0.0
    %696 = vmatprep.subr.mxu0 0.0
    %697 = vmatpush1.msra.mxu0 0.0
    %698 = vmatprep.subr.mxu0 0.0
    %699 = vmatpush1.msra.mxu0 0.0
    %700 = vmatprep.subr.mxu0 0.0
    %701 = vmatpush1.msra.mxu0 0.0
    %702 = vmatprep.subr.mxu0 0.0
    %703 = vmatpush1.msra.mxu0 0.0
    %704 = vmatprep.subr.mxu0 0.0
    %705 = vmatpush1.msra.mxu0 0.0
    %706 = vmatprep.subr.mxu0 0.0
    %707 = vmatpush1.msra.mxu0 0.0
    %708 = vmatprep.subr.mxu0 0.0
    %709 = vmatpush1.msra.mxu0 0.0
    %710 = vmatprep.subr.mxu0 0.0
    %711 = vmatpush1.msra.mxu0 0.0
    %712 = vmatprep.subr.mxu0 0.0
    %713 = vmatpush1.msra.mxu0 0.0
    %714 = vmatprep.subr.mxu0 0.0
    %715 = vmatpush1.msra.mxu0 0.0
    %716 = vmatprep.subr.mxu0 0.0
    %717 = vmatpush1.msra.mxu0 0.0
    %718 = vmatprep.subr.mxu0 0.0
    %719 = vmatpush1.msra.mxu0 0.0
    %720 = vmatprep.subr.mxu0 0.0
    %721 = vmatpush1.msra.mxu0 0.0
    %722 = vmatprep.subr.mxu0 0.0
    %723 = vmatpush1.msra.mxu0 0.0
    %724 = vmatprep.subr.mxu0 0.0
    %725 = vmatpush1.msra.mxu0 0.0
    %726 = vmatprep.subr.mxu0 0.0
    %727 = vmatpush1.msra.mxu0 0.0
    %728 = vmatprep.subr.mxu0 0.0
    %729 = vmatpush1.msra.mxu0 0.0
    %730 = vmatprep.subr.mxu0 0.0
    %731 = vmatpush1.msra.mxu0 0.0
    %732 = vmatprep.subr.mxu0 0.0
    %733 = vmatpush1.msra.mxu0 0.0
    %734 = vmatprep.subr.mxu0 0.0
    %735 = vmatpush1.msra.mxu0 0.0
    %736 = vmatprep.mubr.f32.mxu0 0.0
    %737 = vmatmul.mubr.f32.gmra.mrb[0].mxu0 %v530
    %v738 = vpop.f32.mrb[0].mxu0
    %v739 = vadd.f32 0.0, %v738
    %v740 = vpop.f32.mrb[0].mxu0
    %741 = vdwg.mxu0
    %742 = vmatprep.subr.mxu0 0.0
    %743 = vmatpush1.msra.mxu0 %v87
    %744 = vmatprep.subr.mxu0 0.0
    %745 = vmatpush1.msra.mxu0 %v88
    %746 = vmatprep.subr.mxu0 0.0
    %747 = vmatpush1.msra.mxu0 0.0
    %748 = vmatprep.subr.mxu0 0.0
    %749 = vmatpush1.msra.mxu0 0.0
    %750 = vmatprep.subr.mxu0 0.0
    %751 = vmatpush1.msra.mxu0 0.0
    %752 = vmatprep.subr.mxu0 0.0
    %753 = vmatpush1.msra.mxu0 0.0
    %754 = vmatprep.subr.mxu0 0.0
    %755 = vmatpush1.msra.mxu0 0.0
    %756 = vmatprep.subr.mxu0 0.0
    %757 = vmatpush1.msra.mxu0 0.0
    %758 = vmatprep.subr.mxu0 0.0
    %759 = vmatpush1.msra.mxu0 0.0
    %760 = vmatprep.subr.mxu0 0.0
    %761 = vmatpush1.msra.mxu0 0.0
    %762 = vmatprep.subr.mxu0 0.0
    %763 = vmatpush1.msra.mxu0 0.0
    %764 = vmatprep.subr.mxu0 0.0
    %765 = vmatpush1.msra.mxu0 0.0
    %766 = vmatprep.subr.mxu0 0.0
    %767 = vmatpush1.msra.mxu0 0.0
    %768 = vmatprep.subr.mxu0 0.0
    %769 = vmatpush1.msra.mxu0 0.0
    %770 = vmatprep.subr.mxu0 0.0
    %771 = vmatpush1.msra.mxu0 0.0
    %772 = vmatprep.subr.mxu0 0.0
    %773 = vmatpush1.msra.mxu0 0.0
    %774 = vmatprep.subr.mxu0 0.0
    %775 = vmatpush1.msra.mxu0 0.0
    %776 = vmatprep.subr.mxu0 0.0
    %777 = vmatpush1.msra.mxu0 0.0
    %778 = vmatprep.subr.mxu0 0.0
    %779 = vmatpush1.msra.mxu0 0.0
    %780 = vmatprep.subr.mxu0 0.0
    %781 = vmatpush1.msra.mxu0 0.0
    %782 = vmatprep.subr.mxu0 0.0
    %783 = vmatpush1.msra.mxu0 0.0
    %784 = vmatprep.subr.mxu0 0.0
    %785 = vmatpush1.msra.mxu0 0.0
    %786 = vmatprep.subr.mxu0 0.0
    %787 = vmatpush1.msra.mxu0 0.0
    %788 = vmatprep.subr.mxu0 0.0
    %789 = vmatpush1.msra.mxu0 0.0
    %790 = vmatprep.subr.mxu0 0.0
    %791 = vmatpush1.msra.mxu0 0.0
    %792 = vmatprep.subr.mxu0 0.0
    %793 = vmatpush1.msra.mxu0 0.0
    %794 = vmatprep.subr.mxu0 0.0
    %795 = vmatpush1.msra.mxu0 0.0
    %796 = vmatprep.subr.mxu0 0.0
    %797 = vmatpush1.msra.mxu0 0.0
    %798 = vmatprep.subr.mxu0 0.0
    %799 = vmatpush1.msra.mxu0 0.0
    %800 = vmatprep.subr.mxu0 0.0
    %801 = vmatpush1.msra.mxu0 0.0
    %802 = vmatprep.subr.mxu0 0.0
    %803 = vmatpush1.msra.mxu0 0.0
    %804 = vmatprep.subr.mxu0 0.0
    %805 = vmatpush1.msra.mxu0 0.0
    %806 = vmatprep.mubr.f32.mxu0 0.0
    %807 = vmatmul.mubr.f32.gmra.mrb[0].mxu0 %v530
    %v808 = vpop.f32.mrb[0].mxu0
    %v809 = vadd.f32 0.0, %v808
    %v810 = vpop.f32.mrb[0].mxu0
    %811 = vdwg.mxu0
    %812 = vmatprep.subr.mxu0 0.0
    %813 = vmatpush1.msra.mxu0 %v89
    %814 = vmatprep.subr.mxu0 0.0
    %815 = vmatpush1.msra.mxu0 %v90
    %816 = vmatprep.subr.mxu0 0.0
    %817 = vmatpush1.msra.mxu0 0.0
    %818 = vmatprep.subr.mxu0 0.0
    %819 = vmatpush1.msra.mxu0 0.0
    %820 = vmatprep.subr.mxu0 0.0
    %821 = vmatpush1.msra.mxu0 0.0
    %822 = vmatprep.subr.mxu0 0.0
    %823 = vmatpush1.msra.mxu0 0.0
    %824 = vmatprep.subr.mxu0 0.0
    %825 = vmatpush1.msra.mxu0 0.0
    %826 = vmatprep.subr.mxu0 0.0
    %827 = vmatpush1.msra.mxu0 0.0
    %828 = vmatprep.subr.mxu0 0.0
    %829 = vmatpush1.msra.mxu0 0.0
    %830 = vmatprep.subr.mxu0 0.0
    %831 = vmatpush1.msra.mxu0 0.0
    %832 = vmatprep.subr.mxu0 0.0
    %833 = vmatpush1.msra.mxu0 0.0
    %834 = vmatprep.subr.mxu0 0.0
    %835 = vmatpush1.msra.mxu0 0.0
    %836 = vmatprep.subr.mxu0 0.0
    %837 = vmatpush1.msra.mxu0 0.0
    %838 = vmatprep.subr.mxu0 0.0
    %839 = vmatpush1.msra.mxu0 0.0
    %840 = vmatprep.subr.mxu0 0.0
    %841 = vmatpush1.msra.mxu0 0.0
    %842 = vmatprep.subr.mxu0 0.0
    %843 = vmatpush1.msra.mxu0 0.0
    %844 = vmatprep.subr.mxu0 0.0
    %845 = vmatpush1.msra.mxu0 0.0
    %846 = vmatprep.subr.mxu0 0.0
    %847 = vmatpush1.msra.mxu0 0.0
    %848 = vmatprep.subr.mxu0 0.0
    %849 = vmatpush1.msra.mxu0 0.0
    %850 = vmatprep.subr.mxu0 0.0
    %851 = vmatpush1.msra.mxu0 0.0
    %852 = vmatprep.subr.mxu0 0.0
    %853 = vmatpush1.msra.mxu0 0.0
    %854 = vmatprep.subr.mxu0 0.0
    %855 = vmatpush1.msra.mxu0 0.0
    %856 = vmatprep.subr.mxu0 0.0
    %857 = vmatpush1.msra.mxu0 0.0
    %858 = vmatprep.subr.mxu0 0.0
    %859 = vmatpush1.msra.mxu0 0.0
    %860 = vmatprep.subr.mxu0 0.0
    %861 = vmatpush1.msra.mxu0 0.0
    %862 = vmatprep.subr.mxu0 0.0
    %863 = vmatpush1.msra.mxu0 0.0
    %864 = vmatprep.subr.mxu0 0.0
    %865 = vmatpush1.msra.mxu0 0.0
    %866 = vmatprep.subr.mxu0 0.0
    %867 = vmatpush1.msra.mxu0 0.0
    %868 = vmatprep.subr.mxu0 0.0
    %869 = vmatpush1.msra.mxu0 0.0
    %870 = vmatprep.subr.mxu0 0.0
    %871 = vmatpush1.msra.mxu0 0.0
    %872 = vmatprep.subr.mxu0 0.0
    %873 = vmatpush1.msra.mxu0 0.0
    %874 = vmatprep.subr.mxu0 0.0
    %875 = vmatpush1.msra.mxu0 0.0
    %876 = vmatprep.mubr.f32.mxu0 0.0
    %877 = vmatmul.mubr.f32.gmra.mrb[0].mxu0 %v530
    %v878 = vpop.f32.mrb[0].mxu0
    %v879 = vadd.f32 0.0, %v878
    %v880 = vpop.f32.mrb[0].mxu0
    %881 = vdwg.mxu0
    %882 = vmatprep.subr.mxu0 0.0
    %883 = vmatpush1.msra.mxu0 %v91
    %884 = vmatprep.subr.mxu0 0.0
    %885 = vmatpush1.msra.mxu0 %v92
    %886 = vmatprep.subr.mxu0 0.0
    %887 = vmatpush1.msra.mxu0 0.0
    %888 = vmatprep.subr.mxu0 0.0
    %889 = vmatpush1.msra.mxu0 0.0
    %890 = vmatprep.subr.mxu0 0.0
    %891 = vmatpush1.msra.mxu0 0.0
    %892 = vmatprep.subr.mxu0 0.0
    %893 = vmatpush1.msra.mxu0 0.0
    %894 = vmatprep.subr.mxu0 0.0
    %895 = vmatpush1.msra.mxu0 0.0
    %896 = vmatprep.subr.mxu0 0.0
    %897 = vmatpush1.msra.mxu0 0.0
    %898 = vmatprep.subr.mxu0 0.0
    %899 = vmatpush1.msra.mxu0 0.0
    %900 = vmatprep.subr.mxu0 0.0
    %901 = vmatpush1.msra.mxu0 0.0
    %902 = vmatprep.subr.mxu0 0.0
    %903 = vmatpush1.msra.mxu0 0.0
    %904 = vmatprep.subr.mxu0 0.0
    %905 = vmatpush1.msra.mxu0 0.0
    %906 = vmatprep.subr.mxu0 0.0
    %907 = vmatpush1.msra.mxu0 0.0
    %908 = vmatprep.subr.mxu0 0.0
    %909 = vmatpush1.msra.mxu0 0.0
    %910 = vmatprep.subr.mxu0 0.0
    %911 = vmatpush1.msra.mxu0 0.0
    %912 = vmatprep.subr.mxu0 0.0
    %913 = vmatpush1.msra.mxu0 0.0
    %914 = vmatprep.subr.mxu0 0.0
    %915 = vmatpush1.msra.mxu0 0.0
    %916 = vmatprep.subr.mxu0 0.0
    %917 = vmatpush1.msra.mxu0 0.0
    %918 = vmatprep.subr.mxu0 0.0
    %919 = vmatpush1.msra.mxu0 0.0
    %920 = vmatprep.subr.mxu0 0.0
    %921 = vmatpush1.msra.mxu0 0.0
    %922 = vmatprep.subr.mxu0 0.0
    %923 = vmatpush1.msra.mxu0 0.0
    %924 = vmatprep.subr.mxu0 0.0
    %925 = vmatpush1.msra.mxu0 0.0
    %926 = vmatprep.subr.mxu0 0.0
    %927 = vmatpush1.msra.mxu0 0.0
    %928 = vmatprep.subr.mxu0 0.0
    %929 = vmatpush1.msra.mxu0 0.0
    %930 = vmatprep.subr.mxu0 0.0
    %931 = vmatpush1.msra.mxu0 0.0
    %932 = vmatprep.subr.mxu0 0.0
    %933 = vmatpush1.msra.mxu0 0.0
    %934 = vmatprep.subr.mxu0 0.0
    %935 = vmatpush1.msra.mxu0 0.0
    %936 = vmatprep.subr.mxu0 0.0
    %937 = vmatpush1.msra.mxu0 0.0
    %938 = vmatprep.subr.mxu0 0.0
    %939 = vmatpush1.msra.mxu0 0.0
    %940 = vmatprep.subr.mxu0 0.0
    %941 = vmatpush1.msra.mxu0 0.0
    %942 = vmatprep.subr.mxu0 0.0
    %943 = vmatpush1.msra.mxu0 0.0
    %944 = vmatprep.subr.mxu0 0.0
    %945 = vmatpush1.msra.mxu0 0.0
    %946 = vmatprep.mubr.f32.mxu0 0.0
    %947 = vmatmul.mubr.f32.gmra.mrb[0].mxu0 %v530
    %v948 = vpop.f32.mrb[0].mxu0
    %v949 = vadd.f32 0.0, %v948
    %v950 = vpop.f32.mrb[0].mxu0
    %951 = vdwg.mxu0
    %vm952 = vcmp.ge.s32.totalorder %v94, 1
    %v953 = vrot.slane %v176, 7
    %v954 = vrot.slane %v246, 7
    %v955 = vrot.slane %v316, 7
    %v956 = vrot.slane %v386, 7
    %v957 = vrot.slane %v456, 7
    %v958 = vrot.slane %v526, 7
    %v959 = vsel %vm952, %v953, 0.0
    %v960 = vsel %vm952, %v954, 0.0
    %v961 = vsel %vm952, %v955, 0.0
    %v962 = vsel %vm952, %v956, 0.0
    %v963 = vsel %vm952, %v957, 0.0
    %v964 = vsel %vm952, %v958, 0.0
    %vm965 = vcmp.lt.s32.totalorder %v94, 7
    %v966 = vrot.slane %v176, 1
    %v967 = vrot.slane %v246, 1
    %v968 = vrot.slane %v316, 1
    %v969 = vrot.slane %v386, 1
    %v970 = vrot.slane %v456, 1
    %v971 = vrot.slane %v526, 1
    %v972 = vsel %vm965, %v966, 0.0
    %v973 = vsel %vm965, %v967, 0.0
    %v974 = vsel %vm965, %v968, 0.0
    %v975 = vsel %vm965, %v969, 0.0
    %v976 = vsel %vm965, %v970, 0.0
    %v977 = vsel %vm965, %v971, 0.0
    %vm978 = vcmp.ge.s32.totalorder %v96, 1
    %vm979 = vcmp.lt.s32.totalorder %v96, 15
    %v980 = vstv %s79
    %vm981 = vcmask 1047680
    %982 = vrot.lane.b32.xlu0 %v959, 16
    %v983 = vpop.permute.xlu0 %982
    %v984 = vsel %vm981, %v983, %v959
    %985 = vrot.lane.b32.xlu0 %v960, 16
    %v986 = vpop.permute.xlu0 %985
    %v987 = vsel %vm981, %v986, %v960
    %988 = vrot.lane.b32.xlu0 %v961, 16
    %v989 = vpop.permute.xlu0 %988
    %v990 = vsel %vm981, %v989, %v961
    %991 = vrot.lane.b32.xlu0 %v962, 16
    %v992 = vpop.permute.xlu0 %991
    %v993 = vsel %vm981, %v992, %v962
    %994 = vrot.lane.b32.xlu0 %v963, 16
    %v995 = vpop.permute.xlu0 %994
    %v996 = vsel %vm981, %v995, %v963
    %997 = vrot.lane.b32.xlu0 %v964, 16
    %v998 = vpop.permute.xlu0 %997
    %v999 = vsel %vm981, %v998, %v964
    %1000 = vrot.lane.b32.xlu0 %v984, 16
    %v1001 = vpop.permute.xlu0 %1000
    %1002 = vrot.lane.b32.xlu0 %v987, 16
    %v1003 = vpop.permute.xlu0 %1002
    %1004 = vrot.lane.b32.xlu0 %v990, 16
    %v1005 = vpop.permute.xlu0 %1004
    %1006 = vrot.lane.b32.xlu0 %v993, 16
    %v1007 = vpop.permute.xlu0 %1006
    %1008 = vrot.lane.b32.xlu0 %v996, 16
    %v1009 = vpop.permute.xlu0 %1008
    %1010 = vrot.lane.b32.xlu0 %v999, 16
    %v1011 = vpop.permute.xlu0 %1010
    %v1012 = vsel %vm981, %v1001, %v959
    %v1013 = vsel %vm981, %v1003, %v960
    %v1014 = vsel %vm981, %v1005, %v961
    %v1015 = vsel %vm981, %v1007, %v962
    %v1016 = vsel %vm981, %v1009, %v963
    %v1017 = vsel %vm981, %v1011, %v964
    %1024 = vrot.lane.b32.xlu0 %v1012, 113
    %v1025 = vpop.permute.xlu0 %1024
    %1026 = vrot.lane.b32.xlu0 %v1013, 113
    %v1027 = vpop.permute.xlu0 %1026
    %1028 = vrot.lane.b32.xlu0 %v1014, 113
    %v1029 = vpop.permute.xlu0 %1028
    %1030 = vrot.lane.b32.xlu0 %v1015, 113
    %v1031 = vpop.permute.xlu0 %1030
    %1032 = vrot.lane.b32.xlu0 %v1016, 113
    %v1033 = vpop.permute.xlu0 %1032
    %1034 = vrot.lane.b32.xlu0 %v1017, 113
    %v1035 = vpop.permute.xlu0 %1034
    %v1042 = vsel %vm978, %v1025, 0.0
    %v1043 = vsel %vm978, %v1027, 0.0
    %v1044 = vsel %vm978, %v1029, 0.0
    %v1045 = vsel %vm978, %v1031, 0.0
    %v1046 = vsel %vm978, %v1033, 0.0
    %v1047 = vsel %vm978, %v1035, 0.0
    %v1048 = vstv %s61
    %v1049 = vmul.f32 %v1048, %v1042
    %v1050 = vmul.f32 %v1048, %v1043
    %v1051 = vmul.f32 %v1048, %v1044
    %v1052 = vmul.f32 %v1048, %v1045
    %v1053 = vmul.f32 %v1048, %v1046
    %v1054 = vmul.f32 %v1048, %v1047
    %v1055 = vadd.f32 %v980, %v1049
    %v1056 = vadd.f32 %v980, %v1050
    %v1057 = vadd.f32 %v980, %v1051
    %v1058 = vadd.f32 %v980, %v1052
    %v1059 = vadd.f32 %v980, %v1053
    %v1060 = vadd.f32 %v980, %v1054
    %v1061 = vstv %s62
    %v1062 = vmul.f32 %v1061, %v959
    %v1063 = vmul.f32 %v1061, %v960
    %v1064 = vmul.f32 %v1061, %v961
    %v1065 = vmul.f32 %v1061, %v962
    %v1066 = vmul.f32 %v1061, %v963
    %v1067 = vmul.f32 %v1061, %v964
    %v1068 = vadd.f32 %v1062, 0.0
    %v1069 = vadd.f32 %v1063, 0.0
    %v1070 = vadd.f32 %v1064, 0.0
    %v1071 = vadd.f32 %v1065, 0.0
    %v1072 = vadd.f32 %v1066, 0.0
    %v1073 = vadd.f32 %v1067, 0.0
    %1074 = vrot.lane.b32.xlu0 %v1012, 127
    %v1075 = vpop.permute.xlu0 %1074
    %1076 = vrot.lane.b32.xlu0 %v1013, 127
    %v1077 = vpop.permute.xlu0 %1076
    %1078 = vrot.lane.b32.xlu0 %v1014, 127
    %v1079 = vpop.permute.xlu0 %1078
    %1080 = vrot.lane.b32.xlu0 %v1015, 127
    %v1081 = vpop.permute.xlu0 %1080
    %1082 = vrot.lane.b32.xlu0 %v1016, 127
    %v1083 = vpop.permute.xlu0 %1082
    %1084 = vrot.lane.b32.xlu0 %v1017, 127
    %v1085 = vpop.permute.xlu0 %1084
    %v1092 = vsel %vm979, %v1075, 0.0
    %v1093 = vsel %vm979, %v1077, 0.0
    %v1094 = vsel %vm979, %v1079, 0.0
    %v1095 = vsel %vm979, %v1081, 0.0
    %v1096 = vsel %vm979, %v1083, 0.0
    %v1097 = vsel %vm979, %v1085, 0.0
    %v1098 = vstv %s63
    %v1099 = vmul.f32 %v1098, %v1092
    %v1100 = vmul.f32 %v1098, %v1093
    %v1101 = vmul.f32 %v1098, %v1094
    %v1102 = vmul.f32 %v1098, %v1095
    %v1103 = vmul.f32 %v1098, %v1096
    %v1104 = vmul.f32 %v1098, %v1097
    %v1105 = vadd.f32 %v1055, %v1099
    %v1106 = vadd.f32 %v1056, %v1100
    %v1107 = vadd.f32 %v1057, %v1101
    %v1108 = vadd.f32 %v1058, %v1102
    %v1109 = vadd.f32 %v1059, %v1103
    %v1110 = vadd.f32 %v1060, %v1104
    %1111 = vrot.lane.b32.xlu0 %v176, 16
    %v1112 = vpop.permute.xlu0 %1111
    %v1113 = vsel %vm981, %v1112, %v176
    %1114 = vrot.lane.b32.xlu0 %v246, 16
    %v1115 = vpop.permute.xlu0 %1114
    %v1116 = vsel %vm981, %v1115, %v246
    %1117 = vrot.lane.b32.xlu0 %v316, 16
    %v1118 = vpop.permute.xlu0 %1117
    %v1119 = vsel %vm981, %v1118, %v316
    %1120 = vrot.lane.b32.xlu0 %v386, 16
    %v1121 = vpop.permute.xlu0 %1120
    %v1122 = vsel %vm981, %v1121, %v386
    %1123 = vrot.lane.b32.xlu0 %v456, 16
    %v1124 = vpop.permute.xlu0 %1123
    %v1125 = vsel %vm981, %v1124, %v456
    %1126 = vrot.lane.b32.xlu0 %v526, 16
    %v1127 = vpop.permute.xlu0 %1126
    %v1128 = vsel %vm981, %v1127, %v526
    %1129 = vrot.lane.b32.xlu0 %v1113, 16
    %v1130 = vpop.permute.xlu0 %1129
    %1131 = vrot.lane.b32.xlu0 %v1116, 16
    %v1132 = vpop.permute.xlu0 %1131
    %1133 = vrot.lane.b32.xlu0 %v1119, 16
    %v1134 = vpop.permute.xlu0 %1133
    %1135 = vrot.lane.b32.xlu0 %v1122, 16
    %v1136 = vpop.permute.xlu0 %1135
    %1137 = vrot.lane.b32.xlu0 %v1125, 16
    %v1138 = vpop.permute.xlu0 %1137
    %1139 = vrot.lane.b32.xlu0 %v1128, 16
    %v1140 = vpop.permute.xlu0 %1139
    %v1141 = vsel %vm981, %v1130, %v176
    %v1142 = vsel %vm981, %v1132, %v246
    %v1143 = vsel %vm981, %v1134, %v316
    %v1144 = vsel %vm981, %v1136, %v386
    %v1145 = vsel %vm981, %v1138, %v456
    %v1146 = vsel %vm981, %v1140, %v526
    %1153 = vrot.lane.b32.xlu0 %v1141, 113
    %v1154 = vpop.permute.xlu0 %1153
    %1155 = vrot.lane.b32.xlu0 %v1142, 113
    %v1156 = vpop.permute.xlu0 %1155
    %1157 = vrot.lane.b32.xlu0 %v1143, 113
    %v1158 = vpop.permute.xlu0 %1157
    %1159 = vrot.lane.b32.xlu0 %v1144, 113
    %v1160 = vpop.permute.xlu0 %1159
    %1161 = vrot.lane.b32.xlu0 %v1145, 113
    %v1162 = vpop.permute.xlu0 %1161
    %1163 = vrot.lane.b32.xlu0 %v1146, 113
    %v1164 = vpop.permute.xlu0 %1163
    %v1171 = vsel %vm978, %v1154, 0.0
    %v1172 = vsel %vm978, %v1156, 0.0
    %v1173 = vsel %vm978, %v1158, 0.0
    %v1174 = vsel %vm978, %v1160, 0.0
    %v1175 = vsel %vm978, %v1162, 0.0
    %v1176 = vsel %vm978, %v1164, 0.0
    %v1177 = vstv %s64
    %v1178 = vmul.f32 %v1177, %v1171
    %v1179 = vmul.f32 %v1177, %v1172
    %v1180 = vmul.f32 %v1177, %v1173
    %v1181 = vmul.f32 %v1177, %v1174
    %v1182 = vmul.f32 %v1177, %v1175
    %v1183 = vmul.f32 %v1177, %v1176
    %v1184 = vadd.f32 %v1068, %v1178
    %v1185 = vadd.f32 %v1069, %v1179
    %v1186 = vadd.f32 %v1070, %v1180
    %v1187 = vadd.f32 %v1071, %v1181
    %v1188 = vadd.f32 %v1072, %v1182
    %v1189 = vadd.f32 %v1073, %v1183
    %v1190 = vstv %s65
    %v1191 = vmul.f32 %v1190, %v176
    %v1192 = vmul.f32 %v1190, %v246
    %v1193 = vmul.f32 %v1190, %v316
    %v1194 = vmul.f32 %v1190, %v386
    %v1195 = vmul.f32 %v1190, %v456
    %v1196 = vmul.f32 %v1190, %v526
    %v1197 = vadd.f32 %v1105, %v1191
    %v1198 = vadd.f32 %v1106, %v1192
    %v1199 = vadd.f32 %v1107, %v1193
    %v1200 = vadd.f32 %v1108, %v1194
    %v1201 = vadd.f32 %v1109, %v1195
    %v1202 = vadd.f32 %v1110, %v1196
    %1203 = vrot.lane.b32.xlu0 %v1141, 127
    %v1204 = vpop.permute.xlu0 %1203
    %1205 = vrot.lane.b32.xlu0 %v1142, 127
    %v1206 = vpop.permute.xlu0 %1205
    %1207 = vrot.lane.b32.xlu0 %v1143, 127
    %v1208 = vpop.permute.xlu0 %1207
    %1209 = vrot.lane.b32.xlu0 %v1144, 127
    %v1210 = vpop.permute.xlu0 %1209
    %1211 = vrot.lane.b32.xlu0 %v1145, 127
    %v1212 = vpop.permute.xlu0 %1211
    %1213 = vrot.lane.b32.xlu0 %v1146, 127
    %v1214 = vpop.permute.xlu0 %1213
    %v1221 = vsel %vm979, %v1204, 0.0
    %v1222 = vsel %vm979, %v1206, 0.0
    %v1223 = vsel %vm979, %v1208, 0.0
    %v1224 = vsel %vm979, %v1210, 0.0
    %v1225 = vsel %vm979, %v1212, 0.0
    %v1226 = vsel %vm979, %v1214, 0.0
    %v1227 = vstv %s66
    %v1228 = vmul.f32 %v1227, %v1221
    %v1229 = vmul.f32 %v1227, %v1222
    %v1230 = vmul.f32 %v1227, %v1223
    %v1231 = vmul.f32 %v1227, %v1224
    %v1232 = vmul.f32 %v1227, %v1225
    %v1233 = vmul.f32 %v1227, %v1226
    %v1234 = vadd.f32 %v1184, %v1228
    %v1235 = vadd.f32 %v1185, %v1229
    %v1236 = vadd.f32 %v1186, %v1230
    %v1237 = vadd.f32 %v1187, %v1231
    %v1238 = vadd.f32 %v1188, %v1232
    %v1239 = vadd.f32 %v1189, %v1233
    %1240 = vrot.lane.b32.xlu0 %v972, 16
    %v1241 = vpop.permute.xlu0 %1240
    %v1242 = vsel %vm981, %v1241, %v972
    %1243 = vrot.lane.b32.xlu0 %v973, 16
    %v1244 = vpop.permute.xlu0 %1243
    %v1245 = vsel %vm981, %v1244, %v973
    %1246 = vrot.lane.b32.xlu0 %v974, 16
    %v1247 = vpop.permute.xlu0 %1246
    %v1248 = vsel %vm981, %v1247, %v974
    %1249 = vrot.lane.b32.xlu0 %v975, 16
    %v1250 = vpop.permute.xlu0 %1249
    %v1251 = vsel %vm981, %v1250, %v975
    %1252 = vrot.lane.b32.xlu0 %v976, 16
    %v1253 = vpop.permute.xlu0 %1252
    %v1254 = vsel %vm981, %v1253, %v976
    %1255 = vrot.lane.b32.xlu0 %v977, 16
    %v1256 = vpop.permute.xlu0 %1255
    %v1257 = vsel %vm981, %v1256, %v977
    %1258 = vrot.lane.b32.xlu0 %v1242, 16
    %v1259 = vpop.permute.xlu0 %1258
    %1260 = vrot.lane.b32.xlu0 %v1245, 16
    %v1261 = vpop.permute.xlu0 %1260
    %1262 = vrot.lane.b32.xlu0 %v1248, 16
    %v1263 = vpop.permute.xlu0 %1262
    %1264 = vrot.lane.b32.xlu0 %v1251, 16
    %v1265 = vpop.permute.xlu0 %1264
    %1266 = vrot.lane.b32.xlu0 %v1254, 16
    %v1267 = vpop.permute.xlu0 %1266
    %1268 = vrot.lane.b32.xlu0 %v1257, 16
    %v1269 = vpop.permute.xlu0 %1268
    %v1270 = vsel %vm981, %v1259, %v972
    %v1271 = vsel %vm981, %v1261, %v973
    %v1272 = vsel %vm981, %v1263, %v974
    %v1273 = vsel %vm981, %v1265, %v975
    %v1274 = vsel %vm981, %v1267, %v976
    %v1275 = vsel %vm981, %v1269, %v977
    %1282 = vrot.lane.b32.xlu0 %v1270, 113
    %v1283 = vpop.permute.xlu0 %1282
    %1284 = vrot.lane.b32.xlu0 %v1271, 113
    %v1285 = vpop.permute.xlu0 %1284
    %1286 = vrot.lane.b32.xlu0 %v1272, 113
    %v1287 = vpop.permute.xlu0 %1286
    %1288 = vrot.lane.b32.xlu0 %v1273, 113
    %v1289 = vpop.permute.xlu0 %1288
    %1290 = vrot.lane.b32.xlu0 %v1274, 113
    %v1291 = vpop.permute.xlu0 %1290
    %1292 = vrot.lane.b32.xlu0 %v1275, 113
    %v1293 = vpop.permute.xlu0 %1292
    %v1300 = vsel %vm978, %v1283, 0.0
    %v1301 = vsel %vm978, %v1285, 0.0
    %v1302 = vsel %vm978, %v1287, 0.0
    %v1303 = vsel %vm978, %v1289, 0.0
    %v1304 = vsel %vm978, %v1291, 0.0
    %v1305 = vsel %vm978, %v1293, 0.0
    %v1306 = vstv %s67
    %v1307 = vmul.f32 %v1306, %v1300
    %v1308 = vmul.f32 %v1306, %v1301
    %v1309 = vmul.f32 %v1306, %v1302
    %v1310 = vmul.f32 %v1306, %v1303
    %v1311 = vmul.f32 %v1306, %v1304
    %v1312 = vmul.f32 %v1306, %v1305
    %v1313 = vadd.f32 %v1197, %v1307
    %v1314 = vadd.f32 %v1198, %v1308
    %v1315 = vadd.f32 %v1199, %v1309
    %v1316 = vadd.f32 %v1200, %v1310
    %v1317 = vadd.f32 %v1201, %v1311
    %v1318 = vadd.f32 %v1202, %v1312
    %v1319 = vstv %s68
    %v1320 = vmul.f32 %v1319, %v972
    %v1321 = vmul.f32 %v1319, %v973
    %v1322 = vmul.f32 %v1319, %v974
    %v1323 = vmul.f32 %v1319, %v975
    %v1324 = vmul.f32 %v1319, %v976
    %v1325 = vmul.f32 %v1319, %v977
    %v1326 = vadd.f32 %v1234, %v1320
    %v1327 = vadd.f32 %v1235, %v1321
    %v1328 = vadd.f32 %v1236, %v1322
    %v1329 = vadd.f32 %v1237, %v1323
    %v1330 = vadd.f32 %v1238, %v1324
    %v1331 = vadd.f32 %v1239, %v1325
    %1332 = vrot.lane.b32.xlu0 %v1270, 127
    %v1333 = vpop.permute.xlu0 %1332
    %1334 = vrot.lane.b32.xlu0 %v1271, 127
    %v1335 = vpop.permute.xlu0 %1334
    %1336 = vrot.lane.b32.xlu0 %v1272, 127
    %v1337 = vpop.permute.xlu0 %1336
    %1338 = vrot.lane.b32.xlu0 %v1273, 127
    %v1339 = vpop.permute.xlu0 %1338
    %1340 = vrot.lane.b32.xlu0 %v1274, 127
    %v1341 = vpop.permute.xlu0 %1340
    %1342 = vrot.lane.b32.xlu0 %v1275, 127
    %v1343 = vpop.permute.xlu0 %1342
    %v1350 = vsel %vm979, %v1333, 0.0
    %v1351 = vsel %vm979, %v1335, 0.0
    %v1352 = vsel %vm979, %v1337, 0.0
    %v1353 = vsel %vm979, %v1339, 0.0
    %v1354 = vsel %vm979, %v1341, 0.0
    %v1355 = vsel %vm979, %v1343, 0.0
    %v1356 = vstv %s69
    %v1357 = vmul.f32 %v1356, %v1350
    %v1358 = vmul.f32 %v1356, %v1351
    %v1359 = vmul.f32 %v1356, %v1352
    %v1360 = vmul.f32 %v1356, %v1353
    %v1361 = vmul.f32 %v1356, %v1354
    %v1362 = vmul.f32 %v1356, %v1355
    %v1363 = vadd.f32 %v1313, %v1357
    %v1364 = vadd.f32 %v1314, %v1358
    %v1365 = vadd.f32 %v1315, %v1359
    %v1366 = vadd.f32 %v1316, %v1360
    %v1367 = vadd.f32 %v1317, %v1361
    %v1368 = vadd.f32 %v1318, %v1362
    %v1369 = vadd.f32 %v1363, %v1326
    %v1370 = vadd.f32 %v1364, %v1327
    %v1371 = vadd.f32 %v1365, %v1328
    %v1372 = vadd.f32 %v1366, %v1329
    %v1373 = vadd.f32 %v1367, %v1330
    %v1374 = vadd.f32 %v1368, %v1331
    %v1375 = vsub.f32 %v599, %v1369
    %v1376 = vsub.f32 %v669, %v1370
    %v1377 = vsub.f32 %v739, %v1371
    %v1378 = vsub.f32 %v809, %v1372
    %v1379 = vsub.f32 %v879, %v1373
    %v1380 = vsub.f32 %v949, %v1374
    %v1381 = vrot.slane %v1375, 7
    %v1382 = vrot.slane %v1376, 7
    %v1383 = vrot.slane %v1377, 7
    %v1384 = vrot.slane %v1378, 7
    %v1385 = vrot.slane %v1379, 7
    %v1386 = vrot.slane %v1380, 7
    %v1387 = vsel %vm952, %v1381, 0.0
    %v1388 = vsel %vm952, %v1382, 0.0
    %v1389 = vsel %vm952, %v1383, 0.0
    %v1390 = vsel %vm952, %v1384, 0.0
    %v1391 = vsel %vm952, %v1385, 0.0
    %v1392 = vsel %vm952, %v1386, 0.0
    %v1393 = vrot.slane %v1375, 1
    %v1394 = vrot.slane %v1376, 1
    %v1395 = vrot.slane %v1377, 1
    %v1396 = vrot.slane %v1378, 1
    %v1397 = vrot.slane %v1379, 1
    %v1398 = vrot.slane %v1380, 1
    %v1399 = vsel %vm965, %v1393, 0.0
    %v1400 = vsel %vm965, %v1394, 0.0
    %v1401 = vsel %vm965, %v1395, 0.0
    %v1402 = vsel %vm965, %v1396, 0.0
    %v1403 = vsel %vm965, %v1397, 0.0
    %v1404 = vsel %vm965, %v1398, 0.0
    %v1405 = vstv %s80
    %1406 = vrot.lane.b32.xlu0 %v1387, 16
    %v1407 = vpop.permute.xlu0 %1406
    %v1408 = vsel %vm981, %v1407, %v1387
    %1409 = vrot.lane.b32.xlu0 %v1388, 16
    %v1410 = vpop.permute.xlu0 %1409
    %v1411 = vsel %vm981, %v1410, %v1388
    %1412 = vrot.lane.b32.xlu0 %v1389, 16
    %v1413 = vpop.permute.xlu0 %1412
    %v1414 = vsel %vm981, %v1413, %v1389
    %1415 = vrot.lane.b32.xlu0 %v1390, 16
    %v1416 = vpop.permute.xlu0 %1415
    %v1417 = vsel %vm981, %v1416, %v1390
    %1418 = vrot.lane.b32.xlu0 %v1391, 16
    %v1419 = vpop.permute.xlu0 %1418
    %v1420 = vsel %vm981, %v1419, %v1391
    %1421 = vrot.lane.b32.xlu0 %v1392, 16
    %v1422 = vpop.permute.xlu0 %1421
    %v1423 = vsel %vm981, %v1422, %v1392
    %1424 = vrot.lane.b32.xlu0 %v1408, 16
    %v1425 = vpop.permute.xlu0 %1424
    %1426 = vrot.lane.b32.xlu0 %v1411, 16
    %v1427 = vpop.permute.xlu0 %1426
    %1428 = vrot.lane.b32.xlu0 %v1414, 16
    %v1429 = vpop.permute.xlu0 %1428
    %1430 = vrot.lane.b32.xlu0 %v1417, 16
    %v1431 = vpop.permute.xlu0 %1430
    %1432 = vrot.lane.b32.xlu0 %v1420, 16
    %v1433 = vpop.permute.xlu0 %1432
    %1434 = vrot.lane.b32.xlu0 %v1423, 16
    %v1435 = vpop.permute.xlu0 %1434
    %v1436 = vsel %vm981, %v1425, %v1387
    %v1437 = vsel %vm981, %v1427, %v1388
    %v1438 = vsel %vm981, %v1429, %v1389
    %v1439 = vsel %vm981, %v1431, %v1390
    %v1440 = vsel %vm981, %v1433, %v1391
    %v1441 = vsel %vm981, %v1435, %v1392
    %1448 = vrot.lane.b32.xlu0 %v1436, 113
    %v1449 = vpop.permute.xlu0 %1448
    %1450 = vrot.lane.b32.xlu0 %v1437, 113
    %v1451 = vpop.permute.xlu0 %1450
    %1452 = vrot.lane.b32.xlu0 %v1438, 113
    %v1453 = vpop.permute.xlu0 %1452
    %1454 = vrot.lane.b32.xlu0 %v1439, 113
    %v1455 = vpop.permute.xlu0 %1454
    %1456 = vrot.lane.b32.xlu0 %v1440, 113
    %v1457 = vpop.permute.xlu0 %1456
    %1458 = vrot.lane.b32.xlu0 %v1441, 113
    %v1459 = vpop.permute.xlu0 %1458
    %v1466 = vsel %vm978, %v1449, 0.0
    %v1467 = vsel %vm978, %v1451, 0.0
    %v1468 = vsel %vm978, %v1453, 0.0
    %v1469 = vsel %vm978, %v1455, 0.0
    %v1470 = vsel %vm978, %v1457, 0.0
    %v1471 = vsel %vm978, %v1459, 0.0
    %v1472 = vstv %s70
    %v1473 = vmul.f32 %v1472, %v1466
    %v1474 = vmul.f32 %v1472, %v1467
    %v1475 = vmul.f32 %v1472, %v1468
    %v1476 = vmul.f32 %v1472, %v1469
    %v1477 = vmul.f32 %v1472, %v1470
    %v1478 = vmul.f32 %v1472, %v1471
    %v1479 = vadd.f32 %v1405, %v1473
    %v1480 = vadd.f32 %v1405, %v1474
    %v1481 = vadd.f32 %v1405, %v1475
    %v1482 = vadd.f32 %v1405, %v1476
    %v1483 = vadd.f32 %v1405, %v1477
    %v1484 = vadd.f32 %v1405, %v1478
    %v1485 = vstv %s71
    %v1486 = vmul.f32 %v1485, %v1387
    %v1487 = vmul.f32 %v1485, %v1388
    %v1488 = vmul.f32 %v1485, %v1389
    %v1489 = vmul.f32 %v1485, %v1390
    %v1490 = vmul.f32 %v1485, %v1391
    %v1491 = vmul.f32 %v1485, %v1392
    %v1492 = vadd.f32 %v1486, 0.0
    %v1493 = vadd.f32 %v1487, 0.0
    %v1494 = vadd.f32 %v1488, 0.0
    %v1495 = vadd.f32 %v1489, 0.0
    %v1496 = vadd.f32 %v1490, 0.0
    %v1497 = vadd.f32 %v1491, 0.0
    %1498 = vrot.lane.b32.xlu0 %v1436, 127
    %v1499 = vpop.permute.xlu0 %1498
    %1500 = vrot.lane.b32.xlu0 %v1437, 127
    %v1501 = vpop.permute.xlu0 %1500
    %1502 = vrot.lane.b32.xlu0 %v1438, 127
    %v1503 = vpop.permute.xlu0 %1502
    %1504 = vrot.lane.b32.xlu0 %v1439, 127
    %v1505 = vpop.permute.xlu0 %1504
    %1506 = vrot.lane.b32.xlu0 %v1440, 127
    %v1507 = vpop.permute.xlu0 %1506
    %1508 = vrot.lane.b32.xlu0 %v1441, 127
    %v1509 = vpop.permute.xlu0 %1508
    %v1516 = vsel %vm979, %v1499, 0.0
    %v1517 = vsel %vm979, %v1501, 0.0
    %v1518 = vsel %vm979, %v1503, 0.0
    %v1519 = vsel %vm979, %v1505, 0.0
    %v1520 = vsel %vm979, %v1507, 0.0
    %v1521 = vsel %vm979, %v1509, 0.0
    %v1522 = vstv %s72
    %v1523 = vmul.f32 %v1522, %v1516
    %v1524 = vmul.f32 %v1522, %v1517
    %v1525 = vmul.f32 %v1522, %v1518
    %v1526 = vmul.f32 %v1522, %v1519
    %v1527 = vmul.f32 %v1522, %v1520
    %v1528 = vmul.f32 %v1522, %v1521
    %v1529 = vadd.f32 %v1479, %v1523
    %v1530 = vadd.f32 %v1480, %v1524
    %v1531 = vadd.f32 %v1481, %v1525
    %v1532 = vadd.f32 %v1482, %v1526
    %v1533 = vadd.f32 %v1483, %v1527
    %v1534 = vadd.f32 %v1484, %v1528
    %1535 = vrot.lane.b32.xlu0 %v1375, 16
    %v1536 = vpop.permute.xlu0 %1535
    %v1537 = vsel %vm981, %v1536, %v1375
    %1538 = vrot.lane.b32.xlu0 %v1376, 16
    %v1539 = vpop.permute.xlu0 %1538
    %v1540 = vsel %vm981, %v1539, %v1376
    %1541 = vrot.lane.b32.xlu0 %v1377, 16
    %v1542 = vpop.permute.xlu0 %1541
    %v1543 = vsel %vm981, %v1542, %v1377
    %1544 = vrot.lane.b32.xlu0 %v1378, 16
    %v1545 = vpop.permute.xlu0 %1544
    %v1546 = vsel %vm981, %v1545, %v1378
    %1547 = vrot.lane.b32.xlu0 %v1379, 16
    %v1548 = vpop.permute.xlu0 %1547
    %v1549 = vsel %vm981, %v1548, %v1379
    %1550 = vrot.lane.b32.xlu0 %v1380, 16
    %v1551 = vpop.permute.xlu0 %1550
    %v1552 = vsel %vm981, %v1551, %v1380
    %1553 = vrot.lane.b32.xlu0 %v1537, 16
    %v1554 = vpop.permute.xlu0 %1553
    %1555 = vrot.lane.b32.xlu0 %v1540, 16
    %v1556 = vpop.permute.xlu0 %1555
    %1557 = vrot.lane.b32.xlu0 %v1543, 16
    %v1558 = vpop.permute.xlu0 %1557
    %1559 = vrot.lane.b32.xlu0 %v1546, 16
    %v1560 = vpop.permute.xlu0 %1559
    %1561 = vrot.lane.b32.xlu0 %v1549, 16
    %v1562 = vpop.permute.xlu0 %1561
    %1563 = vrot.lane.b32.xlu0 %v1552, 16
    %v1564 = vpop.permute.xlu0 %1563
    %v1565 = vsel %vm981, %v1554, %v1375
    %v1566 = vsel %vm981, %v1556, %v1376
    %v1567 = vsel %vm981, %v1558, %v1377
    %v1568 = vsel %vm981, %v1560, %v1378
    %v1569 = vsel %vm981, %v1562, %v1379
    %v1570 = vsel %vm981, %v1564, %v1380
    %1577 = vrot.lane.b32.xlu0 %v1565, 113
    %v1578 = vpop.permute.xlu0 %1577
    %1579 = vrot.lane.b32.xlu0 %v1566, 113
    %v1580 = vpop.permute.xlu0 %1579
    %1581 = vrot.lane.b32.xlu0 %v1567, 113
    %v1582 = vpop.permute.xlu0 %1581
    %1583 = vrot.lane.b32.xlu0 %v1568, 113
    %v1584 = vpop.permute.xlu0 %1583
    %1585 = vrot.lane.b32.xlu0 %v1569, 113
    %v1586 = vpop.permute.xlu0 %1585
    %1587 = vrot.lane.b32.xlu0 %v1570, 113
    %v1588 = vpop.permute.xlu0 %1587
    %v1595 = vsel %vm978, %v1578, 0.0
    %v1596 = vsel %vm978, %v1580, 0.0
    %v1597 = vsel %vm978, %v1582, 0.0
    %v1598 = vsel %vm978, %v1584, 0.0
    %v1599 = vsel %vm978, %v1586, 0.0
    %v1600 = vsel %vm978, %v1588, 0.0
    %v1601 = vstv %s73
    %v1602 = vmul.f32 %v1601, %v1595
    %v1603 = vmul.f32 %v1601, %v1596
    %v1604 = vmul.f32 %v1601, %v1597
    %v1605 = vmul.f32 %v1601, %v1598
    %v1606 = vmul.f32 %v1601, %v1599
    %v1607 = vmul.f32 %v1601, %v1600
    %v1608 = vadd.f32 %v1492, %v1602
    %v1609 = vadd.f32 %v1493, %v1603
    %v1610 = vadd.f32 %v1494, %v1604
    %v1611 = vadd.f32 %v1495, %v1605
    %v1612 = vadd.f32 %v1496, %v1606
    %v1613 = vadd.f32 %v1497, %v1607
    %v1614 = vstv %s74
    %v1615 = vmul.f32 %v1614, %v1375
    %v1616 = vmul.f32 %v1614, %v1376
    %v1617 = vmul.f32 %v1614, %v1377
    %v1618 = vmul.f32 %v1614, %v1378
    %v1619 = vmul.f32 %v1614, %v1379
    %v1620 = vmul.f32 %v1614, %v1380
    %v1621 = vadd.f32 %v1529, %v1615
    %v1622 = vadd.f32 %v1530, %v1616
    %v1623 = vadd.f32 %v1531, %v1617
    %v1624 = vadd.f32 %v1532, %v1618
    %v1625 = vadd.f32 %v1533, %v1619
    %v1626 = vadd.f32 %v1534, %v1620
    %1627 = vrot.lane.b32.xlu0 %v1565, 127
    %v1628 = vpop.permute.xlu0 %1627
    %1629 = vrot.lane.b32.xlu0 %v1566, 127
    %v1630 = vpop.permute.xlu0 %1629
    %1631 = vrot.lane.b32.xlu0 %v1567, 127
    %v1632 = vpop.permute.xlu0 %1631
    %1633 = vrot.lane.b32.xlu0 %v1568, 127
    %v1634 = vpop.permute.xlu0 %1633
    %1635 = vrot.lane.b32.xlu0 %v1569, 127
    %v1636 = vpop.permute.xlu0 %1635
    %1637 = vrot.lane.b32.xlu0 %v1570, 127
    %v1638 = vpop.permute.xlu0 %1637
    %v1645 = vsel %vm979, %v1628, 0.0
    %v1646 = vsel %vm979, %v1630, 0.0
    %v1647 = vsel %vm979, %v1632, 0.0
    %v1648 = vsel %vm979, %v1634, 0.0
    %v1649 = vsel %vm979, %v1636, 0.0
    %v1650 = vsel %vm979, %v1638, 0.0
    %v1651 = vstv %s75
    %v1652 = vmul.f32 %v1651, %v1645
    %v1653 = vmul.f32 %v1651, %v1646
    %v1654 = vmul.f32 %v1651, %v1647
    %v1655 = vmul.f32 %v1651, %v1648
    %v1656 = vmul.f32 %v1651, %v1649
    %v1657 = vmul.f32 %v1651, %v1650
    %v1658 = vadd.f32 %v1608, %v1652
    %v1659 = vadd.f32 %v1609, %v1653
    %v1660 = vadd.f32 %v1610, %v1654
    %v1661 = vadd.f32 %v1611, %v1655
    %v1662 = vadd.f32 %v1612, %v1656
    %v1663 = vadd.f32 %v1613, %v1657
    %1664 = vrot.lane.b32.xlu0 %v1399, 16
    %v1665 = vpop.permute.xlu0 %1664
    %v1666 = vsel %vm981, %v1665, %v1399
    %1667 = vrot.lane.b32.xlu0 %v1400, 16
    %v1668 = vpop.permute.xlu0 %1667
    %v1669 = vsel %vm981, %v1668, %v1400
    %1670 = vrot.lane.b32.xlu0 %v1401, 16
    %v1671 = vpop.permute.xlu0 %1670
    %v1672 = vsel %vm981, %v1671, %v1401
    %1673 = vrot.lane.b32.xlu0 %v1402, 16
    %v1674 = vpop.permute.xlu0 %1673
    %v1675 = vsel %vm981, %v1674, %v1402
    %1676 = vrot.lane.b32.xlu0 %v1403, 16
    %v1677 = vpop.permute.xlu0 %1676
    %v1678 = vsel %vm981, %v1677, %v1403
    %1679 = vrot.lane.b32.xlu0 %v1404, 16
    %v1680 = vpop.permute.xlu0 %1679
    %v1681 = vsel %vm981, %v1680, %v1404
    %1682 = vrot.lane.b32.xlu0 %v1666, 16
    %v1683 = vpop.permute.xlu0 %1682
    %1684 = vrot.lane.b32.xlu0 %v1669, 16
    %v1685 = vpop.permute.xlu0 %1684
    %1686 = vrot.lane.b32.xlu0 %v1672, 16
    %v1687 = vpop.permute.xlu0 %1686
    %1688 = vrot.lane.b32.xlu0 %v1675, 16
    %v1689 = vpop.permute.xlu0 %1688
    %1690 = vrot.lane.b32.xlu0 %v1678, 16
    %v1691 = vpop.permute.xlu0 %1690
    %1692 = vrot.lane.b32.xlu0 %v1681, 16
    %v1693 = vpop.permute.xlu0 %1692
    %v1694 = vsel %vm981, %v1683, %v1399
    %v1695 = vsel %vm981, %v1685, %v1400
    %v1696 = vsel %vm981, %v1687, %v1401
    %v1697 = vsel %vm981, %v1689, %v1402
    %v1698 = vsel %vm981, %v1691, %v1403
    %v1699 = vsel %vm981, %v1693, %v1404
    %1706 = vrot.lane.b32.xlu0 %v1694, 113
    %v1707 = vpop.permute.xlu0 %1706
    %1708 = vrot.lane.b32.xlu0 %v1695, 113
    %v1709 = vpop.permute.xlu0 %1708
    %1710 = vrot.lane.b32.xlu0 %v1696, 113
    %v1711 = vpop.permute.xlu0 %1710
    %1712 = vrot.lane.b32.xlu0 %v1697, 113
    %v1713 = vpop.permute.xlu0 %1712
    %1714 = vrot.lane.b32.xlu0 %v1698, 113
    %v1715 = vpop.permute.xlu0 %1714
    %1716 = vrot.lane.b32.xlu0 %v1699, 113
    %v1717 = vpop.permute.xlu0 %1716
    %v1724 = vsel %vm978, %v1707, 0.0
    %v1725 = vsel %vm978, %v1709, 0.0
    %v1726 = vsel %vm978, %v1711, 0.0
    %v1727 = vsel %vm978, %v1713, 0.0
    %v1728 = vsel %vm978, %v1715, 0.0
    %v1729 = vsel %vm978, %v1717, 0.0
    %v1730 = vstv %s76
    %v1731 = vmul.f32 %v1730, %v1724
    %v1732 = vmul.f32 %v1730, %v1725
    %v1733 = vmul.f32 %v1730, %v1726
    %v1734 = vmul.f32 %v1730, %v1727
    %v1735 = vmul.f32 %v1730, %v1728
    %v1736 = vmul.f32 %v1730, %v1729
    %v1737 = vadd.f32 %v1621, %v1731
    %v1738 = vadd.f32 %v1622, %v1732
    %v1739 = vadd.f32 %v1623, %v1733
    %v1740 = vadd.f32 %v1624, %v1734
    %v1741 = vadd.f32 %v1625, %v1735
    %v1742 = vadd.f32 %v1626, %v1736
    %v1743 = vstv %s77
    %v1744 = vmul.f32 %v1743, %v1399
    %v1745 = vmul.f32 %v1743, %v1400
    %v1746 = vmul.f32 %v1743, %v1401
    %v1747 = vmul.f32 %v1743, %v1402
    %v1748 = vmul.f32 %v1743, %v1403
    %v1749 = vmul.f32 %v1743, %v1404
    %v1750 = vadd.f32 %v1658, %v1744
    %v1751 = vadd.f32 %v1659, %v1745
    %v1752 = vadd.f32 %v1660, %v1746
    %v1753 = vadd.f32 %v1661, %v1747
    %v1754 = vadd.f32 %v1662, %v1748
    %v1755 = vadd.f32 %v1663, %v1749
    %1756 = vrot.lane.b32.xlu0 %v1694, 127
    %v1757 = vpop.permute.xlu0 %1756
    %1758 = vrot.lane.b32.xlu0 %v1695, 127
    %v1759 = vpop.permute.xlu0 %1758
    %1760 = vrot.lane.b32.xlu0 %v1696, 127
    %v1761 = vpop.permute.xlu0 %1760
    %1762 = vrot.lane.b32.xlu0 %v1697, 127
    %v1763 = vpop.permute.xlu0 %1762
    %1764 = vrot.lane.b32.xlu0 %v1698, 127
    %v1765 = vpop.permute.xlu0 %1764
    %1766 = vrot.lane.b32.xlu0 %v1699, 127
    %v1767 = vpop.permute.xlu0 %1766
    %v1774 = vsel %vm979, %v1757, 0.0
    %v1775 = vsel %vm979, %v1759, 0.0
    %v1776 = vsel %vm979, %v1761, 0.0
    %v1777 = vsel %vm979, %v1763, 0.0
    %v1778 = vsel %vm979, %v1765, 0.0
    %v1779 = vsel %vm979, %v1767, 0.0
    %v1780 = vstv %s78
    %v1781 = vmul.f32 %v1780, %v1774
    %v1782 = vmul.f32 %v1780, %v1775
    %v1783 = vmul.f32 %v1780, %v1776
    %v1784 = vmul.f32 %v1780, %v1777
    %v1785 = vmul.f32 %v1780, %v1778
    %v1786 = vmul.f32 %v1780, %v1779
    %v1787 = vadd.f32 %v1737, %v1781
    %v1788 = vadd.f32 %v1738, %v1782
    %v1789 = vadd.f32 %v1739, %v1783
    %v1790 = vadd.f32 %v1740, %v1784
    %v1791 = vadd.f32 %v1741, %v1785
    %v1792 = vadd.f32 %v1742, %v1786
    %v1793 = vadd.f32 %v1787, %v1750
    %v1794 = vadd.f32 %v1788, %v1751
    %v1795 = vadd.f32 %v1789, %v1752
    %v1796 = vadd.f32 %v1790, %v1753
    %v1797 = vadd.f32 %v1791, %v1754
    %v1798 = vadd.f32 %v1792, %v1755
    %v1799 = vadd.f32 %v176, %v1793
    %v1800 = vadd.f32 %v246, %v1794
    %v1801 = vadd.f32 %v316, %v1795
    %v1802 = vadd.f32 %v386, %v1796
    %v1803 = vadd.f32 %v456, %v1797
    %v1804 = vadd.f32 %v526, %v1798
    %v1805 = vadd.s32 %v94, 8
    %v1806 = vmul.u32 %v96, 2
    %vm1807 = vcmp.eq.s32.totalorder %v94, %v1806
    %vm1808 = vcmp.eq.s32.totalorder %v1805, %v1806
    %v1809 = vsel %vm1807, 1, 0
    %v1810 = vsel %vm1808, 1, 0
    %v1811 = vcvt.s32.f32 %v1809
    %v1812 = vcvt.s32.f32 %v1810
    %v1813 = vadd.s32 %v1806, 1
    %vm1814 = vcmp.eq.s32.totalorder %v94, %v1813
    %vm1815 = vcmp.eq.s32.totalorder %v1805, %v1813
    %v1816 = vsel %vm1814, 1, 0
    %v1817 = vsel %vm1815, 1, 0
    %v1818 = vcvt.s32.f32 %v1816
    %v1819 = vcvt.s32.f32 %v1817
    %v1821 = vsel %vm105, %v1799, 0
    %1823 = vmatprep.subr.mxu0 0.0
    %1824 = vmatpush1.msra.mxu0 %v1811
    %1825 = vmatprep.subr.mxu0 0.0
    %1826 = vmatpush1.msra.mxu0 %v1812
    %1827 = vmatprep.subr.mxu0 0.0
    %1828 = vmatpush1.msra.mxu0 0.0
    %1829 = vmatprep.subr.mxu0 0.0
    %1830 = vmatpush1.msra.mxu0 0.0
    %1831 = vmatprep.subr.mxu0 0.0
    %1832 = vmatpush1.msra.mxu0 0.0
    %1833 = vmatprep.subr.mxu0 0.0
    %1834 = vmatpush1.msra.mxu0 0.0
    %1835 = vmatprep.subr.mxu0 0.0
    %1836 = vmatpush1.msra.mxu0 0.0
    %1837 = vmatprep.subr.mxu0 0.0
    %1838 = vmatpush1.msra.mxu0 0.0
    %1839 = vmatprep.subr.mxu0 0.0
    %1840 = vmatpush1.msra.mxu0 0.0
    %1841 = vmatprep.subr.mxu0 0.0
    %1842 = vmatpush1.msra.mxu0 0.0
    %1843 = vmatprep.subr.mxu0 0.0
    %1844 = vmatpush1.msra.mxu0 0.0
    %1845 = vmatprep.subr.mxu0 0.0
    %1846 = vmatpush1.msra.mxu0 0.0
    %1847 = vmatprep.subr.mxu0 0.0
    %1848 = vmatpush1.msra.mxu0 0.0
    %1849 = vmatprep.subr.mxu0 0.0
    %1850 = vmatpush1.msra.mxu0 0.0
    %1851 = vmatprep.subr.mxu0 0.0
    %1852 = vmatpush1.msra.mxu0 0.0
    %1853 = vmatprep.subr.mxu0 0.0
    %1854 = vmatpush1.msra.mxu0 0.0
    %1855 = vmatprep.subr.mxu0 0.0
    %1856 = vmatpush1.msra.mxu0 0.0
    %1857 = vmatprep.subr.mxu0 0.0
    %1858 = vmatpush1.msra.mxu0 0.0
    %1859 = vmatprep.subr.mxu0 0.0
    %1860 = vmatpush1.msra.mxu0 0.0
    %1861 = vmatprep.subr.mxu0 0.0
    %1862 = vmatpush1.msra.mxu0 0.0
    %1863 = vmatprep.subr.mxu0 0.0
    %1864 = vmatpush1.msra.mxu0 0.0
    %1865 = vmatprep.subr.mxu0 0.0
    %1866 = vmatpush1.msra.mxu0 0.0
    %1867 = vmatprep.subr.mxu0 0.0
    %1868 = vmatpush1.msra.mxu0 0.0
    %1869 = vmatprep.subr.mxu0 0.0
    %1870 = vmatpush1.msra.mxu0 0.0
    %1871 = vmatprep.subr.mxu0 0.0
    %1872 = vmatpush1.msra.mxu0 0.0
    %1873 = vmatprep.subr.mxu0 0.0
    %1874 = vmatpush1.msra.mxu0 0.0
    %1875 = vmatprep.subr.mxu0 0.0
    %1876 = vmatpush1.msra.mxu0 0.0
    %1877 = vmatprep.subr.mxu0 0.0
    %1878 = vmatpush1.msra.mxu0 0.0
    %1879 = vmatprep.subr.mxu0 0.0
    %1880 = vmatpush1.msra.mxu0 0.0
    %1881 = vmatprep.subr.mxu0 0.0
    %1882 = vmatpush1.msra.mxu0 0.0
    %1883 = vmatprep.subr.mxu0 0.0
    %1884 = vmatpush1.msra.mxu0 0.0
    %1885 = vmatprep.subr.mxu0 0.0
    %1886 = vmatpush1.msra.mxu0 0.0
    %1887 = vmatprep.mubr.f32.mxu0 0.0
    %1888 = vmatmul.mubr.f32.gmra.mrb[0].mxu0 %v1821
    %v1889 = vpop.f32.mrb[0].mxu0
    %v1890 = vadd.f32 0.0, %v1889
    %v1891 = vpop.f32.mrb[0].mxu0
    %1892 = vdwg.mxu0
    %v1894 = vsel %vm105, %v1800, 0
    %1896 = vmatprep.subr.mxu0 0.0
    %1897 = vmatpush1.msra.mxu0 %v1811
    %1898 = vmatprep.subr.mxu0 0.0
    %1899 = vmatpush1.msra.mxu0 %v1812
    %1900 = vmatprep.subr.mxu0 0.0
    %1901 = vmatpush1.msra.mxu0 0.0
    %1902 = vmatprep.subr.mxu0 0.0
    %1903 = vmatpush1.msra.mxu0 0.0
    %1904 = vmatprep.subr.mxu0 0.0
    %1905 = vmatpush1.msra.mxu0 0.0
    %1906 = vmatprep.subr.mxu0 0.0
    %1907 = vmatpush1.msra.mxu0 0.0
    %1908 = vmatprep.subr.mxu0 0.0
    %1909 = vmatpush1.msra.mxu0 0.0
    %1910 = vmatprep.subr.mxu0 0.0
    %1911 = vmatpush1.msra.mxu0 0.0
    %1912 = vmatprep.subr.mxu0 0.0
    %1913 = vmatpush1.msra.mxu0 0.0
    %1914 = vmatprep.subr.mxu0 0.0
    %1915 = vmatpush1.msra.mxu0 0.0
    %1916 = vmatprep.subr.mxu0 0.0
    %1917 = vmatpush1.msra.mxu0 0.0
    %1918 = vmatprep.subr.mxu0 0.0
    %1919 = vmatpush1.msra.mxu0 0.0
    %1920 = vmatprep.subr.mxu0 0.0
    %1921 = vmatpush1.msra.mxu0 0.0
    %1922 = vmatprep.subr.mxu0 0.0
    %1923 = vmatpush1.msra.mxu0 0.0
    %1924 = vmatprep.subr.mxu0 0.0
    %1925 = vmatpush1.msra.mxu0 0.0
    %1926 = vmatprep.subr.mxu0 0.0
    %1927 = vmatpush1.msra.mxu0 0.0
    %1928 = vmatprep.subr.mxu0 0.0
    %1929 = vmatpush1.msra.mxu0 0.0
    %1930 = vmatprep.subr.mxu0 0.0
    %1931 = vmatpush1.msra.mxu0 0.0
    %1932 = vmatprep.subr.mxu0 0.0
    %1933 = vmatpush1.msra.mxu0 0.0
    %1934 = vmatprep.subr.mxu0 0.0
    %1935 = vmatpush1.msra.mxu0 0.0
    %1936 = vmatprep.subr.mxu0 0.0
    %1937 = vmatpush1.msra.mxu0 0.0
    %1938 = vmatprep.subr.mxu0 0.0
    %1939 = vmatpush1.msra.mxu0 0.0
    %1940 = vmatprep.subr.mxu0 0.0
    %1941 = vmatpush1.msra.mxu0 0.0
    %1942 = vmatprep.subr.mxu0 0.0
    %1943 = vmatpush1.msra.mxu0 0.0
    %1944 = vmatprep.subr.mxu0 0.0
    %1945 = vmatpush1.msra.mxu0 0.0
    %1946 = vmatprep.subr.mxu0 0.0
    %1947 = vmatpush1.msra.mxu0 0.0
    %1948 = vmatprep.subr.mxu0 0.0
    %1949 = vmatpush1.msra.mxu0 0.0
    %1950 = vmatprep.subr.mxu0 0.0
    %1951 = vmatpush1.msra.mxu0 0.0
    %1952 = vmatprep.subr.mxu0 0.0
    %1953 = vmatpush1.msra.mxu0 0.0
    %1954 = vmatprep.subr.mxu0 0.0
    %1955 = vmatpush1.msra.mxu0 0.0
    %1956 = vmatprep.subr.mxu0 0.0
    %1957 = vmatpush1.msra.mxu0 0.0
    %1958 = vmatprep.subr.mxu0 0.0
    %1959 = vmatpush1.msra.mxu0 0.0
    %1960 = vmatprep.mubr.f32.mxu0 0.0
    %1961 = vmatmul.mubr.f32.gmra.mrb[0].mxu0 %v1894
    %v1962 = vpop.f32.mrb[0].mxu0
    %v1963 = vadd.f32 0.0, %v1962
    %v1964 = vpop.f32.mrb[0].mxu0
    %1965 = vdwg.mxu0
    %v1967 = vsel %vm105, %v1801, 0
    %1969 = vmatprep.subr.mxu0 0.0
    %1970 = vmatpush1.msra.mxu0 %v1811
    %1971 = vmatprep.subr.mxu0 0.0
    %1972 = vmatpush1.msra.mxu0 %v1812
    %1973 = vmatprep.subr.mxu0 0.0
    %1974 = vmatpush1.msra.mxu0 0.0
    %1975 = vmatprep.subr.mxu0 0.0
    %1976 = vmatpush1.msra.mxu0 0.0
    %1977 = vmatprep.subr.mxu0 0.0
    %1978 = vmatpush1.msra.mxu0 0.0
    %1979 = vmatprep.subr.mxu0 0.0
    %1980 = vmatpush1.msra.mxu0 0.0
    %1981 = vmatprep.subr.mxu0 0.0
    %1982 = vmatpush1.msra.mxu0 0.0
    %1983 = vmatprep.subr.mxu0 0.0
    %1984 = vmatpush1.msra.mxu0 0.0
    %1985 = vmatprep.subr.mxu0 0.0
    %1986 = vmatpush1.msra.mxu0 0.0
    %1987 = vmatprep.subr.mxu0 0.0
    %1988 = vmatpush1.msra.mxu0 0.0
    %1989 = vmatprep.subr.mxu0 0.0
    %1990 = vmatpush1.msra.mxu0 0.0
    %1991 = vmatprep.subr.mxu0 0.0
    %1992 = vmatpush1.msra.mxu0 0.0
    %1993 = vmatprep.subr.mxu0 0.0
    %1994 = vmatpush1.msra.mxu0 0.0
    %1995 = vmatprep.subr.mxu0 0.0
    %1996 = vmatpush1.msra.mxu0 0.0
    %1997 = vmatprep.subr.mxu0 0.0
    %1998 = vmatpush1.msra.mxu0 0.0
    %1999 = vmatprep.subr.mxu0 0.0
    %2000 = vmatpush1.msra.mxu0 0.0
    %2001 = vmatprep.subr.mxu0 0.0
    %2002 = vmatpush1.msra.mxu0 0.0
    %2003 = vmatprep.subr.mxu0 0.0
    %2004 = vmatpush1.msra.mxu0 0.0
    %2005 = vmatprep.subr.mxu0 0.0
    %2006 = vmatpush1.msra.mxu0 0.0
    %2007 = vmatprep.subr.mxu0 0.0
    %2008 = vmatpush1.msra.mxu0 0.0
    %2009 = vmatprep.subr.mxu0 0.0
    %2010 = vmatpush1.msra.mxu0 0.0
    %2011 = vmatprep.subr.mxu0 0.0
    %2012 = vmatpush1.msra.mxu0 0.0
    %2013 = vmatprep.subr.mxu0 0.0
    %2014 = vmatpush1.msra.mxu0 0.0
    %2015 = vmatprep.subr.mxu0 0.0
    %2016 = vmatpush1.msra.mxu0 0.0
    %2017 = vmatprep.subr.mxu0 0.0
    %2018 = vmatpush1.msra.mxu0 0.0
    %2019 = vmatprep.subr.mxu0 0.0
    %2020 = vmatpush1.msra.mxu0 0.0
    %2021 = vmatprep.subr.mxu0 0.0
    %2022 = vmatpush1.msra.mxu0 0.0
    %2023 = vmatprep.subr.mxu0 0.0
    %2024 = vmatpush1.msra.mxu0 0.0
    %2025 = vmatprep.subr.mxu0 0.0
    %2026 = vmatpush1.msra.mxu0 0.0
    %2027 = vmatprep.subr.mxu0 0.0
    %2028 = vmatpush1.msra.mxu0 0.0
    %2029 = vmatprep.subr.mxu0 0.0
    %2030 = vmatpush1.msra.mxu0 0.0
    %2031 = vmatprep.subr.mxu0 0.0
    %2032 = vmatpush1.msra.mxu0 0.0
    %2033 = vmatprep.mubr.f32.mxu0 0.0
    %2034 = vmatmul.mubr.f32.gmra.mrb[0].mxu0 %v1967
    %v2035 = vpop.f32.mrb[0].mxu0
    %v2036 = vadd.f32 0.0, %v2035
    %v2037 = vpop.f32.mrb[0].mxu0
    %2038 = vdwg.mxu0
    %v2040 = vsel %vm105, %v1802, 0
    %2042 = vmatprep.subr.mxu0 0.0
    %2043 = vmatpush1.msra.mxu0 %v1811
    %2044 = vmatprep.subr.mxu0 0.0
    %2045 = vmatpush1.msra.mxu0 %v1812
    %2046 = vmatprep.subr.mxu0 0.0
    %2047 = vmatpush1.msra.mxu0 0.0
    %2048 = vmatprep.subr.mxu0 0.0
    %2049 = vmatpush1.msra.mxu0 0.0
    %2050 = vmatprep.subr.mxu0 0.0
    %2051 = vmatpush1.msra.mxu0 0.0
    %2052 = vmatprep.subr.mxu0 0.0
    %2053 = vmatpush1.msra.mxu0 0.0
    %2054 = vmatprep.subr.mxu0 0.0
    %2055 = vmatpush1.msra.mxu0 0.0
    %2056 = vmatprep.subr.mxu0 0.0
    %2057 = vmatpush1.msra.mxu0 0.0
    %2058 = vmatprep.subr.mxu0 0.0
    %2059 = vmatpush1.msra.mxu0 0.0
    %2060 = vmatprep.subr.mxu0 0.0
    %2061 = vmatpush1.msra.mxu0 0.0
    %2062 = vmatprep.subr.mxu0 0.0
    %2063 = vmatpush1.msra.mxu0 0.0
    %2064 = vmatprep.subr.mxu0 0.0
    %2065 = vmatpush1.msra.mxu0 0.0
    %2066 = vmatprep.subr.mxu0 0.0
    %2067 = vmatpush1.msra.mxu0 0.0
    %2068 = vmatprep.subr.mxu0 0.0
    %2069 = vmatpush1.msra.mxu0 0.0
    %2070 = vmatprep.subr.mxu0 0.0
    %2071 = vmatpush1.msra.mxu0 0.0
    %2072 = vmatprep.subr.mxu0 0.0
    %2073 = vmatpush1.msra.mxu0 0.0
    %2074 = vmatprep.subr.mxu0 0.0
    %2075 = vmatpush1.msra.mxu0 0.0
    %2076 = vmatprep.subr.mxu0 0.0
    %2077 = vmatpush1.msra.mxu0 0.0
    %2078 = vmatprep.subr.mxu0 0.0
    %2079 = vmatpush1.msra.mxu0 0.0
    %2080 = vmatprep.subr.mxu0 0.0
    %2081 = vmatpush1.msra.mxu0 0.0
    %2082 = vmatprep.subr.mxu0 0.0
    %2083 = vmatpush1.msra.mxu0 0.0
    %2084 = vmatprep.subr.mxu0 0.0
    %2085 = vmatpush1.msra.mxu0 0.0
    %2086 = vmatprep.subr.mxu0 0.0
    %2087 = vmatpush1.msra.mxu0 0.0
    %2088 = vmatprep.subr.mxu0 0.0
    %2089 = vmatpush1.msra.mxu0 0.0
    %2090 = vmatprep.subr.mxu0 0.0
    %2091 = vmatpush1.msra.mxu0 0.0
    %2092 = vmatprep.subr.mxu0 0.0
    %2093 = vmatpush1.msra.mxu0 0.0
    %2094 = vmatprep.subr.mxu0 0.0
    %2095 = vmatpush1.msra.mxu0 0.0
    %2096 = vmatprep.subr.mxu0 0.0
    %2097 = vmatpush1.msra.mxu0 0.0
    %2098 = vmatprep.subr.mxu0 0.0
    %2099 = vmatpush1.msra.mxu0 0.0
    %2100 = vmatprep.subr.mxu0 0.0
    %2101 = vmatpush1.msra.mxu0 0.0
    %2102 = vmatprep.subr.mxu0 0.0
    %2103 = vmatpush1.msra.mxu0 0.0
    %2104 = vmatprep.subr.mxu0 0.0
    %2105 = vmatpush1.msra.mxu0 0.0
    %2106 = vmatprep.mubr.f32.mxu0 0.0
    %2107 = vmatmul.mubr.f32.gmra.mrb[0].mxu0 %v2040
    %v2108 = vpop.f32.mrb[0].mxu0
    %v2109 = vadd.f32 0.0, %v2108
    %v2110 = vpop.f32.mrb[0].mxu0
    %2111 = vdwg.mxu0
    %v2113 = vsel %vm105, %v1803, 0
    %2115 = vmatprep.subr.mxu0 0.0
    %2116 = vmatpush1.msra.mxu0 %v1811
    %2117 = vmatprep.subr.mxu0 0.0
    %2118 = vmatpush1.msra.mxu0 %v1812
    %2119 = vmatprep.subr.mxu0 0.0
    %2120 = vmatpush1.msra.mxu0 0.0
    %2121 = vmatprep.subr.mxu0 0.0
    %2122 = vmatpush1.msra.mxu0 0.0
    %2123 = vmatprep.subr.mxu0 0.0
    %2124 = vmatpush1.msra.mxu0 0.0
    %2125 = vmatprep.subr.mxu0 0.0
    %2126 = vmatpush1.msra.mxu0 0.0
    %2127 = vmatprep.subr.mxu0 0.0
    %2128 = vmatpush1.msra.mxu0 0.0
    %2129 = vmatprep.subr.mxu0 0.0
    %2130 = vmatpush1.msra.mxu0 0.0
    %2131 = vmatprep.subr.mxu0 0.0
    %2132 = vmatpush1.msra.mxu0 0.0
    %2133 = vmatprep.subr.mxu0 0.0
    %2134 = vmatpush1.msra.mxu0 0.0
    %2135 = vmatprep.subr.mxu0 0.0
    %2136 = vmatpush1.msra.mxu0 0.0
    %2137 = vmatprep.subr.mxu0 0.0
    %2138 = vmatpush1.msra.mxu0 0.0
    %2139 = vmatprep.subr.mxu0 0.0
    %2140 = vmatpush1.msra.mxu0 0.0
    %2141 = vmatprep.subr.mxu0 0.0
    %2142 = vmatpush1.msra.mxu0 0.0
    %2143 = vmatprep.subr.mxu0 0.0
    %2144 = vmatpush1.msra.mxu0 0.0
    %2145 = vmatprep.subr.mxu0 0.0
    %2146 = vmatpush1.msra.mxu0 0.0
    %2147 = vmatprep.subr.mxu0 0.0
    %2148 = vmatpush1.msra.mxu0 0.0
    %2149 = vmatprep.subr.mxu0 0.0
    %2150 = vmatpush1.msra.mxu0 0.0
    %2151 = vmatprep.subr.mxu0 0.0
    %2152 = vmatpush1.msra.mxu0 0.0
    %2153 = vmatprep.subr.mxu0 0.0
    %2154 = vmatpush1.msra.mxu0 0.0
    %2155 = vmatprep.subr.mxu0 0.0
    %2156 = vmatpush1.msra.mxu0 0.0
    %2157 = vmatprep.subr.mxu0 0.0
    %2158 = vmatpush1.msra.mxu0 0.0
    %2159 = vmatprep.subr.mxu0 0.0
    %2160 = vmatpush1.msra.mxu0 0.0
    %2161 = vmatprep.subr.mxu0 0.0
    %2162 = vmatpush1.msra.mxu0 0.0
    %2163 = vmatprep.subr.mxu0 0.0
    %2164 = vmatpush1.msra.mxu0 0.0
    %2165 = vmatprep.subr.mxu0 0.0
    %2166 = vmatpush1.msra.mxu0 0.0
    %2167 = vmatprep.subr.mxu0 0.0
    %2168 = vmatpush1.msra.mxu0 0.0
    %2169 = vmatprep.subr.mxu0 0.0
    %2170 = vmatpush1.msra.mxu0 0.0
    %2171 = vmatprep.subr.mxu0 0.0
    %2172 = vmatpush1.msra.mxu0 0.0
    %2173 = vmatprep.subr.mxu0 0.0
    %2174 = vmatpush1.msra.mxu0 0.0
    %2175 = vmatprep.subr.mxu0 0.0
    %2176 = vmatpush1.msra.mxu0 0.0
    %2177 = vmatprep.subr.mxu0 0.0
    %2178 = vmatpush1.msra.mxu0 0.0
    %2179 = vmatprep.mubr.f32.mxu0 0.0
    %2180 = vmatmul.mubr.f32.gmra.mrb[0].mxu0 %v2113
    %v2181 = vpop.f32.mrb[0].mxu0
    %v2182 = vadd.f32 0.0, %v2181
    %v2183 = vpop.f32.mrb[0].mxu0
    %2184 = vdwg.mxu0
    %v2186 = vsel %vm105, %v1804, 0
    %2188 = vmatprep.subr.mxu0 0.0
    %2189 = vmatpush1.msra.mxu0 %v1811
    %2190 = vmatprep.subr.mxu0 0.0
    %2191 = vmatpush1.msra.mxu0 %v1812
    %2192 = vmatprep.subr.mxu0 0.0
    %2193 = vmatpush1.msra.mxu0 0.0
    %2194 = vmatprep.subr.mxu0 0.0
    %2195 = vmatpush1.msra.mxu0 0.0
    %2196 = vmatprep.subr.mxu0 0.0
    %2197 = vmatpush1.msra.mxu0 0.0
    %2198 = vmatprep.subr.mxu0 0.0
    %2199 = vmatpush1.msra.mxu0 0.0
    %2200 = vmatprep.subr.mxu0 0.0
    %2201 = vmatpush1.msra.mxu0 0.0
    %2202 = vmatprep.subr.mxu0 0.0
    %2203 = vmatpush1.msra.mxu0 0.0
    %2204 = vmatprep.subr.mxu0 0.0
    %2205 = vmatpush1.msra.mxu0 0.0
    %2206 = vmatprep.subr.mxu0 0.0
    %2207 = vmatpush1.msra.mxu0 0.0
    %2208 = vmatprep.subr.mxu0 0.0
    %2209 = vmatpush1.msra.mxu0 0.0
    %2210 = vmatprep.subr.mxu0 0.0
    %2211 = vmatpush1.msra.mxu0 0.0
    %2212 = vmatprep.subr.mxu0 0.0
    %2213 = vmatpush1.msra.mxu0 0.0
    %2214 = vmatprep.subr.mxu0 0.0
    %2215 = vmatpush1.msra.mxu0 0.0
    %2216 = vmatprep.subr.mxu0 0.0
    %2217 = vmatpush1.msra.mxu0 0.0
    %2218 = vmatprep.subr.mxu0 0.0
    %2219 = vmatpush1.msra.mxu0 0.0
    %2220 = vmatprep.subr.mxu0 0.0
    %2221 = vmatpush1.msra.mxu0 0.0
    %2222 = vmatprep.subr.mxu0 0.0
    %2223 = vmatpush1.msra.mxu0 0.0
    %2224 = vmatprep.subr.mxu0 0.0
    %2225 = vmatpush1.msra.mxu0 0.0
    %2226 = vmatprep.subr.mxu0 0.0
    %2227 = vmatpush1.msra.mxu0 0.0
    %2228 = vmatprep.subr.mxu0 0.0
    %2229 = vmatpush1.msra.mxu0 0.0
    %2230 = vmatprep.subr.mxu0 0.0
    %2231 = vmatpush1.msra.mxu0 0.0
    %2232 = vmatprep.subr.mxu0 0.0
    %2233 = vmatpush1.msra.mxu0 0.0
    %2234 = vmatprep.subr.mxu0 0.0
    %2235 = vmatpush1.msra.mxu0 0.0
    %2236 = vmatprep.subr.mxu0 0.0
    %2237 = vmatpush1.msra.mxu0 0.0
    %2238 = vmatprep.subr.mxu0 0.0
    %2239 = vmatpush1.msra.mxu0 0.0
    %2240 = vmatprep.subr.mxu0 0.0
    %2241 = vmatpush1.msra.mxu0 0.0
    %2242 = vmatprep.subr.mxu0 0.0
    %2243 = vmatpush1.msra.mxu0 0.0
    %2244 = vmatprep.subr.mxu0 0.0
    %2245 = vmatpush1.msra.mxu0 0.0
    %2246 = vmatprep.subr.mxu0 0.0
    %2247 = vmatpush1.msra.mxu0 0.0
    %2248 = vmatprep.subr.mxu0 0.0
    %2249 = vmatpush1.msra.mxu0 0.0
    %2250 = vmatprep.subr.mxu0 0.0
    %2251 = vmatpush1.msra.mxu0 0.0
    %2252 = vmatprep.mubr.f32.mxu0 0.0
    %2253 = vmatmul.mubr.f32.gmra.mrb[0].mxu0 %v2186
    %v2254 = vpop.f32.mrb[0].mxu0
    %v2255 = vadd.f32 0.0, %v2254
    %v2256 = vpop.f32.mrb[0].mxu0
    %2257 = vdwg.mxu0
    %2258 = vmatprep.subr.mxu0 0.0
    %2259 = vmatpush1.msra.mxu0 %v1818
    %2260 = vmatprep.subr.mxu0 0.0
    %2261 = vmatpush1.msra.mxu0 %v1819
    %2262 = vmatprep.subr.mxu0 0.0
    %2263 = vmatpush1.msra.mxu0 0.0
    %2264 = vmatprep.subr.mxu0 0.0
    %2265 = vmatpush1.msra.mxu0 0.0
    %2266 = vmatprep.subr.mxu0 0.0
    %2267 = vmatpush1.msra.mxu0 0.0
    %2268 = vmatprep.subr.mxu0 0.0
    %2269 = vmatpush1.msra.mxu0 0.0
    %2270 = vmatprep.subr.mxu0 0.0
    %2271 = vmatpush1.msra.mxu0 0.0
    %2272 = vmatprep.subr.mxu0 0.0
    %2273 = vmatpush1.msra.mxu0 0.0
    %2274 = vmatprep.subr.mxu0 0.0
    %2275 = vmatpush1.msra.mxu0 0.0
    %2276 = vmatprep.subr.mxu0 0.0
    %2277 = vmatpush1.msra.mxu0 0.0
    %2278 = vmatprep.subr.mxu0 0.0
    %2279 = vmatpush1.msra.mxu0 0.0
    %2280 = vmatprep.subr.mxu0 0.0
    %2281 = vmatpush1.msra.mxu0 0.0
    %2282 = vmatprep.subr.mxu0 0.0
    %2283 = vmatpush1.msra.mxu0 0.0
    %2284 = vmatprep.subr.mxu0 0.0
    %2285 = vmatpush1.msra.mxu0 0.0
    %2286 = vmatprep.subr.mxu0 0.0
    %2287 = vmatpush1.msra.mxu0 0.0
    %2288 = vmatprep.subr.mxu0 0.0
    %2289 = vmatpush1.msra.mxu0 0.0
    %2290 = vmatprep.subr.mxu0 0.0
    %2291 = vmatpush1.msra.mxu0 0.0
    %2292 = vmatprep.subr.mxu0 0.0
    %2293 = vmatpush1.msra.mxu0 0.0
    %2294 = vmatprep.subr.mxu0 0.0
    %2295 = vmatpush1.msra.mxu0 0.0
    %2296 = vmatprep.subr.mxu0 0.0
    %2297 = vmatpush1.msra.mxu0 0.0
    %2298 = vmatprep.subr.mxu0 0.0
    %2299 = vmatpush1.msra.mxu0 0.0
    %2300 = vmatprep.subr.mxu0 0.0
    %2301 = vmatpush1.msra.mxu0 0.0
    %2302 = vmatprep.subr.mxu0 0.0
    %2303 = vmatpush1.msra.mxu0 0.0
    %2304 = vmatprep.subr.mxu0 0.0
    %2305 = vmatpush1.msra.mxu0 0.0
    %2306 = vmatprep.subr.mxu0 0.0
    %2307 = vmatpush1.msra.mxu0 0.0
    %2308 = vmatprep.subr.mxu0 0.0
    %2309 = vmatpush1.msra.mxu0 0.0
    %2310 = vmatprep.subr.mxu0 0.0
    %2311 = vmatpush1.msra.mxu0 0.0
    %2312 = vmatprep.subr.mxu0 0.0
    %2313 = vmatpush1.msra.mxu0 0.0
    %2314 = vmatprep.subr.mxu0 0.0
    %2315 = vmatpush1.msra.mxu0 0.0
    %2316 = vmatprep.subr.mxu0 0.0
    %2317 = vmatpush1.msra.mxu0 0.0
    %2318 = vmatprep.subr.mxu0 0.0
    %2319 = vmatpush1.msra.mxu0 0.0
    %2320 = vmatprep.subr.mxu0 0.0
    %2321 = vmatpush1.msra.mxu0 0.0
    %2322 = vmatprep.mubr.f32.mxu0 0.0
    %2323 = vmatmul.mubr.f32.gmra.mrb[0].mxu0 %v1821
    %v2324 = vpop.f32.mrb[0].mxu0
    %v2325 = vadd.f32 0.0, %v2324
    %v2326 = vpop.f32.mrb[0].mxu0
    %2327 = vdwg.mxu0
    %2328 = vmatprep.subr.mxu0 0.0
    %2329 = vmatpush1.msra.mxu0 %v1818
    %2330 = vmatprep.subr.mxu0 0.0
    %2331 = vmatpush1.msra.mxu0 %v1819
    %2332 = vmatprep.subr.mxu0 0.0
    %2333 = vmatpush1.msra.mxu0 0.0
    %2334 = vmatprep.subr.mxu0 0.0
    %2335 = vmatpush1.msra.mxu0 0.0
    %2336 = vmatprep.subr.mxu0 0.0
    %2337 = vmatpush1.msra.mxu0 0.0
    %2338 = vmatprep.subr.mxu0 0.0
    %2339 = vmatpush1.msra.mxu0 0.0
    %2340 = vmatprep.subr.mxu0 0.0
    %2341 = vmatpush1.msra.mxu0 0.0
    %2342 = vmatprep.subr.mxu0 0.0
    %2343 = vmatpush1.msra.mxu0 0.0
    %2344 = vmatprep.subr.mxu0 0.0
    %2345 = vmatpush1.msra.mxu0 0.0
    %2346 = vmatprep.subr.mxu0 0.0
    %2347 = vmatpush1.msra.mxu0 0.0
    %2348 = vmatprep.subr.mxu0 0.0
    %2349 = vmatpush1.msra.mxu0 0.0
    %2350 = vmatprep.subr.mxu0 0.0
    %2351 = vmatpush1.msra.mxu0 0.0
    %2352 = vmatprep.subr.mxu0 0.0
    %2353 = vmatpush1.msra.mxu0 0.0
    %2354 = vmatprep.subr.mxu0 0.0
    %2355 = vmatpush1.msra.mxu0 0.0
    %2356 = vmatprep.subr.mxu0 0.0
    %2357 = vmatpush1.msra.mxu0 0.0
    %2358 = vmatprep.subr.mxu0 0.0
    %2359 = vmatpush1.msra.mxu0 0.0
    %2360 = vmatprep.subr.mxu0 0.0
    %2361 = vmatpush1.msra.mxu0 0.0
    %2362 = vmatprep.subr.mxu0 0.0
    %2363 = vmatpush1.msra.mxu0 0.0
    %2364 = vmatprep.subr.mxu0 0.0
    %2365 = vmatpush1.msra.mxu0 0.0
    %2366 = vmatprep.subr.mxu0 0.0
    %2367 = vmatpush1.msra.mxu0 0.0
    %2368 = vmatprep.subr.mxu0 0.0
    %2369 = vmatpush1.msra.mxu0 0.0
    %2370 = vmatprep.subr.mxu0 0.0
    %2371 = vmatpush1.msra.mxu0 0.0
    %2372 = vmatprep.subr.mxu0 0.0
    %2373 = vmatpush1.msra.mxu0 0.0
    %2374 = vmatprep.subr.mxu0 0.0
    %2375 = vmatpush1.msra.mxu0 0.0
    %2376 = vmatprep.subr.mxu0 0.0
    %2377 = vmatpush1.msra.mxu0 0.0
    %2378 = vmatprep.subr.mxu0 0.0
    %2379 = vmatpush1.msra.mxu0 0.0
    %2380 = vmatprep.subr.mxu0 0.0
    %2381 = vmatpush1.msra.mxu0 0.0
    %2382 = vmatprep.subr.mxu0 0.0
    %2383 = vmatpush1.msra.mxu0 0.0
    %2384 = vmatprep.subr.mxu0 0.0
    %2385 = vmatpush1.msra.mxu0 0.0
    %2386 = vmatprep.subr.mxu0 0.0
    %2387 = vmatpush1.msra.mxu0 0.0
    %2388 = vmatprep.subr.mxu0 0.0
    %2389 = vmatpush1.msra.mxu0 0.0
    %2390 = vmatprep.subr.mxu0 0.0
    %2391 = vmatpush1.msra.mxu0 0.0
    %2392 = vmatprep.mubr.f32.mxu0 0.0
    %2393 = vmatmul.mubr.f32.gmra.mrb[0].mxu0 %v1894
    %v2394 = vpop.f32.mrb[0].mxu0
    %v2395 = vadd.f32 0.0, %v2394
    %v2396 = vpop.f32.mrb[0].mxu0
    %2397 = vdwg.mxu0
    %2398 = vmatprep.subr.mxu0 0.0
    %2399 = vmatpush1.msra.mxu0 %v1818
    %2400 = vmatprep.subr.mxu0 0.0
    %2401 = vmatpush1.msra.mxu0 %v1819
    %2402 = vmatprep.subr.mxu0 0.0
    %2403 = vmatpush1.msra.mxu0 0.0
    %2404 = vmatprep.subr.mxu0 0.0
    %2405 = vmatpush1.msra.mxu0 0.0
    %2406 = vmatprep.subr.mxu0 0.0
    %2407 = vmatpush1.msra.mxu0 0.0
    %2408 = vmatprep.subr.mxu0 0.0
    %2409 = vmatpush1.msra.mxu0 0.0
    %2410 = vmatprep.subr.mxu0 0.0
    %2411 = vmatpush1.msra.mxu0 0.0
    %2412 = vmatprep.subr.mxu0 0.0
    %2413 = vmatpush1.msra.mxu0 0.0
    %2414 = vmatprep.subr.mxu0 0.0
    %2415 = vmatpush1.msra.mxu0 0.0
    %2416 = vmatprep.subr.mxu0 0.0
    %2417 = vmatpush1.msra.mxu0 0.0
    %2418 = vmatprep.subr.mxu0 0.0
    %2419 = vmatpush1.msra.mxu0 0.0
    %2420 = vmatprep.subr.mxu0 0.0
    %2421 = vmatpush1.msra.mxu0 0.0
    %2422 = vmatprep.subr.mxu0 0.0
    %2423 = vmatpush1.msra.mxu0 0.0
    %2424 = vmatprep.subr.mxu0 0.0
    %2425 = vmatpush1.msra.mxu0 0.0
    %2426 = vmatprep.subr.mxu0 0.0
    %2427 = vmatpush1.msra.mxu0 0.0
    %2428 = vmatprep.subr.mxu0 0.0
    %2429 = vmatpush1.msra.mxu0 0.0
    %2430 = vmatprep.subr.mxu0 0.0
    %2431 = vmatpush1.msra.mxu0 0.0
    %2432 = vmatprep.subr.mxu0 0.0
    %2433 = vmatpush1.msra.mxu0 0.0
    %2434 = vmatprep.subr.mxu0 0.0
    %2435 = vmatpush1.msra.mxu0 0.0
    %2436 = vmatprep.subr.mxu0 0.0
    %2437 = vmatpush1.msra.mxu0 0.0
    %2438 = vmatprep.subr.mxu0 0.0
    %2439 = vmatpush1.msra.mxu0 0.0
    %2440 = vmatprep.subr.mxu0 0.0
    %2441 = vmatpush1.msra.mxu0 0.0
    %2442 = vmatprep.subr.mxu0 0.0
    %2443 = vmatpush1.msra.mxu0 0.0
    %2444 = vmatprep.subr.mxu0 0.0
    %2445 = vmatpush1.msra.mxu0 0.0
    %2446 = vmatprep.subr.mxu0 0.0
    %2447 = vmatpush1.msra.mxu0 0.0
    %2448 = vmatprep.subr.mxu0 0.0
    %2449 = vmatpush1.msra.mxu0 0.0
    %2450 = vmatprep.subr.mxu0 0.0
    %2451 = vmatpush1.msra.mxu0 0.0
    %2452 = vmatprep.subr.mxu0 0.0
    %2453 = vmatpush1.msra.mxu0 0.0
    %2454 = vmatprep.subr.mxu0 0.0
    %2455 = vmatpush1.msra.mxu0 0.0
    %2456 = vmatprep.subr.mxu0 0.0
    %2457 = vmatpush1.msra.mxu0 0.0
    %2458 = vmatprep.subr.mxu0 0.0
    %2459 = vmatpush1.msra.mxu0 0.0
    %2460 = vmatprep.subr.mxu0 0.0
    %2461 = vmatpush1.msra.mxu0 0.0
    %2462 = vmatprep.mubr.f32.mxu0 0.0
    %2463 = vmatmul.mubr.f32.gmra.mrb[0].mxu0 %v1967
    %v2464 = vpop.f32.mrb[0].mxu0
    %v2465 = vadd.f32 0.0, %v2464
    %v2466 = vpop.f32.mrb[0].mxu0
    %2467 = vdwg.mxu0
    %2468 = vmatprep.subr.mxu0 0.0
    %2469 = vmatpush1.msra.mxu0 %v1818
    %2470 = vmatprep.subr.mxu0 0.0
    %2471 = vmatpush1.msra.mxu0 %v1819
    %2472 = vmatprep.subr.mxu0 0.0
    %2473 = vmatpush1.msra.mxu0 0.0
    %2474 = vmatprep.subr.mxu0 0.0
    %2475 = vmatpush1.msra.mxu0 0.0
    %2476 = vmatprep.subr.mxu0 0.0
    %2477 = vmatpush1.msra.mxu0 0.0
    %2478 = vmatprep.subr.mxu0 0.0
    %2479 = vmatpush1.msra.mxu0 0.0
    %2480 = vmatprep.subr.mxu0 0.0
    %2481 = vmatpush1.msra.mxu0 0.0
    %2482 = vmatprep.subr.mxu0 0.0
    %2483 = vmatpush1.msra.mxu0 0.0
    %2484 = vmatprep.subr.mxu0 0.0
    %2485 = vmatpush1.msra.mxu0 0.0
    %2486 = vmatprep.subr.mxu0 0.0
    %2487 = vmatpush1.msra.mxu0 0.0
    %2488 = vmatprep.subr.mxu0 0.0
    %2489 = vmatpush1.msra.mxu0 0.0
    %2490 = vmatprep.subr.mxu0 0.0
    %2491 = vmatpush1.msra.mxu0 0.0
    %2492 = vmatprep.subr.mxu0 0.0
    %2493 = vmatpush1.msra.mxu0 0.0
    %2494 = vmatprep.subr.mxu0 0.0
    %2495 = vmatpush1.msra.mxu0 0.0
    %2496 = vmatprep.subr.mxu0 0.0
    %2497 = vmatpush1.msra.mxu0 0.0
    %2498 = vmatprep.subr.mxu0 0.0
    %2499 = vmatpush1.msra.mxu0 0.0
    %2500 = vmatprep.subr.mxu0 0.0
    %2501 = vmatpush1.msra.mxu0 0.0
    %2502 = vmatprep.subr.mxu0 0.0
    %2503 = vmatpush1.msra.mxu0 0.0
    %2504 = vmatprep.subr.mxu0 0.0
    %2505 = vmatpush1.msra.mxu0 0.0
    %2506 = vmatprep.subr.mxu0 0.0
    %2507 = vmatpush1.msra.mxu0 0.0
    %2508 = vmatprep.subr.mxu0 0.0
    %2509 = vmatpush1.msra.mxu0 0.0
    %2510 = vmatprep.subr.mxu0 0.0
    %2511 = vmatpush1.msra.mxu0 0.0
    %2512 = vmatprep.subr.mxu0 0.0
    %2513 = vmatpush1.msra.mxu0 0.0
    %2514 = vmatprep.subr.mxu0 0.0
    %2515 = vmatpush1.msra.mxu0 0.0
    %2516 = vmatprep.subr.mxu0 0.0
    %2517 = vmatpush1.msra.mxu0 0.0
    %2518 = vmatprep.subr.mxu0 0.0
    %2519 = vmatpush1.msra.mxu0 0.0
    %2520 = vmatprep.subr.mxu0 0.0
    %2521 = vmatpush1.msra.mxu0 0.0
    %2522 = vmatprep.subr.mxu0 0.0
    %2523 = vmatpush1.msra.mxu0 0.0
    %2524 = vmatprep.subr.mxu0 0.0
    %2525 = vmatpush1.msra.mxu0 0.0
    %2526 = vmatprep.subr.mxu0 0.0
    %2527 = vmatpush1.msra.mxu0 0.0
    %2528 = vmatprep.subr.mxu0 0.0
    %2529 = vmatpush1.msra.mxu0 0.0
    %2530 = vmatprep.subr.mxu0 0.0
    %2531 = vmatpush1.msra.mxu0 0.0
    %2532 = vmatprep.mubr.f32.mxu0 0.0
    %2533 = vmatmul.mubr.f32.gmra.mrb[0].mxu0 %v2040
    %v2534 = vpop.f32.mrb[0].mxu0
    %v2535 = vadd.f32 0.0, %v2534
    %v2536 = vpop.f32.mrb[0].mxu0
    %2537 = vdwg.mxu0
    %2538 = vmatprep.subr.mxu0 0.0
    %2539 = vmatpush1.msra.mxu0 %v1818
    %2540 = vmatprep.subr.mxu0 0.0
    %2541 = vmatpush1.msra.mxu0 %v1819
    %2542 = vmatprep.subr.mxu0 0.0
    %2543 = vmatpush1.msra.mxu0 0.0
    %2544 = vmatprep.subr.mxu0 0.0
    %2545 = vmatpush1.msra.mxu0 0.0
    %2546 = vmatprep.subr.mxu0 0.0
    %2547 = vmatpush1.msra.mxu0 0.0
    %2548 = vmatprep.subr.mxu0 0.0
    %2549 = vmatpush1.msra.mxu0 0.0
    %2550 = vmatprep.subr.mxu0 0.0
    %2551 = vmatpush1.msra.mxu0 0.0
    %2552 = vmatprep.subr.mxu0 0.0
    %2553 = vmatpush1.msra.mxu0 0.0
    %2554 = vmatprep.subr.mxu0 0.0
    %2555 = vmatpush1.msra.mxu0 0.0
    %2556 = vmatprep.subr.mxu0 0.0
    %2557 = vmatpush1.msra.mxu0 0.0
    %2558 = vmatprep.subr.mxu0 0.0
    %2559 = vmatpush1.msra.mxu0 0.0
    %2560 = vmatprep.subr.mxu0 0.0
    %2561 = vmatpush1.msra.mxu0 0.0
    %2562 = vmatprep.subr.mxu0 0.0
    %2563 = vmatpush1.msra.mxu0 0.0
    %2564 = vmatprep.subr.mxu0 0.0
    %2565 = vmatpush1.msra.mxu0 0.0
    %2566 = vmatprep.subr.mxu0 0.0
    %2567 = vmatpush1.msra.mxu0 0.0
    %2568 = vmatprep.subr.mxu0 0.0
    %2569 = vmatpush1.msra.mxu0 0.0
    %2570 = vmatprep.subr.mxu0 0.0
    %2571 = vmatpush1.msra.mxu0 0.0
    %2572 = vmatprep.subr.mxu0 0.0
    %2573 = vmatpush1.msra.mxu0 0.0
    %2574 = vmatprep.subr.mxu0 0.0
    %2575 = vmatpush1.msra.mxu0 0.0
    %2576 = vmatprep.subr.mxu0 0.0
    %2577 = vmatpush1.msra.mxu0 0.0
    %2578 = vmatprep.subr.mxu0 0.0
    %2579 = vmatpush1.msra.mxu0 0.0
    %2580 = vmatprep.subr.mxu0 0.0
    %2581 = vmatpush1.msra.mxu0 0.0
    %2582 = vmatprep.subr.mxu0 0.0
    %2583 = vmatpush1.msra.mxu0 0.0
    %2584 = vmatprep.subr.mxu0 0.0
    %2585 = vmatpush1.msra.mxu0 0.0
    %2586 = vmatprep.subr.mxu0 0.0
    %2587 = vmatpush1.msra.mxu0 0.0
    %2588 = vmatprep.subr.mxu0 0.0
    %2589 = vmatpush1.msra.mxu0 0.0
    %2590 = vmatprep.subr.mxu0 0.0
    %2591 = vmatpush1.msra.mxu0 0.0
    %2592 = vmatprep.subr.mxu0 0.0
    %2593 = vmatpush1.msra.mxu0 0.0
    %2594 = vmatprep.subr.mxu0 0.0
    %2595 = vmatpush1.msra.mxu0 0.0
    %2596 = vmatprep.subr.mxu0 0.0
    %2597 = vmatpush1.msra.mxu0 0.0
    %2598 = vmatprep.subr.mxu0 0.0
    %2599 = vmatpush1.msra.mxu0 0.0
    %2600 = vmatprep.subr.mxu0 0.0
    %2601 = vmatpush1.msra.mxu0 0.0
    %2602 = vmatprep.mubr.f32.mxu0 0.0
    %2603 = vmatmul.mubr.f32.gmra.mrb[0].mxu0 %v2113
    %v2604 = vpop.f32.mrb[0].mxu0
    %v2605 = vadd.f32 0.0, %v2604
    %v2606 = vpop.f32.mrb[0].mxu0
    %2607 = vdwg.mxu0
    %2608 = vmatprep.subr.mxu0 0.0
    %2609 = vmatpush1.msra.mxu0 %v1818
    %2610 = vmatprep.subr.mxu0 0.0
    %2611 = vmatpush1.msra.mxu0 %v1819
    %2612 = vmatprep.subr.mxu0 0.0
    %2613 = vmatpush1.msra.mxu0 0.0
    %2614 = vmatprep.subr.mxu0 0.0
    %2615 = vmatpush1.msra.mxu0 0.0
    %2616 = vmatprep.subr.mxu0 0.0
    %2617 = vmatpush1.msra.mxu0 0.0
    %2618 = vmatprep.subr.mxu0 0.0
    %2619 = vmatpush1.msra.mxu0 0.0
    %2620 = vmatprep.subr.mxu0 0.0
    %2621 = vmatpush1.msra.mxu0 0.0
    %2622 = vmatprep.subr.mxu0 0.0
    %2623 = vmatpush1.msra.mxu0 0.0
    %2624 = vmatprep.subr.mxu0 0.0
    %2625 = vmatpush1.msra.mxu0 0.0
    %2626 = vmatprep.subr.mxu0 0.0
    %2627 = vmatpush1.msra.mxu0 0.0
    %2628 = vmatprep.subr.mxu0 0.0
    %2629 = vmatpush1.msra.mxu0 0.0
    %2630 = vmatprep.subr.mxu0 0.0
    %2631 = vmatpush1.msra.mxu0 0.0
    %2632 = vmatprep.subr.mxu0 0.0
    %2633 = vmatpush1.msra.mxu0 0.0
    %2634 = vmatprep.subr.mxu0 0.0
    %2635 = vmatpush1.msra.mxu0 0.0
    %2636 = vmatprep.subr.mxu0 0.0
    %2637 = vmatpush1.msra.mxu0 0.0
    %2638 = vmatprep.subr.mxu0 0.0
    %2639 = vmatpush1.msra.mxu0 0.0
    %2640 = vmatprep.subr.mxu0 0.0
    %2641 = vmatpush1.msra.mxu0 0.0
    %2642 = vmatprep.subr.mxu0 0.0
    %2643 = vmatpush1.msra.mxu0 0.0
    %2644 = vmatprep.subr.mxu0 0.0
    %2645 = vmatpush1.msra.mxu0 0.0
    %2646 = vmatprep.subr.mxu0 0.0
    %2647 = vmatpush1.msra.mxu0 0.0
    %2648 = vmatprep.subr.mxu0 0.0
    %2649 = vmatpush1.msra.mxu0 0.0
    %2650 = vmatprep.subr.mxu0 0.0
    %2651 = vmatpush1.msra.mxu0 0.0
    %2652 = vmatprep.subr.mxu0 0.0
    %2653 = vmatpush1.msra.mxu0 0.0
    %2654 = vmatprep.subr.mxu0 0.0
    %2655 = vmatpush1.msra.mxu0 0.0
    %2656 = vmatprep.subr.mxu0 0.0
    %2657 = vmatpush1.msra.mxu0 0.0
    %2658 = vmatprep.subr.mxu0 0.0
    %2659 = vmatpush1.msra.mxu0 0.0
    %2660 = vmatprep.subr.mxu0 0.0
    %2661 = vmatpush1.msra.mxu0 0.0
    %2662 = vmatprep.subr.mxu0 0.0
    %2663 = vmatpush1.msra.mxu0 0.0
    %2664 = vmatprep.subr.mxu0 0.0
    %2665 = vmatpush1.msra.mxu0 0.0
    %2666 = vmatprep.subr.mxu0 0.0
    %2667 = vmatpush1.msra.mxu0 0.0
    %2668 = vmatprep.subr.mxu0 0.0
    %2669 = vmatpush1.msra.mxu0 0.0
    %2670 = vmatprep.subr.mxu0 0.0
    %2671 = vmatpush1.msra.mxu0 0.0
    %2672 = vmatprep.mubr.f32.mxu0 0.0
    %2673 = vmatmul.mubr.f32.gmra.mrb[0].mxu0 %v2186
    %v2674 = vpop.f32.mrb[0].mxu0
    %v2675 = vadd.f32 0.0, %v2674
    %v2676 = vpop.f32.mrb[0].mxu0
    %2677 = vdwg.mxu0
    %v2678 = vrot.slane %v1890, 7
    %v2679 = vrot.slane %v1963, 7
    %v2680 = vrot.slane %v2036, 7
    %v2681 = vrot.slane %v2109, 7
    %v2682 = vrot.slane %v2182, 7
    %v2683 = vrot.slane %v2255, 7
    %v2684 = vsel %vm952, %v2678, 0.0
    %v2685 = vsel %vm952, %v2679, 0.0
    %v2686 = vsel %vm952, %v2680, 0.0
    %v2687 = vsel %vm952, %v2681, 0.0
    %v2688 = vsel %vm952, %v2682, 0.0
    %v2689 = vsel %vm952, %v2683, 0.0
    %v2690 = vrot.slane %v1890, 1
    %v2691 = vrot.slane %v1963, 1
    %v2692 = vrot.slane %v2036, 1
    %v2693 = vrot.slane %v2109, 1
    %v2694 = vrot.slane %v2182, 1
    %v2695 = vrot.slane %v2255, 1
    %v2696 = vsel %vm965, %v2690, 0.0
    %v2697 = vsel %vm965, %v2691, 0.0
    %v2698 = vsel %vm965, %v2692, 0.0
    %v2699 = vsel %vm965, %v2693, 0.0
    %v2700 = vsel %vm965, %v2694, 0.0
    %v2701 = vsel %vm965, %v2695, 0.0
    %vm2702 = vcmp.lt.s32.totalorder %v96, 7
    %vm2703 = vcmask 1047616
    %2704 = vrot.lane.b32.xlu0 %v2684, 8
    %v2705 = vpop.permute.xlu0 %2704
    %v2706 = vsel %vm2703, %v2705, %v2684
    %2707 = vrot.lane.b32.xlu0 %v2685, 8
    %v2708 = vpop.permute.xlu0 %2707
    %v2709 = vsel %vm2703, %v2708, %v2685
    %2710 = vrot.lane.b32.xlu0 %v2686, 8
    %v2711 = vpop.permute.xlu0 %2710
    %v2712 = vsel %vm2703, %v2711, %v2686
    %2713 = vrot.lane.b32.xlu0 %v2687, 8
    %v2714 = vpop.permute.xlu0 %2713
    %v2715 = vsel %vm2703, %v2714, %v2687
    %2716 = vrot.lane.b32.xlu0 %v2688, 8
    %v2717 = vpop.permute.xlu0 %2716
    %v2718 = vsel %vm2703, %v2717, %v2688
    %2719 = vrot.lane.b32.xlu0 %v2689, 8
    %v2720 = vpop.permute.xlu0 %2719
    %v2721 = vsel %vm2703, %v2720, %v2689
    %2722 = vrot.lane.b32.xlu0 %v2706, 8
    %v2723 = vpop.permute.xlu0 %2722
    %2724 = vrot.lane.b32.xlu0 %v2709, 8
    %v2725 = vpop.permute.xlu0 %2724
    %2726 = vrot.lane.b32.xlu0 %v2712, 8
    %v2727 = vpop.permute.xlu0 %2726
    %2728 = vrot.lane.b32.xlu0 %v2715, 8
    %v2729 = vpop.permute.xlu0 %2728
    %2730 = vrot.lane.b32.xlu0 %v2718, 8
    %v2731 = vpop.permute.xlu0 %2730
    %2732 = vrot.lane.b32.xlu0 %v2721, 8
    %v2733 = vpop.permute.xlu0 %2732
    %v2734 = vsel %vm2703, %v2723, %v2684
    %v2735 = vsel %vm2703, %v2725, %v2685
    %v2736 = vsel %vm2703, %v2727, %v2686
    %v2737 = vsel %vm2703, %v2729, %v2687
    %v2738 = vsel %vm2703, %v2731, %v2688
    %v2739 = vsel %vm2703, %v2733, %v2689
    %2746 = vrot.lane.b32.xlu0 %v2734, 121
    %v2747 = vpop.permute.xlu0 %2746
    %2748 = vrot.lane.b32.xlu0 %v2735, 121
    %v2749 = vpop.permute.xlu0 %2748
    %2750 = vrot.lane.b32.xlu0 %v2736, 121
    %v2751 = vpop.permute.xlu0 %2750
    %2752 = vrot.lane.b32.xlu0 %v2737, 121
    %v2753 = vpop.permute.xlu0 %2752
    %2754 = vrot.lane.b32.xlu0 %v2738, 121
    %v2755 = vpop.permute.xlu0 %2754
    %2756 = vrot.lane.b32.xlu0 %v2739, 121
    %v2757 = vpop.permute.xlu0 %2756
    %v2764 = vsel %vm978, %v2747, 0.0
    %v2765 = vsel %vm978, %v2749, 0.0
    %v2766 = vsel %vm978, %v2751, 0.0
    %v2767 = vsel %vm978, %v2753, 0.0
    %v2768 = vsel %vm978, %v2755, 0.0
    %v2769 = vsel %vm978, %v2757, 0.0
    %v2770 = vmul.f32 %v1048, %v2764
    %v2771 = vmul.f32 %v1048, %v2765
    %v2772 = vmul.f32 %v1048, %v2766
    %v2773 = vmul.f32 %v1048, %v2767
    %v2774 = vmul.f32 %v1048, %v2768
    %v2775 = vmul.f32 %v1048, %v2769
    %v2776 = vadd.f32 %v980, %v2770
    %v2777 = vadd.f32 %v980, %v2771
    %v2778 = vadd.f32 %v980, %v2772
    %v2779 = vadd.f32 %v980, %v2773
    %v2780 = vadd.f32 %v980, %v2774
    %v2781 = vadd.f32 %v980, %v2775
    %v2782 = vmul.f32 %v1177, %v2684
    %v2783 = vmul.f32 %v1177, %v2685
    %v2784 = vmul.f32 %v1177, %v2686
    %v2785 = vmul.f32 %v1177, %v2687
    %v2786 = vmul.f32 %v1177, %v2688
    %v2787 = vmul.f32 %v1177, %v2689
    %v2788 = vadd.f32 %v2782, 0.0
    %v2789 = vadd.f32 %v2783, 0.0
    %v2790 = vadd.f32 %v2784, 0.0
    %v2791 = vadd.f32 %v2785, 0.0
    %v2792 = vadd.f32 %v2786, 0.0
    %v2793 = vadd.f32 %v2787, 0.0
    %2794 = vrot.lane.b32.xlu0 %v2734, 127
    %v2795 = vpop.permute.xlu0 %2794
    %2796 = vrot.lane.b32.xlu0 %v2735, 127
    %v2797 = vpop.permute.xlu0 %2796
    %2798 = vrot.lane.b32.xlu0 %v2736, 127
    %v2799 = vpop.permute.xlu0 %2798
    %2800 = vrot.lane.b32.xlu0 %v2737, 127
    %v2801 = vpop.permute.xlu0 %2800
    %2802 = vrot.lane.b32.xlu0 %v2738, 127
    %v2803 = vpop.permute.xlu0 %2802
    %2804 = vrot.lane.b32.xlu0 %v2739, 127
    %v2805 = vpop.permute.xlu0 %2804
    %v2812 = vsel %vm2702, %v2795, 0.0
    %v2813 = vsel %vm2702, %v2797, 0.0
    %v2814 = vsel %vm2702, %v2799, 0.0
    %v2815 = vsel %vm2702, %v2801, 0.0
    %v2816 = vsel %vm2702, %v2803, 0.0
    %v2817 = vsel %vm2702, %v2805, 0.0
    %v2818 = vmul.f32 %v1306, %v2812
    %v2819 = vmul.f32 %v1306, %v2813
    %v2820 = vmul.f32 %v1306, %v2814
    %v2821 = vmul.f32 %v1306, %v2815
    %v2822 = vmul.f32 %v1306, %v2816
    %v2823 = vmul.f32 %v1306, %v2817
    %v2824 = vadd.f32 %v2776, %v2818
    %v2825 = vadd.f32 %v2777, %v2819
    %v2826 = vadd.f32 %v2778, %v2820
    %v2827 = vadd.f32 %v2779, %v2821
    %v2828 = vadd.f32 %v2780, %v2822
    %v2829 = vadd.f32 %v2781, %v2823
    %2830 = vrot.lane.b32.xlu0 %v1890, 8
    %v2831 = vpop.permute.xlu0 %2830
    %v2832 = vsel %vm2703, %v2831, %v1890
    %2833 = vrot.lane.b32.xlu0 %v1963, 8
    %v2834 = vpop.permute.xlu0 %2833
    %v2835 = vsel %vm2703, %v2834, %v1963
    %2836 = vrot.lane.b32.xlu0 %v2036, 8
    %v2837 = vpop.permute.xlu0 %2836
    %v2838 = vsel %vm2703, %v2837, %v2036
    %2839 = vrot.lane.b32.xlu0 %v2109, 8
    %v2840 = vpop.permute.xlu0 %2839
    %v2841 = vsel %vm2703, %v2840, %v2109
    %2842 = vrot.lane.b32.xlu0 %v2182, 8
    %v2843 = vpop.permute.xlu0 %2842
    %v2844 = vsel %vm2703, %v2843, %v2182
    %2845 = vrot.lane.b32.xlu0 %v2255, 8
    %v2846 = vpop.permute.xlu0 %2845
    %v2847 = vsel %vm2703, %v2846, %v2255
    %2848 = vrot.lane.b32.xlu0 %v2832, 8
    %v2849 = vpop.permute.xlu0 %2848
    %2850 = vrot.lane.b32.xlu0 %v2835, 8
    %v2851 = vpop.permute.xlu0 %2850
    %2852 = vrot.lane.b32.xlu0 %v2838, 8
    %v2853 = vpop.permute.xlu0 %2852
    %2854 = vrot.lane.b32.xlu0 %v2841, 8
    %v2855 = vpop.permute.xlu0 %2854
    %2856 = vrot.lane.b32.xlu0 %v2844, 8
    %v2857 = vpop.permute.xlu0 %2856
    %2858 = vrot.lane.b32.xlu0 %v2847, 8
    %v2859 = vpop.permute.xlu0 %2858
    %v2860 = vsel %vm2703, %v2849, %v1890
    %v2861 = vsel %vm2703, %v2851, %v1963
    %v2862 = vsel %vm2703, %v2853, %v2036
    %v2863 = vsel %vm2703, %v2855, %v2109
    %v2864 = vsel %vm2703, %v2857, %v2182
    %v2865 = vsel %vm2703, %v2859, %v2255
    %2872 = vrot.lane.b32.xlu0 %v2860, 121
    %v2873 = vpop.permute.xlu0 %2872
    %2874 = vrot.lane.b32.xlu0 %v2861, 121
    %v2875 = vpop.permute.xlu0 %2874
    %2876 = vrot.lane.b32.xlu0 %v2862, 121
    %v2877 = vpop.permute.xlu0 %2876
    %2878 = vrot.lane.b32.xlu0 %v2863, 121
    %v2879 = vpop.permute.xlu0 %2878
    %2880 = vrot.lane.b32.xlu0 %v2864, 121
    %v2881 = vpop.permute.xlu0 %2880
    %2882 = vrot.lane.b32.xlu0 %v2865, 121
    %v2883 = vpop.permute.xlu0 %2882
    %v2890 = vsel %vm978, %v2873, 0.0
    %v2891 = vsel %vm978, %v2875, 0.0
    %v2892 = vsel %vm978, %v2877, 0.0
    %v2893 = vsel %vm978, %v2879, 0.0
    %v2894 = vsel %vm978, %v2881, 0.0
    %v2895 = vsel %vm978, %v2883, 0.0
    %v2896 = vmul.f32 %v1061, %v2890
    %v2897 = vmul.f32 %v1061, %v2891
    %v2898 = vmul.f32 %v1061, %v2892
    %v2899 = vmul.f32 %v1061, %v2893
    %v2900 = vmul.f32 %v1061, %v2894
    %v2901 = vmul.f32 %v1061, %v2895
    %v2902 = vadd.f32 %v2788, %v2896
    %v2903 = vadd.f32 %v2789, %v2897
    %v2904 = vadd.f32 %v2790, %v2898
    %v2905 = vadd.f32 %v2791, %v2899
    %v2906 = vadd.f32 %v2792, %v2900
    %v2907 = vadd.f32 %v2793, %v2901
    %v2908 = vmul.f32 %v1190, %v1890
    %v2909 = vmul.f32 %v1190, %v1963
    %v2910 = vmul.f32 %v1190, %v2036
    %v2911 = vmul.f32 %v1190, %v2109
    %v2912 = vmul.f32 %v1190, %v2182
    %v2913 = vmul.f32 %v1190, %v2255
    %v2914 = vadd.f32 %v2824, %v2908
    %v2915 = vadd.f32 %v2825, %v2909
    %v2916 = vadd.f32 %v2826, %v2910
    %v2917 = vadd.f32 %v2827, %v2911
    %v2918 = vadd.f32 %v2828, %v2912
    %v2919 = vadd.f32 %v2829, %v2913
    %2920 = vrot.lane.b32.xlu0 %v2860, 127
    %v2921 = vpop.permute.xlu0 %2920
    %2922 = vrot.lane.b32.xlu0 %v2861, 127
    %v2923 = vpop.permute.xlu0 %2922
    %2924 = vrot.lane.b32.xlu0 %v2862, 127
    %v2925 = vpop.permute.xlu0 %2924
    %2926 = vrot.lane.b32.xlu0 %v2863, 127
    %v2927 = vpop.permute.xlu0 %2926
    %2928 = vrot.lane.b32.xlu0 %v2864, 127
    %v2929 = vpop.permute.xlu0 %2928
    %2930 = vrot.lane.b32.xlu0 %v2865, 127
    %v2931 = vpop.permute.xlu0 %2930
    %v2938 = vsel %vm2702, %v2921, 0.0
    %v2939 = vsel %vm2702, %v2923, 0.0
    %v2940 = vsel %vm2702, %v2925, 0.0
    %v2941 = vsel %vm2702, %v2927, 0.0
    %v2942 = vsel %vm2702, %v2929, 0.0
    %v2943 = vsel %vm2702, %v2931, 0.0
    %v2944 = vmul.f32 %v1319, %v2938
    %v2945 = vmul.f32 %v1319, %v2939
    %v2946 = vmul.f32 %v1319, %v2940
    %v2947 = vmul.f32 %v1319, %v2941
    %v2948 = vmul.f32 %v1319, %v2942
    %v2949 = vmul.f32 %v1319, %v2943
    %v2950 = vadd.f32 %v2902, %v2944
    %v2951 = vadd.f32 %v2903, %v2945
    %v2952 = vadd.f32 %v2904, %v2946
    %v2953 = vadd.f32 %v2905, %v2947
    %v2954 = vadd.f32 %v2906, %v2948
    %v2955 = vadd.f32 %v2907, %v2949
    %2956 = vrot.lane.b32.xlu0 %v2696, 8
    %v2957 = vpop.permute.xlu0 %2956
    %v2958 = vsel %vm2703, %v2957, %v2696
    %2959 = vrot.lane.b32.xlu0 %v2697, 8
    %v2960 = vpop.permute.xlu0 %2959
    %v2961 = vsel %vm2703, %v2960, %v2697
    %2962 = vrot.lane.b32.xlu0 %v2698, 8
    %v2963 = vpop.permute.xlu0 %2962
    %v2964 = vsel %vm2703, %v2963, %v2698
    %2965 = vrot.lane.b32.xlu0 %v2699, 8
    %v2966 = vpop.permute.xlu0 %2965
    %v2967 = vsel %vm2703, %v2966, %v2699
    %2968 = vrot.lane.b32.xlu0 %v2700, 8
    %v2969 = vpop.permute.xlu0 %2968
    %v2970 = vsel %vm2703, %v2969, %v2700
    %2971 = vrot.lane.b32.xlu0 %v2701, 8
    %v2972 = vpop.permute.xlu0 %2971
    %v2973 = vsel %vm2703, %v2972, %v2701
    %2974 = vrot.lane.b32.xlu0 %v2958, 8
    %v2975 = vpop.permute.xlu0 %2974
    %2976 = vrot.lane.b32.xlu0 %v2961, 8
    %v2977 = vpop.permute.xlu0 %2976
    %2978 = vrot.lane.b32.xlu0 %v2964, 8
    %v2979 = vpop.permute.xlu0 %2978
    %2980 = vrot.lane.b32.xlu0 %v2967, 8
    %v2981 = vpop.permute.xlu0 %2980
    %2982 = vrot.lane.b32.xlu0 %v2970, 8
    %v2983 = vpop.permute.xlu0 %2982
    %2984 = vrot.lane.b32.xlu0 %v2973, 8
    %v2985 = vpop.permute.xlu0 %2984
    %v2986 = vsel %vm2703, %v2975, %v2696
    %v2987 = vsel %vm2703, %v2977, %v2697
    %v2988 = vsel %vm2703, %v2979, %v2698
    %v2989 = vsel %vm2703, %v2981, %v2699
    %v2990 = vsel %vm2703, %v2983, %v2700
    %v2991 = vsel %vm2703, %v2985, %v2701
    %2998 = vrot.lane.b32.xlu0 %v2986, 121
    %v2999 = vpop.permute.xlu0 %2998
    %3000 = vrot.lane.b32.xlu0 %v2987, 121
    %v3001 = vpop.permute.xlu0 %3000
    %3002 = vrot.lane.b32.xlu0 %v2988, 121
    %v3003 = vpop.permute.xlu0 %3002
    %3004 = vrot.lane.b32.xlu0 %v2989, 121
    %v3005 = vpop.permute.xlu0 %3004
    %3006 = vrot.lane.b32.xlu0 %v2990, 121
    %v3007 = vpop.permute.xlu0 %3006
    %3008 = vrot.lane.b32.xlu0 %v2991, 121
    %v3009 = vpop.permute.xlu0 %3008
    %v3016 = vsel %vm978, %v2999, 0.0
    %v3017 = vsel %vm978, %v3001, 0.0
    %v3018 = vsel %vm978, %v3003, 0.0
    %v3019 = vsel %vm978, %v3005, 0.0
    %v3020 = vsel %vm978, %v3007, 0.0
    %v3021 = vsel %vm978, %v3009, 0.0
    %v3022 = vmul.f32 %v1098, %v3016
    %v3023 = vmul.f32 %v1098, %v3017
    %v3024 = vmul.f32 %v1098, %v3018
    %v3025 = vmul.f32 %v1098, %v3019
    %v3026 = vmul.f32 %v1098, %v3020
    %v3027 = vmul.f32 %v1098, %v3021
    %v3028 = vadd.f32 %v2914, %v3022
    %v3029 = vadd.f32 %v2915, %v3023
    %v3030 = vadd.f32 %v2916, %v3024
    %v3031 = vadd.f32 %v2917, %v3025
    %v3032 = vadd.f32 %v2918, %v3026
    %v3033 = vadd.f32 %v2919, %v3027
    %v3034 = vmul.f32 %v1227, %v2696
    %v3035 = vmul.f32 %v1227, %v2697
    %v3036 = vmul.f32 %v1227, %v2698
    %v3037 = vmul.f32 %v1227, %v2699
    %v3038 = vmul.f32 %v1227, %v2700
    %v3039 = vmul.f32 %v1227, %v2701
    %v3040 = vadd.f32 %v2950, %v3034
    %v3041 = vadd.f32 %v2951, %v3035
    %v3042 = vadd.f32 %v2952, %v3036
    %v3043 = vadd.f32 %v2953, %v3037
    %v3044 = vadd.f32 %v2954, %v3038
    %v3045 = vadd.f32 %v2955, %v3039
    %3046 = vrot.lane.b32.xlu0 %v2986, 127
    %v3047 = vpop.permute.xlu0 %3046
    %3048 = vrot.lane.b32.xlu0 %v2987, 127
    %v3049 = vpop.permute.xlu0 %3048
    %3050 = vrot.lane.b32.xlu0 %v2988, 127
    %v3051 = vpop.permute.xlu0 %3050
    %3052 = vrot.lane.b32.xlu0 %v2989, 127
    %v3053 = vpop.permute.xlu0 %3052
    %3054 = vrot.lane.b32.xlu0 %v2990, 127
    %v3055 = vpop.permute.xlu0 %3054
    %3056 = vrot.lane.b32.xlu0 %v2991, 127
    %v3057 = vpop.permute.xlu0 %3056
    %v3064 = vsel %vm2702, %v3047, 0.0
    %v3065 = vsel %vm2702, %v3049, 0.0
    %v3066 = vsel %vm2702, %v3051, 0.0
    %v3067 = vsel %vm2702, %v3053, 0.0
    %v3068 = vsel %vm2702, %v3055, 0.0
    %v3069 = vsel %vm2702, %v3057, 0.0
    %v3070 = vmul.f32 %v1356, %v3064
    %v3071 = vmul.f32 %v1356, %v3065
    %v3072 = vmul.f32 %v1356, %v3066
    %v3073 = vmul.f32 %v1356, %v3067
    %v3074 = vmul.f32 %v1356, %v3068
    %v3075 = vmul.f32 %v1356, %v3069
    %v3076 = vadd.f32 %v3028, %v3070
    %v3077 = vadd.f32 %v3029, %v3071
    %v3078 = vadd.f32 %v3030, %v3072
    %v3079 = vadd.f32 %v3031, %v3073
    %v3080 = vadd.f32 %v3032, %v3074
    %v3081 = vadd.f32 %v3033, %v3075
    %v3082 = vadd.f32 %v3076, %v3040
    %v3083 = vadd.f32 %v3077, %v3041
    %v3084 = vadd.f32 %v3078, %v3042
    %v3085 = vadd.f32 %v3079, %v3043
    %v3086 = vadd.f32 %v3080, %v3044
    %v3087 = vadd.f32 %v3081, %v3045
    %v3088 = vsub.f32 %v2325, %v3082
    %v3089 = vsub.f32 %v2395, %v3083
    %v3090 = vsub.f32 %v2465, %v3084
    %v3091 = vsub.f32 %v2535, %v3085
    %v3092 = vsub.f32 %v2605, %v3086
    %v3093 = vsub.f32 %v2675, %v3087
    %v3094 = vrot.slane %v3088, 7
    %v3095 = vrot.slane %v3089, 7
    %v3096 = vrot.slane %v3090, 7
    %v3097 = vrot.slane %v3091, 7
    %v3098 = vrot.slane %v3092, 7
    %v3099 = vrot.slane %v3093, 7
    %v3100 = vsel %vm952, %v3094, 0.0
    %v3101 = vsel %vm952, %v3095, 0.0
    %v3102 = vsel %vm952, %v3096, 0.0
    %v3103 = vsel %vm952, %v3097, 0.0
    %v3104 = vsel %vm952, %v3098, 0.0
    %v3105 = vsel %vm952, %v3099, 0.0
    %v3106 = vrot.slane %v3088, 1
    %v3107 = vrot.slane %v3089, 1
    %v3108 = vrot.slane %v3090, 1
    %v3109 = vrot.slane %v3091, 1
    %v3110 = vrot.slane %v3092, 1
    %v3111 = vrot.slane %v3093, 1
    %v3112 = vsel %vm965, %v3106, 0.0
    %v3113 = vsel %vm965, %v3107, 0.0
    %v3114 = vsel %vm965, %v3108, 0.0
    %v3115 = vsel %vm965, %v3109, 0.0
    %v3116 = vsel %vm965, %v3110, 0.0
    %v3117 = vsel %vm965, %v3111, 0.0
    %3118 = vrot.lane.b32.xlu0 %v3100, 8
    %v3119 = vpop.permute.xlu0 %3118
    %v3120 = vsel %vm2703, %v3119, %v3100
    %3121 = vrot.lane.b32.xlu0 %v3101, 8
    %v3122 = vpop.permute.xlu0 %3121
    %v3123 = vsel %vm2703, %v3122, %v3101
    %3124 = vrot.lane.b32.xlu0 %v3102, 8
    %v3125 = vpop.permute.xlu0 %3124
    %v3126 = vsel %vm2703, %v3125, %v3102
    %3127 = vrot.lane.b32.xlu0 %v3103, 8
    %v3128 = vpop.permute.xlu0 %3127
    %v3129 = vsel %vm2703, %v3128, %v3103
    %3130 = vrot.lane.b32.xlu0 %v3104, 8
    %v3131 = vpop.permute.xlu0 %3130
    %v3132 = vsel %vm2703, %v3131, %v3104
    %3133 = vrot.lane.b32.xlu0 %v3105, 8
    %v3134 = vpop.permute.xlu0 %3133
    %v3135 = vsel %vm2703, %v3134, %v3105
    %3136 = vrot.lane.b32.xlu0 %v3120, 8
    %v3137 = vpop.permute.xlu0 %3136
    %3138 = vrot.lane.b32.xlu0 %v3123, 8
    %v3139 = vpop.permute.xlu0 %3138
    %3140 = vrot.lane.b32.xlu0 %v3126, 8
    %v3141 = vpop.permute.xlu0 %3140
    %3142 = vrot.lane.b32.xlu0 %v3129, 8
    %v3143 = vpop.permute.xlu0 %3142
    %3144 = vrot.lane.b32.xlu0 %v3132, 8
    %v3145 = vpop.permute.xlu0 %3144
    %3146 = vrot.lane.b32.xlu0 %v3135, 8
    %v3147 = vpop.permute.xlu0 %3146
    %v3148 = vsel %vm2703, %v3137, %v3100
    %v3149 = vsel %vm2703, %v3139, %v3101
    %v3150 = vsel %vm2703, %v3141, %v3102
    %v3151 = vsel %vm2703, %v3143, %v3103
    %v3152 = vsel %vm2703, %v3145, %v3104
    %v3153 = vsel %vm2703, %v3147, %v3105
    %3160 = vrot.lane.b32.xlu0 %v3148, 121
    %v3161 = vpop.permute.xlu0 %3160
    %3162 = vrot.lane.b32.xlu0 %v3149, 121
    %v3163 = vpop.permute.xlu0 %3162
    %3164 = vrot.lane.b32.xlu0 %v3150, 121
    %v3165 = vpop.permute.xlu0 %3164
    %3166 = vrot.lane.b32.xlu0 %v3151, 121
    %v3167 = vpop.permute.xlu0 %3166
    %3168 = vrot.lane.b32.xlu0 %v3152, 121
    %v3169 = vpop.permute.xlu0 %3168
    %3170 = vrot.lane.b32.xlu0 %v3153, 121
    %v3171 = vpop.permute.xlu0 %3170
    %v3178 = vsel %vm978, %v3161, 0.0
    %v3179 = vsel %vm978, %v3163, 0.0
    %v3180 = vsel %vm978, %v3165, 0.0
    %v3181 = vsel %vm978, %v3167, 0.0
    %v3182 = vsel %vm978, %v3169, 0.0
    %v3183 = vsel %vm978, %v3171, 0.0
    %v3184 = vmul.f32 %v1472, %v3178
    %v3185 = vmul.f32 %v1472, %v3179
    %v3186 = vmul.f32 %v1472, %v3180
    %v3187 = vmul.f32 %v1472, %v3181
    %v3188 = vmul.f32 %v1472, %v3182
    %v3189 = vmul.f32 %v1472, %v3183
    %v3190 = vadd.f32 %v1405, %v3184
    %v3191 = vadd.f32 %v1405, %v3185
    %v3192 = vadd.f32 %v1405, %v3186
    %v3193 = vadd.f32 %v1405, %v3187
    %v3194 = vadd.f32 %v1405, %v3188
    %v3195 = vadd.f32 %v1405, %v3189
    %v3196 = vmul.f32 %v1601, %v3100
    %v3197 = vmul.f32 %v1601, %v3101
    %v3198 = vmul.f32 %v1601, %v3102
    %v3199 = vmul.f32 %v1601, %v3103
    %v3200 = vmul.f32 %v1601, %v3104
    %v3201 = vmul.f32 %v1601, %v3105
    %v3202 = vadd.f32 %v3196, 0.0
    %v3203 = vadd.f32 %v3197, 0.0
    %v3204 = vadd.f32 %v3198, 0.0
    %v3205 = vadd.f32 %v3199, 0.0
    %v3206 = vadd.f32 %v3200, 0.0
    %v3207 = vadd.f32 %v3201, 0.0
    %3208 = vrot.lane.b32.xlu0 %v3148, 127
    %v3209 = vpop.permute.xlu0 %3208
    %3210 = vrot.lane.b32.xlu0 %v3149, 127
    %v3211 = vpop.permute.xlu0 %3210
    %3212 = vrot.lane.b32.xlu0 %v3150, 127
    %v3213 = vpop.permute.xlu0 %3212
    %3214 = vrot.lane.b32.xlu0 %v3151, 127
    %v3215 = vpop.permute.xlu0 %3214
    %3216 = vrot.lane.b32.xlu0 %v3152, 127
    %v3217 = vpop.permute.xlu0 %3216
    %3218 = vrot.lane.b32.xlu0 %v3153, 127
    %v3219 = vpop.permute.xlu0 %3218
    %v3226 = vsel %vm2702, %v3209, 0.0
    %v3227 = vsel %vm2702, %v3211, 0.0
    %v3228 = vsel %vm2702, %v3213, 0.0
    %v3229 = vsel %vm2702, %v3215, 0.0
    %v3230 = vsel %vm2702, %v3217, 0.0
    %v3231 = vsel %vm2702, %v3219, 0.0
    %v3232 = vmul.f32 %v1730, %v3226
    %v3233 = vmul.f32 %v1730, %v3227
    %v3234 = vmul.f32 %v1730, %v3228
    %v3235 = vmul.f32 %v1730, %v3229
    %v3236 = vmul.f32 %v1730, %v3230
    %v3237 = vmul.f32 %v1730, %v3231
    %v3238 = vadd.f32 %v3190, %v3232
    %v3239 = vadd.f32 %v3191, %v3233
    %v3240 = vadd.f32 %v3192, %v3234
    %v3241 = vadd.f32 %v3193, %v3235
    %v3242 = vadd.f32 %v3194, %v3236
    %v3243 = vadd.f32 %v3195, %v3237
    %3244 = vrot.lane.b32.xlu0 %v3088, 8
    %v3245 = vpop.permute.xlu0 %3244
    %v3246 = vsel %vm2703, %v3245, %v3088
    %3247 = vrot.lane.b32.xlu0 %v3089, 8
    %v3248 = vpop.permute.xlu0 %3247
    %v3249 = vsel %vm2703, %v3248, %v3089
    %3250 = vrot.lane.b32.xlu0 %v3090, 8
    %v3251 = vpop.permute.xlu0 %3250
    %v3252 = vsel %vm2703, %v3251, %v3090
    %3253 = vrot.lane.b32.xlu0 %v3091, 8
    %v3254 = vpop.permute.xlu0 %3253
    %v3255 = vsel %vm2703, %v3254, %v3091
    %3256 = vrot.lane.b32.xlu0 %v3092, 8
    %v3257 = vpop.permute.xlu0 %3256
    %v3258 = vsel %vm2703, %v3257, %v3092
    %3259 = vrot.lane.b32.xlu0 %v3093, 8
    %v3260 = vpop.permute.xlu0 %3259
    %v3261 = vsel %vm2703, %v3260, %v3093
    %3262 = vrot.lane.b32.xlu0 %v3246, 8
    %v3263 = vpop.permute.xlu0 %3262
    %3264 = vrot.lane.b32.xlu0 %v3249, 8
    %v3265 = vpop.permute.xlu0 %3264
    %3266 = vrot.lane.b32.xlu0 %v3252, 8
    %v3267 = vpop.permute.xlu0 %3266
    %3268 = vrot.lane.b32.xlu0 %v3255, 8
    %v3269 = vpop.permute.xlu0 %3268
    %3270 = vrot.lane.b32.xlu0 %v3258, 8
    %v3271 = vpop.permute.xlu0 %3270
    %3272 = vrot.lane.b32.xlu0 %v3261, 8
    %v3273 = vpop.permute.xlu0 %3272
    %v3274 = vsel %vm2703, %v3263, %v3088
    %v3275 = vsel %vm2703, %v3265, %v3089
    %v3276 = vsel %vm2703, %v3267, %v3090
    %v3277 = vsel %vm2703, %v3269, %v3091
    %v3278 = vsel %vm2703, %v3271, %v3092
    %v3279 = vsel %vm2703, %v3273, %v3093
    %3286 = vrot.lane.b32.xlu0 %v3274, 121
    %v3287 = vpop.permute.xlu0 %3286
    %3288 = vrot.lane.b32.xlu0 %v3275, 121
    %v3289 = vpop.permute.xlu0 %3288
    %3290 = vrot.lane.b32.xlu0 %v3276, 121
    %v3291 = vpop.permute.xlu0 %3290
    %3292 = vrot.lane.b32.xlu0 %v3277, 121
    %v3293 = vpop.permute.xlu0 %3292
    %3294 = vrot.lane.b32.xlu0 %v3278, 121
    %v3295 = vpop.permute.xlu0 %3294
    %3296 = vrot.lane.b32.xlu0 %v3279, 121
    %v3297 = vpop.permute.xlu0 %3296
    %v3304 = vsel %vm978, %v3287, 0.0
    %v3305 = vsel %vm978, %v3289, 0.0
    %v3306 = vsel %vm978, %v3291, 0.0
    %v3307 = vsel %vm978, %v3293, 0.0
    %v3308 = vsel %vm978, %v3295, 0.0
    %v3309 = vsel %vm978, %v3297, 0.0
    %v3310 = vmul.f32 %v1485, %v3304
    %v3311 = vmul.f32 %v1485, %v3305
    %v3312 = vmul.f32 %v1485, %v3306
    %v3313 = vmul.f32 %v1485, %v3307
    %v3314 = vmul.f32 %v1485, %v3308
    %v3315 = vmul.f32 %v1485, %v3309
    %v3316 = vadd.f32 %v3202, %v3310
    %v3317 = vadd.f32 %v3203, %v3311
    %v3318 = vadd.f32 %v3204, %v3312
    %v3319 = vadd.f32 %v3205, %v3313
    %v3320 = vadd.f32 %v3206, %v3314
    %v3321 = vadd.f32 %v3207, %v3315
    %v3322 = vmul.f32 %v1614, %v3088
    %v3323 = vmul.f32 %v1614, %v3089
    %v3324 = vmul.f32 %v1614, %v3090
    %v3325 = vmul.f32 %v1614, %v3091
    %v3326 = vmul.f32 %v1614, %v3092
    %v3327 = vmul.f32 %v1614, %v3093
    %v3328 = vadd.f32 %v3238, %v3322
    %v3329 = vadd.f32 %v3239, %v3323
    %v3330 = vadd.f32 %v3240, %v3324
    %v3331 = vadd.f32 %v3241, %v3325
    %v3332 = vadd.f32 %v3242, %v3326
    %v3333 = vadd.f32 %v3243, %v3327
    %3334 = vrot.lane.b32.xlu0 %v3274, 127
    %v3335 = vpop.permute.xlu0 %3334
    %3336 = vrot.lane.b32.xlu0 %v3275, 127
    %v3337 = vpop.permute.xlu0 %3336
    %3338 = vrot.lane.b32.xlu0 %v3276, 127
    %v3339 = vpop.permute.xlu0 %3338
    %3340 = vrot.lane.b32.xlu0 %v3277, 127
    %v3341 = vpop.permute.xlu0 %3340
    %3342 = vrot.lane.b32.xlu0 %v3278, 127
    %v3343 = vpop.permute.xlu0 %3342
    %3344 = vrot.lane.b32.xlu0 %v3279, 127
    %v3345 = vpop.permute.xlu0 %3344
    %v3352 = vsel %vm2702, %v3335, 0.0
    %v3353 = vsel %vm2702, %v3337, 0.0
    %v3354 = vsel %vm2702, %v3339, 0.0
    %v3355 = vsel %vm2702, %v3341, 0.0
    %v3356 = vsel %vm2702, %v3343, 0.0
    %v3357 = vsel %vm2702, %v3345, 0.0
    %v3358 = vmul.f32 %v1743, %v3352
    %v3359 = vmul.f32 %v1743, %v3353
    %v3360 = vmul.f32 %v1743, %v3354
    %v3361 = vmul.f32 %v1743, %v3355
    %v3362 = vmul.f32 %v1743, %v3356
    %v3363 = vmul.f32 %v1743, %v3357
    %v3364 = vadd.f32 %v3316, %v3358
    %v3365 = vadd.f32 %v3317, %v3359
    %v3366 = vadd.f32 %v3318, %v3360
    %v3367 = vadd.f32 %v3319, %v3361
    %v3368 = vadd.f32 %v3320, %v3362
    %v3369 = vadd.f32 %v3321, %v3363
    %3370 = vrot.lane.b32.xlu0 %v3112, 8
    %v3371 = vpop.permute.xlu0 %3370
    %v3372 = vsel %vm2703, %v3371, %v3112
    %3373 = vrot.lane.b32.xlu0 %v3113, 8
    %v3374 = vpop.permute.xlu0 %3373
    %v3375 = vsel %vm2703, %v3374, %v3113
    %3376 = vrot.lane.b32.xlu0 %v3114, 8
    %v3377 = vpop.permute.xlu0 %3376
    %v3378 = vsel %vm2703, %v3377, %v3114
    %3379 = vrot.lane.b32.xlu0 %v3115, 8
    %v3380 = vpop.permute.xlu0 %3379
    %v3381 = vsel %vm2703, %v3380, %v3115
    %3382 = vrot.lane.b32.xlu0 %v3116, 8
    %v3383 = vpop.permute.xlu0 %3382
    %v3384 = vsel %vm2703, %v3383, %v3116
    %3385 = vrot.lane.b32.xlu0 %v3117, 8
    %v3386 = vpop.permute.xlu0 %3385
    %v3387 = vsel %vm2703, %v3386, %v3117
    %3388 = vrot.lane.b32.xlu0 %v3372, 8
    %v3389 = vpop.permute.xlu0 %3388
    %3390 = vrot.lane.b32.xlu0 %v3375, 8
    %v3391 = vpop.permute.xlu0 %3390
    %3392 = vrot.lane.b32.xlu0 %v3378, 8
    %v3393 = vpop.permute.xlu0 %3392
    %3394 = vrot.lane.b32.xlu0 %v3381, 8
    %v3395 = vpop.permute.xlu0 %3394
    %3396 = vrot.lane.b32.xlu0 %v3384, 8
    %v3397 = vpop.permute.xlu0 %3396
    %3398 = vrot.lane.b32.xlu0 %v3387, 8
    %v3399 = vpop.permute.xlu0 %3398
    %v3400 = vsel %vm2703, %v3389, %v3112
    %v3401 = vsel %vm2703, %v3391, %v3113
    %v3402 = vsel %vm2703, %v3393, %v3114
    %v3403 = vsel %vm2703, %v3395, %v3115
    %v3404 = vsel %vm2703, %v3397, %v3116
    %v3405 = vsel %vm2703, %v3399, %v3117
    %3412 = vrot.lane.b32.xlu0 %v3400, 121
    %v3413 = vpop.permute.xlu0 %3412
    %3414 = vrot.lane.b32.xlu0 %v3401, 121
    %v3415 = vpop.permute.xlu0 %3414
    %3416 = vrot.lane.b32.xlu0 %v3402, 121
    %v3417 = vpop.permute.xlu0 %3416
    %3418 = vrot.lane.b32.xlu0 %v3403, 121
    %v3419 = vpop.permute.xlu0 %3418
    %3420 = vrot.lane.b32.xlu0 %v3404, 121
    %v3421 = vpop.permute.xlu0 %3420
    %3422 = vrot.lane.b32.xlu0 %v3405, 121
    %v3423 = vpop.permute.xlu0 %3422
    %v3430 = vsel %vm978, %v3413, 0.0
    %v3431 = vsel %vm978, %v3415, 0.0
    %v3432 = vsel %vm978, %v3417, 0.0
    %v3433 = vsel %vm978, %v3419, 0.0
    %v3434 = vsel %vm978, %v3421, 0.0
    %v3435 = vsel %vm978, %v3423, 0.0
    %v3436 = vmul.f32 %v1522, %v3430
    %v3437 = vmul.f32 %v1522, %v3431
    %v3438 = vmul.f32 %v1522, %v3432
    %v3439 = vmul.f32 %v1522, %v3433
    %v3440 = vmul.f32 %v1522, %v3434
    %v3441 = vmul.f32 %v1522, %v3435
    %v3442 = vadd.f32 %v3328, %v3436
    %v3443 = vadd.f32 %v3329, %v3437
    %v3444 = vadd.f32 %v3330, %v3438
    %v3445 = vadd.f32 %v3331, %v3439
    %v3446 = vadd.f32 %v3332, %v3440
    %v3447 = vadd.f32 %v3333, %v3441
    %v3448 = vmul.f32 %v1651, %v3112
    %v3449 = vmul.f32 %v1651, %v3113
    %v3450 = vmul.f32 %v1651, %v3114
    %v3451 = vmul.f32 %v1651, %v3115
    %v3452 = vmul.f32 %v1651, %v3116
    %v3453 = vmul.f32 %v1651, %v3117
    %v3454 = vadd.f32 %v3364, %v3448
    %v3455 = vadd.f32 %v3365, %v3449
    %v3456 = vadd.f32 %v3366, %v3450
    %v3457 = vadd.f32 %v3367, %v3451
    %v3458 = vadd.f32 %v3368, %v3452
    %v3459 = vadd.f32 %v3369, %v3453
    %3460 = vrot.lane.b32.xlu0 %v3400, 127
    %v3461 = vpop.permute.xlu0 %3460
    %3462 = vrot.lane.b32.xlu0 %v3401, 127
    %v3463 = vpop.permute.xlu0 %3462
    %3464 = vrot.lane.b32.xlu0 %v3402, 127
    %v3465 = vpop.permute.xlu0 %3464
    %3466 = vrot.lane.b32.xlu0 %v3403, 127
    %v3467 = vpop.permute.xlu0 %3466
    %3468 = vrot.lane.b32.xlu0 %v3404, 127
    %v3469 = vpop.permute.xlu0 %3468
    %3470 = vrot.lane.b32.xlu0 %v3405, 127
    %v3471 = vpop.permute.xlu0 %3470
    %v3478 = vsel %vm2702, %v3461, 0.0
    %v3479 = vsel %vm2702, %v3463, 0.0
    %v3480 = vsel %vm2702, %v3465, 0.0
    %v3481 = vsel %vm2702, %v3467, 0.0
    %v3482 = vsel %vm2702, %v3469, 0.0
    %v3483 = vsel %vm2702, %v3471, 0.0
    %v3484 = vmul.f32 %v1780, %v3478
    %v3485 = vmul.f32 %v1780, %v3479
    %v3486 = vmul.f32 %v1780, %v3480
    %v3487 = vmul.f32 %v1780, %v3481
    %v3488 = vmul.f32 %v1780, %v3482
    %v3489 = vmul.f32 %v1780, %v3483
    %v3490 = vadd.f32 %v3442, %v3484
    %v3491 = vadd.f32 %v3443, %v3485
    %v3492 = vadd.f32 %v3444, %v3486
    %v3493 = vadd.f32 %v3445, %v3487
    %v3494 = vadd.f32 %v3446, %v3488
    %v3495 = vadd.f32 %v3447, %v3489
    %v3496 = vadd.f32 %v3490, %v3454
    %v3497 = vadd.f32 %v3491, %v3455
    %v3498 = vadd.f32 %v3492, %v3456
    %v3499 = vadd.f32 %v3493, %v3457
    %v3500 = vadd.f32 %v3494, %v3458
    %v3501 = vadd.f32 %v3495, %v3459
    %v3502 = vadd.f32 %v1890, %v3496
    %v3503 = vadd.f32 %v1963, %v3497
    %v3504 = vadd.f32 %v2036, %v3498
    %v3505 = vadd.f32 %v2109, %v3499
    %v3506 = vadd.f32 %v2182, %v3500
    %v3507 = vadd.f32 %v2255, %v3501
    %v3509 = vsel %vm105, %v1375, 0
    %3511 = vmatprep.subr.mxu0 0.0
    %3512 = vmatpush1.msra.mxu0 %v1811
    %3513 = vmatprep.subr.mxu0 0.0
    %3514 = vmatpush1.msra.mxu0 %v1812
    %3515 = vmatprep.subr.mxu0 0.0
    %3516 = vmatpush1.msra.mxu0 0.0
    %3517 = vmatprep.subr.mxu0 0.0
    %3518 = vmatpush1.msra.mxu0 0.0
    %3519 = vmatprep.subr.mxu0 0.0
    %3520 = vmatpush1.msra.mxu0 0.0
    %3521 = vmatprep.subr.mxu0 0.0
    %3522 = vmatpush1.msra.mxu0 0.0
    %3523 = vmatprep.subr.mxu0 0.0
    %3524 = vmatpush1.msra.mxu0 0.0
    %3525 = vmatprep.subr.mxu0 0.0
    %3526 = vmatpush1.msra.mxu0 0.0
    %3527 = vmatprep.subr.mxu0 0.0
    %3528 = vmatpush1.msra.mxu0 0.0
    %3529 = vmatprep.subr.mxu0 0.0
    %3530 = vmatpush1.msra.mxu0 0.0
    %3531 = vmatprep.subr.mxu0 0.0
    %3532 = vmatpush1.msra.mxu0 0.0
    %3533 = vmatprep.subr.mxu0 0.0
    %3534 = vmatpush1.msra.mxu0 0.0
    %3535 = vmatprep.subr.mxu0 0.0
    %3536 = vmatpush1.msra.mxu0 0.0
    %3537 = vmatprep.subr.mxu0 0.0
    %3538 = vmatpush1.msra.mxu0 0.0
    %3539 = vmatprep.subr.mxu0 0.0
    %3540 = vmatpush1.msra.mxu0 0.0
    %3541 = vmatprep.subr.mxu0 0.0
    %3542 = vmatpush1.msra.mxu0 0.0
    %3543 = vmatprep.subr.mxu0 0.0
    %3544 = vmatpush1.msra.mxu0 0.0
    %3545 = vmatprep.subr.mxu0 0.0
    %3546 = vmatpush1.msra.mxu0 0.0
    %3547 = vmatprep.subr.mxu0 0.0
    %3548 = vmatpush1.msra.mxu0 0.0
    %3549 = vmatprep.subr.mxu0 0.0
    %3550 = vmatpush1.msra.mxu0 0.0
    %3551 = vmatprep.subr.mxu0 0.0
    %3552 = vmatpush1.msra.mxu0 0.0
    %3553 = vmatprep.subr.mxu0 0.0
    %3554 = vmatpush1.msra.mxu0 0.0
    %3555 = vmatprep.subr.mxu0 0.0
    %3556 = vmatpush1.msra.mxu0 0.0
    %3557 = vmatprep.subr.mxu0 0.0
    %3558 = vmatpush1.msra.mxu0 0.0
    %3559 = vmatprep.subr.mxu0 0.0
    %3560 = vmatpush1.msra.mxu0 0.0
    %3561 = vmatprep.subr.mxu0 0.0
    %3562 = vmatpush1.msra.mxu0 0.0
    %3563 = vmatprep.subr.mxu0 0.0
    %3564 = vmatpush1.msra.mxu0 0.0
    %3565 = vmatprep.subr.mxu0 0.0
    %3566 = vmatpush1.msra.mxu0 0.0
    %3567 = vmatprep.subr.mxu0 0.0
    %3568 = vmatpush1.msra.mxu0 0.0
    %3569 = vmatprep.subr.mxu0 0.0
    %3570 = vmatpush1.msra.mxu0 0.0
    %3571 = vmatprep.subr.mxu0 0.0
    %3572 = vmatpush1.msra.mxu0 0.0
    %3573 = vmatprep.subr.mxu0 0.0
    %3574 = vmatpush1.msra.mxu0 0.0
    %3575 = vmatprep.mubr.f32.mxu0 0.0
    %3576 = vmatmul.mubr.f32.gmra.mrb[0].mxu0 %v3509
    %v3577 = vpop.f32.mrb[0].mxu0
    %v3578 = vadd.f32 0.0, %v3577
    %v3579 = vpop.f32.mrb[0].mxu0
    %3580 = vdwg.mxu0
    %v3582 = vsel %vm105, %v1376, 0
    %3584 = vmatprep.subr.mxu0 0.0
    %3585 = vmatpush1.msra.mxu0 %v1811
    %3586 = vmatprep.subr.mxu0 0.0
    %3587 = vmatpush1.msra.mxu0 %v1812
    %3588 = vmatprep.subr.mxu0 0.0
    %3589 = vmatpush1.msra.mxu0 0.0
    %3590 = vmatprep.subr.mxu0 0.0
    %3591 = vmatpush1.msra.mxu0 0.0
    %3592 = vmatprep.subr.mxu0 0.0
    %3593 = vmatpush1.msra.mxu0 0.0
    %3594 = vmatprep.subr.mxu0 0.0
    %3595 = vmatpush1.msra.mxu0 0.0
    %3596 = vmatprep.subr.mxu0 0.0
    %3597 = vmatpush1.msra.mxu0 0.0
    %3598 = vmatprep.subr.mxu0 0.0
    %3599 = vmatpush1.msra.mxu0 0.0
    %3600 = vmatprep.subr.mxu0 0.0
    %3601 = vmatpush1.msra.mxu0 0.0
    %3602 = vmatprep.subr.mxu0 0.0
    %3603 = vmatpush1.msra.mxu0 0.0
    %3604 = vmatprep.subr.mxu0 0.0
    %3605 = vmatpush1.msra.mxu0 0.0
    %3606 = vmatprep.subr.mxu0 0.0
    %3607 = vmatpush1.msra.mxu0 0.0
    %3608 = vmatprep.subr.mxu0 0.0
    %3609 = vmatpush1.msra.mxu0 0.0
    %3610 = vmatprep.subr.mxu0 0.0
    %3611 = vmatpush1.msra.mxu0 0.0
    %3612 = vmatprep.subr.mxu0 0.0
    %3613 = vmatpush1.msra.mxu0 0.0
    %3614 = vmatprep.subr.mxu0 0.0
    %3615 = vmatpush1.msra.mxu0 0.0
    %3616 = vmatprep.subr.mxu0 0.0
    %3617 = vmatpush1.msra.mxu0 0.0
    %3618 = vmatprep.subr.mxu0 0.0
    %3619 = vmatpush1.msra.mxu0 0.0
    %3620 = vmatprep.subr.mxu0 0.0
    %3621 = vmatpush1.msra.mxu0 0.0
    %3622 = vmatprep.subr.mxu0 0.0
    %3623 = vmatpush1.msra.mxu0 0.0
    %3624 = vmatprep.subr.mxu0 0.0
    %3625 = vmatpush1.msra.mxu0 0.0
    %3626 = vmatprep.subr.mxu0 0.0
    %3627 = vmatpush1.msra.mxu0 0.0
    %3628 = vmatprep.subr.mxu0 0.0
    %3629 = vmatpush1.msra.mxu0 0.0
    %3630 = vmatprep.subr.mxu0 0.0
    %3631 = vmatpush1.msra.mxu0 0.0
    %3632 = vmatprep.subr.mxu0 0.0
    %3633 = vmatpush1.msra.mxu0 0.0
    %3634 = vmatprep.subr.mxu0 0.0
    %3635 = vmatpush1.msra.mxu0 0.0
    %3636 = vmatprep.subr.mxu0 0.0
    %3637 = vmatpush1.msra.mxu0 0.0
    %3638 = vmatprep.subr.mxu0 0.0
    %3639 = vmatpush1.msra.mxu0 0.0
    %3640 = vmatprep.subr.mxu0 0.0
    %3641 = vmatpush1.msra.mxu0 0.0
    %3642 = vmatprep.subr.mxu0 0.0
    %3643 = vmatpush1.msra.mxu0 0.0
    %3644 = vmatprep.subr.mxu0 0.0
    %3645 = vmatpush1.msra.mxu0 0.0
    %3646 = vmatprep.subr.mxu0 0.0
    %3647 = vmatpush1.msra.mxu0 0.0
    %3648 = vmatprep.mubr.f32.mxu0 0.0
    %3649 = vmatmul.mubr.f32.gmra.mrb[0].mxu0 %v3582
    %v3650 = vpop.f32.mrb[0].mxu0
    %v3651 = vadd.f32 0.0, %v3650
    %v3652 = vpop.f32.mrb[0].mxu0
    %3653 = vdwg.mxu0
    %v3655 = vsel %vm105, %v1377, 0
    %3657 = vmatprep.subr.mxu0 0.0
    %3658 = vmatpush1.msra.mxu0 %v1811
    %3659 = vmatprep.subr.mxu0 0.0
    %3660 = vmatpush1.msra.mxu0 %v1812
    %3661 = vmatprep.subr.mxu0 0.0
    %3662 = vmatpush1.msra.mxu0 0.0
    %3663 = vmatprep.subr.mxu0 0.0
    %3664 = vmatpush1.msra.mxu0 0.0
    %3665 = vmatprep.subr.mxu0 0.0
    %3666 = vmatpush1.msra.mxu0 0.0
    %3667 = vmatprep.subr.mxu0 0.0
    %3668 = vmatpush1.msra.mxu0 0.0
    %3669 = vmatprep.subr.mxu0 0.0
    %3670 = vmatpush1.msra.mxu0 0.0
    %3671 = vmatprep.subr.mxu0 0.0
    %3672 = vmatpush1.msra.mxu0 0.0
    %3673 = vmatprep.subr.mxu0 0.0
    %3674 = vmatpush1.msra.mxu0 0.0
    %3675 = vmatprep.subr.mxu0 0.0
    %3676 = vmatpush1.msra.mxu0 0.0
    %3677 = vmatprep.subr.mxu0 0.0
    %3678 = vmatpush1.msra.mxu0 0.0
    %3679 = vmatprep.subr.mxu0 0.0
    %3680 = vmatpush1.msra.mxu0 0.0
    %3681 = vmatprep.subr.mxu0 0.0
    %3682 = vmatpush1.msra.mxu0 0.0
    %3683 = vmatprep.subr.mxu0 0.0
    %3684 = vmatpush1.msra.mxu0 0.0
    %3685 = vmatprep.subr.mxu0 0.0
    %3686 = vmatpush1.msra.mxu0 0.0
    %3687 = vmatprep.subr.mxu0 0.0
    %3688 = vmatpush1.msra.mxu0 0.0
    %3689 = vmatprep.subr.mxu0 0.0
    %3690 = vmatpush1.msra.mxu0 0.0
    %3691 = vmatprep.subr.mxu0 0.0
    %3692 = vmatpush1.msra.mxu0 0.0
    %3693 = vmatprep.subr.mxu0 0.0
    %3694 = vmatpush1.msra.mxu0 0.0
    %3695 = vmatprep.subr.mxu0 0.0
    %3696 = vmatpush1.msra.mxu0 0.0
    %3697 = vmatprep.subr.mxu0 0.0
    %3698 = vmatpush1.msra.mxu0 0.0
    %3699 = vmatprep.subr.mxu0 0.0
    %3700 = vmatpush1.msra.mxu0 0.0
    %3701 = vmatprep.subr.mxu0 0.0
    %3702 = vmatpush1.msra.mxu0 0.0
    %3703 = vmatprep.subr.mxu0 0.0
    %3704 = vmatpush1.msra.mxu0 0.0
    %3705 = vmatprep.subr.mxu0 0.0
    %3706 = vmatpush1.msra.mxu0 0.0
    %3707 = vmatprep.subr.mxu0 0.0
    %3708 = vmatpush1.msra.mxu0 0.0
    %3709 = vmatprep.subr.mxu0 0.0
    %3710 = vmatpush1.msra.mxu0 0.0
    %3711 = vmatprep.subr.mxu0 0.0
    %3712 = vmatpush1.msra.mxu0 0.0
    %3713 = vmatprep.subr.mxu0 0.0
    %3714 = vmatpush1.msra.mxu0 0.0
    %3715 = vmatprep.subr.mxu0 0.0
    %3716 = vmatpush1.msra.mxu0 0.0
    %3717 = vmatprep.subr.mxu0 0.0
    %3718 = vmatpush1.msra.mxu0 0.0
    %3719 = vmatprep.subr.mxu0 0.0
    %3720 = vmatpush1.msra.mxu0 0.0
    %3721 = vmatprep.mubr.f32.mxu0 0.0
    %3722 = vmatmul.mubr.f32.gmra.mrb[0].mxu0 %v3655
    %v3723 = vpop.f32.mrb[0].mxu0
    %v3724 = vadd.f32 0.0, %v3723
    %v3725 = vpop.f32.mrb[0].mxu0
    %3726 = vdwg.mxu0
    %v3728 = vsel %vm105, %v1378, 0
    %3730 = vmatprep.subr.mxu0 0.0
    %3731 = vmatpush1.msra.mxu0 %v1811
    %3732 = vmatprep.subr.mxu0 0.0
    %3733 = vmatpush1.msra.mxu0 %v1812
    %3734 = vmatprep.subr.mxu0 0.0
    %3735 = vmatpush1.msra.mxu0 0.0
    %3736 = vmatprep.subr.mxu0 0.0
    %3737 = vmatpush1.msra.mxu0 0.0
    %3738 = vmatprep.subr.mxu0 0.0
    %3739 = vmatpush1.msra.mxu0 0.0
    %3740 = vmatprep.subr.mxu0 0.0
    %3741 = vmatpush1.msra.mxu0 0.0
    %3742 = vmatprep.subr.mxu0 0.0
    %3743 = vmatpush1.msra.mxu0 0.0
    %3744 = vmatprep.subr.mxu0 0.0
    %3745 = vmatpush1.msra.mxu0 0.0
    %3746 = vmatprep.subr.mxu0 0.0
    %3747 = vmatpush1.msra.mxu0 0.0
    %3748 = vmatprep.subr.mxu0 0.0
    %3749 = vmatpush1.msra.mxu0 0.0
    %3750 = vmatprep.subr.mxu0 0.0
    %3751 = vmatpush1.msra.mxu0 0.0
    %3752 = vmatprep.subr.mxu0 0.0
    %3753 = vmatpush1.msra.mxu0 0.0
    %3754 = vmatprep.subr.mxu0 0.0
    %3755 = vmatpush1.msra.mxu0 0.0
    %3756 = vmatprep.subr.mxu0 0.0
    %3757 = vmatpush1.msra.mxu0 0.0
    %3758 = vmatprep.subr.mxu0 0.0
    %3759 = vmatpush1.msra.mxu0 0.0
    %3760 = vmatprep.subr.mxu0 0.0
    %3761 = vmatpush1.msra.mxu0 0.0
    %3762 = vmatprep.subr.mxu0 0.0
    %3763 = vmatpush1.msra.mxu0 0.0
    %3764 = vmatprep.subr.mxu0 0.0
    %3765 = vmatpush1.msra.mxu0 0.0
    %3766 = vmatprep.subr.mxu0 0.0
    %3767 = vmatpush1.msra.mxu0 0.0
    %3768 = vmatprep.subr.mxu0 0.0
    %3769 = vmatpush1.msra.mxu0 0.0
    %3770 = vmatprep.subr.mxu0 0.0
    %3771 = vmatpush1.msra.mxu0 0.0
    %3772 = vmatprep.subr.mxu0 0.0
    %3773 = vmatpush1.msra.mxu0 0.0
    %3774 = vmatprep.subr.mxu0 0.0
    %3775 = vmatpush1.msra.mxu0 0.0
    %3776 = vmatprep.subr.mxu0 0.0
    %3777 = vmatpush1.msra.mxu0 0.0
    %3778 = vmatprep.subr.mxu0 0.0
    %3779 = vmatpush1.msra.mxu0 0.0
    %3780 = vmatprep.subr.mxu0 0.0
    %3781 = vmatpush1.msra.mxu0 0.0
    %3782 = vmatprep.subr.mxu0 0.0
    %3783 = vmatpush1.msra.mxu0 0.0
    %3784 = vmatprep.subr.mxu0 0.0
    %3785 = vmatpush1.msra.mxu0 0.0
    %3786 = vmatprep.subr.mxu0 0.0
    %3787 = vmatpush1.msra.mxu0 0.0
    %3788 = vmatprep.subr.mxu0 0.0
    %3789 = vmatpush1.msra.mxu0 0.0
    %3790 = vmatprep.subr.mxu0 0.0
    %3791 = vmatpush1.msra.mxu0 0.0
    %3792 = vmatprep.subr.mxu0 0.0
    %3793 = vmatpush1.msra.mxu0 0.0
    %3794 = vmatprep.mubr.f32.mxu0 0.0
    %3795 = vmatmul.mubr.f32.gmra.mrb[0].mxu0 %v3728
    %v3796 = vpop.f32.mrb[0].mxu0
    %v3797 = vadd.f32 0.0, %v3796
    %v3798 = vpop.f32.mrb[0].mxu0
    %3799 = vdwg.mxu0
    %v3801 = vsel %vm105, %v1379, 0
    %3803 = vmatprep.subr.mxu0 0.0
    %3804 = vmatpush1.msra.mxu0 %v1811
    %3805 = vmatprep.subr.mxu0 0.0
    %3806 = vmatpush1.msra.mxu0 %v1812
    %3807 = vmatprep.subr.mxu0 0.0
    %3808 = vmatpush1.msra.mxu0 0.0
    %3809 = vmatprep.subr.mxu0 0.0
    %3810 = vmatpush1.msra.mxu0 0.0
    %3811 = vmatprep.subr.mxu0 0.0
    %3812 = vmatpush1.msra.mxu0 0.0
    %3813 = vmatprep.subr.mxu0 0.0
    %3814 = vmatpush1.msra.mxu0 0.0
    %3815 = vmatprep.subr.mxu0 0.0
    %3816 = vmatpush1.msra.mxu0 0.0
    %3817 = vmatprep.subr.mxu0 0.0
    %3818 = vmatpush1.msra.mxu0 0.0
    %3819 = vmatprep.subr.mxu0 0.0
    %3820 = vmatpush1.msra.mxu0 0.0
    %3821 = vmatprep.subr.mxu0 0.0
    %3822 = vmatpush1.msra.mxu0 0.0
    %3823 = vmatprep.subr.mxu0 0.0
    %3824 = vmatpush1.msra.mxu0 0.0
    %3825 = vmatprep.subr.mxu0 0.0
    %3826 = vmatpush1.msra.mxu0 0.0
    %3827 = vmatprep.subr.mxu0 0.0
    %3828 = vmatpush1.msra.mxu0 0.0
    %3829 = vmatprep.subr.mxu0 0.0
    %3830 = vmatpush1.msra.mxu0 0.0
    %3831 = vmatprep.subr.mxu0 0.0
    %3832 = vmatpush1.msra.mxu0 0.0
    %3833 = vmatprep.subr.mxu0 0.0
    %3834 = vmatpush1.msra.mxu0 0.0
    %3835 = vmatprep.subr.mxu0 0.0
    %3836 = vmatpush1.msra.mxu0 0.0
    %3837 = vmatprep.subr.mxu0 0.0
    %3838 = vmatpush1.msra.mxu0 0.0
    %3839 = vmatprep.subr.mxu0 0.0
    %3840 = vmatpush1.msra.mxu0 0.0
    %3841 = vmatprep.subr.mxu0 0.0
    %3842 = vmatpush1.msra.mxu0 0.0
    %3843 = vmatprep.subr.mxu0 0.0
    %3844 = vmatpush1.msra.mxu0 0.0
    %3845 = vmatprep.subr.mxu0 0.0
    %3846 = vmatpush1.msra.mxu0 0.0
    %3847 = vmatprep.subr.mxu0 0.0
    %3848 = vmatpush1.msra.mxu0 0.0
    %3849 = vmatprep.subr.mxu0 0.0
    %3850 = vmatpush1.msra.mxu0 0.0
    %3851 = vmatprep.subr.mxu0 0.0
    %3852 = vmatpush1.msra.mxu0 0.0
    %3853 = vmatprep.subr.mxu0 0.0
    %3854 = vmatpush1.msra.mxu0 0.0
    %3855 = vmatprep.subr.mxu0 0.0
    %3856 = vmatpush1.msra.mxu0 0.0
    %3857 = vmatprep.subr.mxu0 0.0
    %3858 = vmatpush1.msra.mxu0 0.0
    %3859 = vmatprep.subr.mxu0 0.0
    %3860 = vmatpush1.msra.mxu0 0.0
    %3861 = vmatprep.subr.mxu0 0.0
    %3862 = vmatpush1.msra.mxu0 0.0
    %3863 = vmatprep.subr.mxu0 0.0
    %3864 = vmatpush1.msra.mxu0 0.0
    %3865 = vmatprep.subr.mxu0 0.0
    %3866 = vmatpush1.msra.mxu0 0.0
    %3867 = vmatprep.mubr.f32.mxu0 0.0
    %3868 = vmatmul.mubr.f32.gmra.mrb[0].mxu0 %v3801
    %v3869 = vpop.f32.mrb[0].mxu0
    %v3870 = vadd.f32 0.0, %v3869
    %v3871 = vpop.f32.mrb[0].mxu0
    %3872 = vdwg.mxu0
    %v3874 = vsel %vm105, %v1380, 0
    %3876 = vmatprep.subr.mxu0 0.0
    %3877 = vmatpush1.msra.mxu0 %v1811
    %3878 = vmatprep.subr.mxu0 0.0
    %3879 = vmatpush1.msra.mxu0 %v1812
    %3880 = vmatprep.subr.mxu0 0.0
    %3881 = vmatpush1.msra.mxu0 0.0
    %3882 = vmatprep.subr.mxu0 0.0
    %3883 = vmatpush1.msra.mxu0 0.0
    %3884 = vmatprep.subr.mxu0 0.0
    %3885 = vmatpush1.msra.mxu0 0.0
    %3886 = vmatprep.subr.mxu0 0.0
    %3887 = vmatpush1.msra.mxu0 0.0
    %3888 = vmatprep.subr.mxu0 0.0
    %3889 = vmatpush1.msra.mxu0 0.0
    %3890 = vmatprep.subr.mxu0 0.0
    %3891 = vmatpush1.msra.mxu0 0.0
    %3892 = vmatprep.subr.mxu0 0.0
    %3893 = vmatpush1.msra.mxu0 0.0
    %3894 = vmatprep.subr.mxu0 0.0
    %3895 = vmatpush1.msra.mxu0 0.0
    %3896 = vmatprep.subr.mxu0 0.0
    %3897 = vmatpush1.msra.mxu0 0.0
    %3898 = vmatprep.subr.mxu0 0.0
    %3899 = vmatpush1.msra.mxu0 0.0
    %3900 = vmatprep.subr.mxu0 0.0
    %3901 = vmatpush1.msra.mxu0 0.0
    %3902 = vmatprep.subr.mxu0 0.0
    %3903 = vmatpush1.msra.mxu0 0.0
    %3904 = vmatprep.subr.mxu0 0.0
    %3905 = vmatpush1.msra.mxu0 0.0
    %3906 = vmatprep.subr.mxu0 0.0
    %3907 = vmatpush1.msra.mxu0 0.0
    %3908 = vmatprep.subr.mxu0 0.0
    %3909 = vmatpush1.msra.mxu0 0.0
    %3910 = vmatprep.subr.mxu0 0.0
    %3911 = vmatpush1.msra.mxu0 0.0
    %3912 = vmatprep.subr.mxu0 0.0
    %3913 = vmatpush1.msra.mxu0 0.0
    %3914 = vmatprep.subr.mxu0 0.0
    %3915 = vmatpush1.msra.mxu0 0.0
    %3916 = vmatprep.subr.mxu0 0.0
    %3917 = vmatpush1.msra.mxu0 0.0
    %3918 = vmatprep.subr.mxu0 0.0
    %3919 = vmatpush1.msra.mxu0 0.0
    %3920 = vmatprep.subr.mxu0 0.0
    %3921 = vmatpush1.msra.mxu0 0.0
    %3922 = vmatprep.subr.mxu0 0.0
    %3923 = vmatpush1.msra.mxu0 0.0
    %3924 = vmatprep.subr.mxu0 0.0
    %3925 = vmatpush1.msra.mxu0 0.0
    %3926 = vmatprep.subr.mxu0 0.0
    %3927 = vmatpush1.msra.mxu0 0.0
    %3928 = vmatprep.subr.mxu0 0.0
    %3929 = vmatpush1.msra.mxu0 0.0
    %3930 = vmatprep.subr.mxu0 0.0
    %3931 = vmatpush1.msra.mxu0 0.0
    %3932 = vmatprep.subr.mxu0 0.0
    %3933 = vmatpush1.msra.mxu0 0.0
    %3934 = vmatprep.subr.mxu0 0.0
    %3935 = vmatpush1.msra.mxu0 0.0
    %3936 = vmatprep.subr.mxu0 0.0
    %3937 = vmatpush1.msra.mxu0 0.0
    %3938 = vmatprep.subr.mxu0 0.0
    %3939 = vmatpush1.msra.mxu0 0.0
    %3940 = vmatprep.mubr.f32.mxu0 0.0
    %3941 = vmatmul.mubr.f32.gmra.mrb[0].mxu0 %v3874
    %v3942 = vpop.f32.mrb[0].mxu0
    %v3943 = vadd.f32 0.0, %v3942
    %v3944 = vpop.f32.mrb[0].mxu0
    %3945 = vdwg.mxu0
    %3946 = vmatprep.subr.mxu0 0.0
    %3947 = vmatpush1.msra.mxu0 %v1818
    %3948 = vmatprep.subr.mxu0 0.0
    %3949 = vmatpush1.msra.mxu0 %v1819
    %3950 = vmatprep.subr.mxu0 0.0
    %3951 = vmatpush1.msra.mxu0 0.0
    %3952 = vmatprep.subr.mxu0 0.0
    %3953 = vmatpush1.msra.mxu0 0.0
    %3954 = vmatprep.subr.mxu0 0.0
    %3955 = vmatpush1.msra.mxu0 0.0
    %3956 = vmatprep.subr.mxu0 0.0
    %3957 = vmatpush1.msra.mxu0 0.0
    %3958 = vmatprep.subr.mxu0 0.0
    %3959 = vmatpush1.msra.mxu0 0.0
    %3960 = vmatprep.subr.mxu0 0.0
    %3961 = vmatpush1.msra.mxu0 0.0
    %3962 = vmatprep.subr.mxu0 0.0
    %3963 = vmatpush1.msra.mxu0 0.0
    %3964 = vmatprep.subr.mxu0 0.0
    %3965 = vmatpush1.msra.mxu0 0.0
    %3966 = vmatprep.subr.mxu0 0.0
    %3967 = vmatpush1.msra.mxu0 0.0
    %3968 = vmatprep.subr.mxu0 0.0
    %3969 = vmatpush1.msra.mxu0 0.0
    %3970 = vmatprep.subr.mxu0 0.0
    %3971 = vmatpush1.msra.mxu0 0.0
    %3972 = vmatprep.subr.mxu0 0.0
    %3973 = vmatpush1.msra.mxu0 0.0
    %3974 = vmatprep.subr.mxu0 0.0
    %3975 = vmatpush1.msra.mxu0 0.0
    %3976 = vmatprep.subr.mxu0 0.0
    %3977 = vmatpush1.msra.mxu0 0.0
    %3978 = vmatprep.subr.mxu0 0.0
    %3979 = vmatpush1.msra.mxu0 0.0
    %3980 = vmatprep.subr.mxu0 0.0
    %3981 = vmatpush1.msra.mxu0 0.0
    %3982 = vmatprep.subr.mxu0 0.0
    %3983 = vmatpush1.msra.mxu0 0.0
    %3984 = vmatprep.subr.mxu0 0.0
    %3985 = vmatpush1.msra.mxu0 0.0
    %3986 = vmatprep.subr.mxu0 0.0
    %3987 = vmatpush1.msra.mxu0 0.0
    %3988 = vmatprep.subr.mxu0 0.0
    %3989 = vmatpush1.msra.mxu0 0.0
    %3990 = vmatprep.subr.mxu0 0.0
    %3991 = vmatpush1.msra.mxu0 0.0
    %3992 = vmatprep.subr.mxu0 0.0
    %3993 = vmatpush1.msra.mxu0 0.0
    %3994 = vmatprep.subr.mxu0 0.0
    %3995 = vmatpush1.msra.mxu0 0.0
    %3996 = vmatprep.subr.mxu0 0.0
    %3997 = vmatpush1.msra.mxu0 0.0
    %3998 = vmatprep.subr.mxu0 0.0
    %3999 = vmatpush1.msra.mxu0 0.0
    %4000 = vmatprep.subr.mxu0 0.0
    %4001 = vmatpush1.msra.mxu0 0.0
    %4002 = vmatprep.subr.mxu0 0.0
    %4003 = vmatpush1.msra.mxu0 0.0
    %4004 = vmatprep.subr.mxu0 0.0
    %4005 = vmatpush1.msra.mxu0 0.0
    %4006 = vmatprep.subr.mxu0 0.0
    %4007 = vmatpush1.msra.mxu0 0.0
    %4008 = vmatprep.subr.mxu0 0.0
    %4009 = vmatpush1.msra.mxu0 0.0
    %4010 = vmatprep.mubr.f32.mxu0 0.0
    %4011 = vmatmul.mubr.f32.gmra.mrb[0].mxu0 %v3509
    %v4012 = vpop.f32.mrb[0].mxu0
    %v4013 = vadd.f32 0.0, %v4012
    %v4014 = vpop.f32.mrb[0].mxu0
    %4015 = vdwg.mxu0
    %4016 = vmatprep.subr.mxu0 0.0
    %4017 = vmatpush1.msra.mxu0 %v1818
    %4018 = vmatprep.subr.mxu0 0.0
    %4019 = vmatpush1.msra.mxu0 %v1819
    %4020 = vmatprep.subr.mxu0 0.0
    %4021 = vmatpush1.msra.mxu0 0.0
    %4022 = vmatprep.subr.mxu0 0.0
    %4023 = vmatpush1.msra.mxu0 0.0
    %4024 = vmatprep.subr.mxu0 0.0
    %4025 = vmatpush1.msra.mxu0 0.0
    %4026 = vmatprep.subr.mxu0 0.0
    %4027 = vmatpush1.msra.mxu0 0.0
    %4028 = vmatprep.subr.mxu0 0.0
    %4029 = vmatpush1.msra.mxu0 0.0
    %4030 = vmatprep.subr.mxu0 0.0
    %4031 = vmatpush1.msra.mxu0 0.0
    %4032 = vmatprep.subr.mxu0 0.0
    %4033 = vmatpush1.msra.mxu0 0.0
    %4034 = vmatprep.subr.mxu0 0.0
    %4035 = vmatpush1.msra.mxu0 0.0
    %4036 = vmatprep.subr.mxu0 0.0
    %4037 = vmatpush1.msra.mxu0 0.0
    %4038 = vmatprep.subr.mxu0 0.0
    %4039 = vmatpush1.msra.mxu0 0.0
    %4040 = vmatprep.subr.mxu0 0.0
    %4041 = vmatpush1.msra.mxu0 0.0
    %4042 = vmatprep.subr.mxu0 0.0
    %4043 = vmatpush1.msra.mxu0 0.0
    %4044 = vmatprep.subr.mxu0 0.0
    %4045 = vmatpush1.msra.mxu0 0.0
    %4046 = vmatprep.subr.mxu0 0.0
    %4047 = vmatpush1.msra.mxu0 0.0
    %4048 = vmatprep.subr.mxu0 0.0
    %4049 = vmatpush1.msra.mxu0 0.0
    %4050 = vmatprep.subr.mxu0 0.0
    %4051 = vmatpush1.msra.mxu0 0.0
    %4052 = vmatprep.subr.mxu0 0.0
    %4053 = vmatpush1.msra.mxu0 0.0
    %4054 = vmatprep.subr.mxu0 0.0
    %4055 = vmatpush1.msra.mxu0 0.0
    %4056 = vmatprep.subr.mxu0 0.0
    %4057 = vmatpush1.msra.mxu0 0.0
    %4058 = vmatprep.subr.mxu0 0.0
    %4059 = vmatpush1.msra.mxu0 0.0
    %4060 = vmatprep.subr.mxu0 0.0
    %4061 = vmatpush1.msra.mxu0 0.0
    %4062 = vmatprep.subr.mxu0 0.0
    %4063 = vmatpush1.msra.mxu0 0.0
    %4064 = vmatprep.subr.mxu0 0.0
    %4065 = vmatpush1.msra.mxu0 0.0
    %4066 = vmatprep.subr.mxu0 0.0
    %4067 = vmatpush1.msra.mxu0 0.0
    %4068 = vmatprep.subr.mxu0 0.0
    %4069 = vmatpush1.msra.mxu0 0.0
    %4070 = vmatprep.subr.mxu0 0.0
    %4071 = vmatpush1.msra.mxu0 0.0
    %4072 = vmatprep.subr.mxu0 0.0
    %4073 = vmatpush1.msra.mxu0 0.0
    %4074 = vmatprep.subr.mxu0 0.0
    %4075 = vmatpush1.msra.mxu0 0.0
    %4076 = vmatprep.subr.mxu0 0.0
    %4077 = vmatpush1.msra.mxu0 0.0
    %4078 = vmatprep.subr.mxu0 0.0
    %4079 = vmatpush1.msra.mxu0 0.0
    %4080 = vmatprep.mubr.f32.mxu0 0.0
    %4081 = vmatmul.mubr.f32.gmra.mrb[0].mxu0 %v3582
    %v4082 = vpop.f32.mrb[0].mxu0
    %v4083 = vadd.f32 0.0, %v4082
    %v4084 = vpop.f32.mrb[0].mxu0
    %4085 = vdwg.mxu0
    %4086 = vmatprep.subr.mxu0 0.0
    %4087 = vmatpush1.msra.mxu0 %v1818
    %4088 = vmatprep.subr.mxu0 0.0
    %4089 = vmatpush1.msra.mxu0 %v1819
    %4090 = vmatprep.subr.mxu0 0.0
    %4091 = vmatpush1.msra.mxu0 0.0
    %4092 = vmatprep.subr.mxu0 0.0
    %4093 = vmatpush1.msra.mxu0 0.0
    %4094 = vmatprep.subr.mxu0 0.0
    %4095 = vmatpush1.msra.mxu0 0.0
    %4096 = vmatprep.subr.mxu0 0.0
    %4097 = vmatpush1.msra.mxu0 0.0
    %4098 = vmatprep.subr.mxu0 0.0
    %4099 = vmatpush1.msra.mxu0 0.0
    %4100 = vmatprep.subr.mxu0 0.0
    %4101 = vmatpush1.msra.mxu0 0.0
    %4102 = vmatprep.subr.mxu0 0.0
    %4103 = vmatpush1.msra.mxu0 0.0
    %4104 = vmatprep.subr.mxu0 0.0
    %4105 = vmatpush1.msra.mxu0 0.0
    %4106 = vmatprep.subr.mxu0 0.0
    %4107 = vmatpush1.msra.mxu0 0.0
    %4108 = vmatprep.subr.mxu0 0.0
    %4109 = vmatpush1.msra.mxu0 0.0
    %4110 = vmatprep.subr.mxu0 0.0
    %4111 = vmatpush1.msra.mxu0 0.0
    %4112 = vmatprep.subr.mxu0 0.0
    %4113 = vmatpush1.msra.mxu0 0.0
    %4114 = vmatprep.subr.mxu0 0.0
    %4115 = vmatpush1.msra.mxu0 0.0
    %4116 = vmatprep.subr.mxu0 0.0
    %4117 = vmatpush1.msra.mxu0 0.0
    %4118 = vmatprep.subr.mxu0 0.0
    %4119 = vmatpush1.msra.mxu0 0.0
    %4120 = vmatprep.subr.mxu0 0.0
    %4121 = vmatpush1.msra.mxu0 0.0
    %4122 = vmatprep.subr.mxu0 0.0
    %4123 = vmatpush1.msra.mxu0 0.0
    %4124 = vmatprep.subr.mxu0 0.0
    %4125 = vmatpush1.msra.mxu0 0.0
    %4126 = vmatprep.subr.mxu0 0.0
    %4127 = vmatpush1.msra.mxu0 0.0
    %4128 = vmatprep.subr.mxu0 0.0
    %4129 = vmatpush1.msra.mxu0 0.0
    %4130 = vmatprep.subr.mxu0 0.0
    %4131 = vmatpush1.msra.mxu0 0.0
    %4132 = vmatprep.subr.mxu0 0.0
    %4133 = vmatpush1.msra.mxu0 0.0
    %4134 = vmatprep.subr.mxu0 0.0
    %4135 = vmatpush1.msra.mxu0 0.0
    %4136 = vmatprep.subr.mxu0 0.0
    %4137 = vmatpush1.msra.mxu0 0.0
    %4138 = vmatprep.subr.mxu0 0.0
    %4139 = vmatpush1.msra.mxu0 0.0
    %4140 = vmatprep.subr.mxu0 0.0
    %4141 = vmatpush1.msra.mxu0 0.0
    %4142 = vmatprep.subr.mxu0 0.0
    %4143 = vmatpush1.msra.mxu0 0.0
    %4144 = vmatprep.subr.mxu0 0.0
    %4145 = vmatpush1.msra.mxu0 0.0
    %4146 = vmatprep.subr.mxu0 0.0
    %4147 = vmatpush1.msra.mxu0 0.0
    %4148 = vmatprep.subr.mxu0 0.0
    %4149 = vmatpush1.msra.mxu0 0.0
    %4150 = vmatprep.mubr.f32.mxu0 0.0
    %4151 = vmatmul.mubr.f32.gmra.mrb[0].mxu0 %v3655
    %v4152 = vpop.f32.mrb[0].mxu0
    %v4153 = vadd.f32 0.0, %v4152
    %v4154 = vpop.f32.mrb[0].mxu0
    %4155 = vdwg.mxu0
    %4156 = vmatprep.subr.mxu0 0.0
    %4157 = vmatpush1.msra.mxu0 %v1818
    %4158 = vmatprep.subr.mxu0 0.0
    %4159 = vmatpush1.msra.mxu0 %v1819
    %4160 = vmatprep.subr.mxu0 0.0
    %4161 = vmatpush1.msra.mxu0 0.0
    %4162 = vmatprep.subr.mxu0 0.0
    %4163 = vmatpush1.msra.mxu0 0.0
    %4164 = vmatprep.subr.mxu0 0.0
    %4165 = vmatpush1.msra.mxu0 0.0
    %4166 = vmatprep.subr.mxu0 0.0
    %4167 = vmatpush1.msra.mxu0 0.0
    %4168 = vmatprep.subr.mxu0 0.0
    %4169 = vmatpush1.msra.mxu0 0.0
    %4170 = vmatprep.subr.mxu0 0.0
    %4171 = vmatpush1.msra.mxu0 0.0
    %4172 = vmatprep.subr.mxu0 0.0
    %4173 = vmatpush1.msra.mxu0 0.0
    %4174 = vmatprep.subr.mxu0 0.0
    %4175 = vmatpush1.msra.mxu0 0.0
    %4176 = vmatprep.subr.mxu0 0.0
    %4177 = vmatpush1.msra.mxu0 0.0
    %4178 = vmatprep.subr.mxu0 0.0
    %4179 = vmatpush1.msra.mxu0 0.0
    %4180 = vmatprep.subr.mxu0 0.0
    %4181 = vmatpush1.msra.mxu0 0.0
    %4182 = vmatprep.subr.mxu0 0.0
    %4183 = vmatpush1.msra.mxu0 0.0
    %4184 = vmatprep.subr.mxu0 0.0
    %4185 = vmatpush1.msra.mxu0 0.0
    %4186 = vmatprep.subr.mxu0 0.0
    %4187 = vmatpush1.msra.mxu0 0.0
    %4188 = vmatprep.subr.mxu0 0.0
    %4189 = vmatpush1.msra.mxu0 0.0
    %4190 = vmatprep.subr.mxu0 0.0
    %4191 = vmatpush1.msra.mxu0 0.0
    %4192 = vmatprep.subr.mxu0 0.0
    %4193 = vmatpush1.msra.mxu0 0.0
    %4194 = vmatprep.subr.mxu0 0.0
    %4195 = vmatpush1.msra.mxu0 0.0
    %4196 = vmatprep.subr.mxu0 0.0
    %4197 = vmatpush1.msra.mxu0 0.0
    %4198 = vmatprep.subr.mxu0 0.0
    %4199 = vmatpush1.msra.mxu0 0.0
    %4200 = vmatprep.subr.mxu0 0.0
    %4201 = vmatpush1.msra.mxu0 0.0
    %4202 = vmatprep.subr.mxu0 0.0
    %4203 = vmatpush1.msra.mxu0 0.0
    %4204 = vmatprep.subr.mxu0 0.0
    %4205 = vmatpush1.msra.mxu0 0.0
    %4206 = vmatprep.subr.mxu0 0.0
    %4207 = vmatpush1.msra.mxu0 0.0
    %4208 = vmatprep.subr.mxu0 0.0
    %4209 = vmatpush1.msra.mxu0 0.0
    %4210 = vmatprep.subr.mxu0 0.0
    %4211 = vmatpush1.msra.mxu0 0.0
    %4212 = vmatprep.subr.mxu0 0.0
    %4213 = vmatpush1.msra.mxu0 0.0
    %4214 = vmatprep.subr.mxu0 0.0
    %4215 = vmatpush1.msra.mxu0 0.0
    %4216 = vmatprep.subr.mxu0 0.0
    %4217 = vmatpush1.msra.mxu0 0.0
    %4218 = vmatprep.subr.mxu0 0.0
    %4219 = vmatpush1.msra.mxu0 0.0
    %4220 = vmatprep.mubr.f32.mxu0 0.0
    %4221 = vmatmul.mubr.f32.gmra.mrb[0].mxu0 %v3728
    %v4222 = vpop.f32.mrb[0].mxu0
    %v4223 = vadd.f32 0.0, %v4222
    %v4224 = vpop.f32.mrb[0].mxu0
    %4225 = vdwg.mxu0
    %4226 = vmatprep.subr.mxu0 0.0
    %4227 = vmatpush1.msra.mxu0 %v1818
    %4228 = vmatprep.subr.mxu0 0.0
    %4229 = vmatpush1.msra.mxu0 %v1819
    %4230 = vmatprep.subr.mxu0 0.0
    %4231 = vmatpush1.msra.mxu0 0.0
    %4232 = vmatprep.subr.mxu0 0.0
    %4233 = vmatpush1.msra.mxu0 0.0
    %4234 = vmatprep.subr.mxu0 0.0
    %4235 = vmatpush1.msra.mxu0 0.0
    %4236 = vmatprep.subr.mxu0 0.0
    %4237 = vmatpush1.msra.mxu0 0.0
    %4238 = vmatprep.subr.mxu0 0.0
    %4239 = vmatpush1.msra.mxu0 0.0
    %4240 = vmatprep.subr.mxu0 0.0
    %4241 = vmatpush1.msra.mxu0 0.0
    %4242 = vmatprep.subr.mxu0 0.0
    %4243 = vmatpush1.msra.mxu0 0.0
    %4244 = vmatprep.subr.mxu0 0.0
    %4245 = vmatpush1.msra.mxu0 0.0
    %4246 = vmatprep.subr.mxu0 0.0
    %4247 = vmatpush1.msra.mxu0 0.0
    %4248 = vmatprep.subr.mxu0 0.0
    %4249 = vmatpush1.msra.mxu0 0.0
    %4250 = vmatprep.subr.mxu0 0.0
    %4251 = vmatpush1.msra.mxu0 0.0
    %4252 = vmatprep.subr.mxu0 0.0
    %4253 = vmatpush1.msra.mxu0 0.0
    %4254 = vmatprep.subr.mxu0 0.0
    %4255 = vmatpush1.msra.mxu0 0.0
    %4256 = vmatprep.subr.mxu0 0.0
    %4257 = vmatpush1.msra.mxu0 0.0
    %4258 = vmatprep.subr.mxu0 0.0
    %4259 = vmatpush1.msra.mxu0 0.0
    %4260 = vmatprep.subr.mxu0 0.0
    %4261 = vmatpush1.msra.mxu0 0.0
    %4262 = vmatprep.subr.mxu0 0.0
    %4263 = vmatpush1.msra.mxu0 0.0
    %4264 = vmatprep.subr.mxu0 0.0
    %4265 = vmatpush1.msra.mxu0 0.0
    %4266 = vmatprep.subr.mxu0 0.0
    %4267 = vmatpush1.msra.mxu0 0.0
    %4268 = vmatprep.subr.mxu0 0.0
    %4269 = vmatpush1.msra.mxu0 0.0
    %4270 = vmatprep.subr.mxu0 0.0
    %4271 = vmatpush1.msra.mxu0 0.0
    %4272 = vmatprep.subr.mxu0 0.0
    %4273 = vmatpush1.msra.mxu0 0.0
    %4274 = vmatprep.subr.mxu0 0.0
    %4275 = vmatpush1.msra.mxu0 0.0
    %4276 = vmatprep.subr.mxu0 0.0
    %4277 = vmatpush1.msra.mxu0 0.0
    %4278 = vmatprep.subr.mxu0 0.0
    %4279 = vmatpush1.msra.mxu0 0.0
    %4280 = vmatprep.subr.mxu0 0.0
    %4281 = vmatpush1.msra.mxu0 0.0
    %4282 = vmatprep.subr.mxu0 0.0
    %4283 = vmatpush1.msra.mxu0 0.0
    %4284 = vmatprep.subr.mxu0 0.0
    %4285 = vmatpush1.msra.mxu0 0.0
    %4286 = vmatprep.subr.mxu0 0.0
    %4287 = vmatpush1.msra.mxu0 0.0
    %4288 = vmatprep.subr.mxu0 0.0
    %4289 = vmatpush1.msra.mxu0 0.0
    %4290 = vmatprep.mubr.f32.mxu0 0.0
    %4291 = vmatmul.mubr.f32.gmra.mrb[0].mxu0 %v3801
    %v4292 = vpop.f32.mrb[0].mxu0
    %v4293 = vadd.f32 0.0, %v4292
    %v4294 = vpop.f32.mrb[0].mxu0
    %4295 = vdwg.mxu0
    %4296 = vmatprep.subr.mxu0 0.0
    %4297 = vmatpush1.msra.mxu0 %v1818
    %4298 = vmatprep.subr.mxu0 0.0
    %4299 = vmatpush1.msra.mxu0 %v1819
    %4300 = vmatprep.subr.mxu0 0.0
    %4301 = vmatpush1.msra.mxu0 0.0
    %4302 = vmatprep.subr.mxu0 0.0
    %4303 = vmatpush1.msra.mxu0 0.0
    %4304 = vmatprep.subr.mxu0 0.0
    %4305 = vmatpush1.msra.mxu0 0.0
    %4306 = vmatprep.subr.mxu0 0.0
    %4307 = vmatpush1.msra.mxu0 0.0
    %4308 = vmatprep.subr.mxu0 0.0
    %4309 = vmatpush1.msra.mxu0 0.0
    %4310 = vmatprep.subr.mxu0 0.0
    %4311 = vmatpush1.msra.mxu0 0.0
    %4312 = vmatprep.subr.mxu0 0.0
    %4313 = vmatpush1.msra.mxu0 0.0
    %4314 = vmatprep.subr.mxu0 0.0
    %4315 = vmatpush1.msra.mxu0 0.0
    %4316 = vmatprep.subr.mxu0 0.0
    %4317 = vmatpush1.msra.mxu0 0.0
    %4318 = vmatprep.subr.mxu0 0.0
    %4319 = vmatpush1.msra.mxu0 0.0
    %4320 = vmatprep.subr.mxu0 0.0
    %4321 = vmatpush1.msra.mxu0 0.0
    %4322 = vmatprep.subr.mxu0 0.0
    %4323 = vmatpush1.msra.mxu0 0.0
    %4324 = vmatprep.subr.mxu0 0.0
    %4325 = vmatpush1.msra.mxu0 0.0
    %4326 = vmatprep.subr.mxu0 0.0
    %4327 = vmatpush1.msra.mxu0 0.0
    %4328 = vmatprep.subr.mxu0 0.0
    %4329 = vmatpush1.msra.mxu0 0.0
    %4330 = vmatprep.subr.mxu0 0.0
    %4331 = vmatpush1.msra.mxu0 0.0
    %4332 = vmatprep.subr.mxu0 0.0
    %4333 = vmatpush1.msra.mxu0 0.0
    %4334 = vmatprep.subr.mxu0 0.0
    %4335 = vmatpush1.msra.mxu0 0.0
    %4336 = vmatprep.subr.mxu0 0.0
    %4337 = vmatpush1.msra.mxu0 0.0
    %4338 = vmatprep.subr.mxu0 0.0
    %4339 = vmatpush1.msra.mxu0 0.0
    %4340 = vmatprep.subr.mxu0 0.0
    %4341 = vmatpush1.msra.mxu0 0.0
    %4342 = vmatprep.subr.mxu0 0.0
    %4343 = vmatpush1.msra.mxu0 0.0
    %4344 = vmatprep.subr.mxu0 0.0
    %4345 = vmatpush1.msra.mxu0 0.0
    %4346 = vmatprep.subr.mxu0 0.0
    %4347 = vmatpush1.msra.mxu0 0.0
    %4348 = vmatprep.subr.mxu0 0.0
    %4349 = vmatpush1.msra.mxu0 0.0
    %4350 = vmatprep.subr.mxu0 0.0
    %4351 = vmatpush1.msra.mxu0 0.0
    %4352 = vmatprep.subr.mxu0 0.0
    %4353 = vmatpush1.msra.mxu0 0.0
    %4354 = vmatprep.subr.mxu0 0.0
    %4355 = vmatpush1.msra.mxu0 0.0
    %4356 = vmatprep.subr.mxu0 0.0
    %4357 = vmatpush1.msra.mxu0 0.0
    %4358 = vmatprep.subr.mxu0 0.0
    %4359 = vmatpush1.msra.mxu0 0.0
    %4360 = vmatprep.mubr.f32.mxu0 0.0
    %4361 = vmatmul.mubr.f32.gmra.mrb[0].mxu0 %v3874
    %v4362 = vpop.f32.mrb[0].mxu0
    %v4363 = vadd.f32 0.0, %v4362
    %v4364 = vpop.f32.mrb[0].mxu0
    %4365 = vdwg.mxu0
    %v4366 = vrot.slane %v3578, 7
    %v4367 = vrot.slane %v3651, 7
    %v4368 = vrot.slane %v3724, 7
    %v4369 = vrot.slane %v3797, 7
    %v4370 = vrot.slane %v3870, 7
    %v4371 = vrot.slane %v3943, 7
    %v4372 = vsel %vm952, %v4366, 0.0
    %v4373 = vsel %vm952, %v4367, 0.0
    %v4374 = vsel %vm952, %v4368, 0.0
    %v4375 = vsel %vm952, %v4369, 0.0
    %v4376 = vsel %vm952, %v4370, 0.0
    %v4377 = vsel %vm952, %v4371, 0.0
    %v4378 = vrot.slane %v3578, 1
    %v4379 = vrot.slane %v3651, 1
    %v4380 = vrot.slane %v3724, 1
    %v4381 = vrot.slane %v3797, 1
    %v4382 = vrot.slane %v3870, 1
    %v4383 = vrot.slane %v3943, 1
    %v4384 = vsel %vm965, %v4378, 0.0
    %v4385 = vsel %vm965, %v4379, 0.0
    %v4386 = vsel %vm965, %v4380, 0.0
    %v4387 = vsel %vm965, %v4381, 0.0
    %v4388 = vsel %vm965, %v4382, 0.0
    %v4389 = vsel %vm965, %v4383, 0.0
    %4390 = vrot.lane.b32.xlu0 %v4372, 8
    %v4391 = vpop.permute.xlu0 %4390
    %v4392 = vsel %vm2703, %v4391, %v4372
    %4393 = vrot.lane.b32.xlu0 %v4373, 8
    %v4394 = vpop.permute.xlu0 %4393
    %v4395 = vsel %vm2703, %v4394, %v4373
    %4396 = vrot.lane.b32.xlu0 %v4374, 8
    %v4397 = vpop.permute.xlu0 %4396
    %v4398 = vsel %vm2703, %v4397, %v4374
    %4399 = vrot.lane.b32.xlu0 %v4375, 8
    %v4400 = vpop.permute.xlu0 %4399
    %v4401 = vsel %vm2703, %v4400, %v4375
    %4402 = vrot.lane.b32.xlu0 %v4376, 8
    %v4403 = vpop.permute.xlu0 %4402
    %v4404 = vsel %vm2703, %v4403, %v4376
    %4405 = vrot.lane.b32.xlu0 %v4377, 8
    %v4406 = vpop.permute.xlu0 %4405
    %v4407 = vsel %vm2703, %v4406, %v4377
    %4408 = vrot.lane.b32.xlu0 %v4392, 8
    %v4409 = vpop.permute.xlu0 %4408
    %4410 = vrot.lane.b32.xlu0 %v4395, 8
    %v4411 = vpop.permute.xlu0 %4410
    %4412 = vrot.lane.b32.xlu0 %v4398, 8
    %v4413 = vpop.permute.xlu0 %4412
    %4414 = vrot.lane.b32.xlu0 %v4401, 8
    %v4415 = vpop.permute.xlu0 %4414
    %4416 = vrot.lane.b32.xlu0 %v4404, 8
    %v4417 = vpop.permute.xlu0 %4416
    %4418 = vrot.lane.b32.xlu0 %v4407, 8
    %v4419 = vpop.permute.xlu0 %4418
    %v4420 = vsel %vm2703, %v4409, %v4372
    %v4421 = vsel %vm2703, %v4411, %v4373
    %v4422 = vsel %vm2703, %v4413, %v4374
    %v4423 = vsel %vm2703, %v4415, %v4375
    %v4424 = vsel %vm2703, %v4417, %v4376
    %v4425 = vsel %vm2703, %v4419, %v4377
    %4432 = vrot.lane.b32.xlu0 %v4420, 121
    %v4433 = vpop.permute.xlu0 %4432
    %4434 = vrot.lane.b32.xlu0 %v4421, 121
    %v4435 = vpop.permute.xlu0 %4434
    %4436 = vrot.lane.b32.xlu0 %v4422, 121
    %v4437 = vpop.permute.xlu0 %4436
    %4438 = vrot.lane.b32.xlu0 %v4423, 121
    %v4439 = vpop.permute.xlu0 %4438
    %4440 = vrot.lane.b32.xlu0 %v4424, 121
    %v4441 = vpop.permute.xlu0 %4440
    %4442 = vrot.lane.b32.xlu0 %v4425, 121
    %v4443 = vpop.permute.xlu0 %4442
    %v4450 = vsel %vm978, %v4433, 0.0
    %v4451 = vsel %vm978, %v4435, 0.0
    %v4452 = vsel %vm978, %v4437, 0.0
    %v4453 = vsel %vm978, %v4439, 0.0
    %v4454 = vsel %vm978, %v4441, 0.0
    %v4455 = vsel %vm978, %v4443, 0.0
    %v4456 = vmul.f32 %v1048, %v4450
    %v4457 = vmul.f32 %v1048, %v4451
    %v4458 = vmul.f32 %v1048, %v4452
    %v4459 = vmul.f32 %v1048, %v4453
    %v4460 = vmul.f32 %v1048, %v4454
    %v4461 = vmul.f32 %v1048, %v4455
    %v4462 = vadd.f32 %v980, %v4456
    %v4463 = vadd.f32 %v980, %v4457
    %v4464 = vadd.f32 %v980, %v4458
    %v4465 = vadd.f32 %v980, %v4459
    %v4466 = vadd.f32 %v980, %v4460
    %v4467 = vadd.f32 %v980, %v4461
    %v4468 = vmul.f32 %v1177, %v4372
    %v4469 = vmul.f32 %v1177, %v4373
    %v4470 = vmul.f32 %v1177, %v4374
    %v4471 = vmul.f32 %v1177, %v4375
    %v4472 = vmul.f32 %v1177, %v4376
    %v4473 = vmul.f32 %v1177, %v4377
    %v4474 = vadd.f32 %v4468, 0.0
    %v4475 = vadd.f32 %v4469, 0.0
    %v4476 = vadd.f32 %v4470, 0.0
    %v4477 = vadd.f32 %v4471, 0.0
    %v4478 = vadd.f32 %v4472, 0.0
    %v4479 = vadd.f32 %v4473, 0.0
    %4480 = vrot.lane.b32.xlu0 %v4420, 127
    %v4481 = vpop.permute.xlu0 %4480
    %4482 = vrot.lane.b32.xlu0 %v4421, 127
    %v4483 = vpop.permute.xlu0 %4482
    %4484 = vrot.lane.b32.xlu0 %v4422, 127
    %v4485 = vpop.permute.xlu0 %4484
    %4486 = vrot.lane.b32.xlu0 %v4423, 127
    %v4487 = vpop.permute.xlu0 %4486
    %4488 = vrot.lane.b32.xlu0 %v4424, 127
    %v4489 = vpop.permute.xlu0 %4488
    %4490 = vrot.lane.b32.xlu0 %v4425, 127
    %v4491 = vpop.permute.xlu0 %4490
    %v4498 = vsel %vm2702, %v4481, 0.0
    %v4499 = vsel %vm2702, %v4483, 0.0
    %v4500 = vsel %vm2702, %v4485, 0.0
    %v4501 = vsel %vm2702, %v4487, 0.0
    %v4502 = vsel %vm2702, %v4489, 0.0
    %v4503 = vsel %vm2702, %v4491, 0.0
    %v4504 = vmul.f32 %v1306, %v4498
    %v4505 = vmul.f32 %v1306, %v4499
    %v4506 = vmul.f32 %v1306, %v4500
    %v4507 = vmul.f32 %v1306, %v4501
    %v4508 = vmul.f32 %v1306, %v4502
    %v4509 = vmul.f32 %v1306, %v4503
    %v4510 = vadd.f32 %v4462, %v4504
    %v4511 = vadd.f32 %v4463, %v4505
    %v4512 = vadd.f32 %v4464, %v4506
    %v4513 = vadd.f32 %v4465, %v4507
    %v4514 = vadd.f32 %v4466, %v4508
    %v4515 = vadd.f32 %v4467, %v4509
    %4516 = vrot.lane.b32.xlu0 %v3578, 8
    %v4517 = vpop.permute.xlu0 %4516
    %v4518 = vsel %vm2703, %v4517, %v3578
    %4519 = vrot.lane.b32.xlu0 %v3651, 8
    %v4520 = vpop.permute.xlu0 %4519
    %v4521 = vsel %vm2703, %v4520, %v3651
    %4522 = vrot.lane.b32.xlu0 %v3724, 8
    %v4523 = vpop.permute.xlu0 %4522
    %v4524 = vsel %vm2703, %v4523, %v3724
    %4525 = vrot.lane.b32.xlu0 %v3797, 8
    %v4526 = vpop.permute.xlu0 %4525
    %v4527 = vsel %vm2703, %v4526, %v3797
    %4528 = vrot.lane.b32.xlu0 %v3870, 8
    %v4529 = vpop.permute.xlu0 %4528
    %v4530 = vsel %vm2703, %v4529, %v3870
    %4531 = vrot.lane.b32.xlu0 %v3943, 8
    %v4532 = vpop.permute.xlu0 %4531
    %v4533 = vsel %vm2703, %v4532, %v3943
    %4534 = vrot.lane.b32.xlu0 %v4518, 8
    %v4535 = vpop.permute.xlu0 %4534
    %4536 = vrot.lane.b32.xlu0 %v4521, 8
    %v4537 = vpop.permute.xlu0 %4536
    %4538 = vrot.lane.b32.xlu0 %v4524, 8
    %v4539 = vpop.permute.xlu0 %4538
    %4540 = vrot.lane.b32.xlu0 %v4527, 8
    %v4541 = vpop.permute.xlu0 %4540
    %4542 = vrot.lane.b32.xlu0 %v4530, 8
    %v4543 = vpop.permute.xlu0 %4542
    %4544 = vrot.lane.b32.xlu0 %v4533, 8
    %v4545 = vpop.permute.xlu0 %4544
    %v4546 = vsel %vm2703, %v4535, %v3578
    %v4547 = vsel %vm2703, %v4537, %v3651
    %v4548 = vsel %vm2703, %v4539, %v3724
    %v4549 = vsel %vm2703, %v4541, %v3797
    %v4550 = vsel %vm2703, %v4543, %v3870
    %v4551 = vsel %vm2703, %v4545, %v3943
    %4558 = vrot.lane.b32.xlu0 %v4546, 121
    %v4559 = vpop.permute.xlu0 %4558
    %4560 = vrot.lane.b32.xlu0 %v4547, 121
    %v4561 = vpop.permute.xlu0 %4560
    %4562 = vrot.lane.b32.xlu0 %v4548, 121
    %v4563 = vpop.permute.xlu0 %4562
    %4564 = vrot.lane.b32.xlu0 %v4549, 121
    %v4565 = vpop.permute.xlu0 %4564
    %4566 = vrot.lane.b32.xlu0 %v4550, 121
    %v4567 = vpop.permute.xlu0 %4566
    %4568 = vrot.lane.b32.xlu0 %v4551, 121
    %v4569 = vpop.permute.xlu0 %4568
    %v4576 = vsel %vm978, %v4559, 0.0
    %v4577 = vsel %vm978, %v4561, 0.0
    %v4578 = vsel %vm978, %v4563, 0.0
    %v4579 = vsel %vm978, %v4565, 0.0
    %v4580 = vsel %vm978, %v4567, 0.0
    %v4581 = vsel %vm978, %v4569, 0.0
    %v4582 = vmul.f32 %v1061, %v4576
    %v4583 = vmul.f32 %v1061, %v4577
    %v4584 = vmul.f32 %v1061, %v4578
    %v4585 = vmul.f32 %v1061, %v4579
    %v4586 = vmul.f32 %v1061, %v4580
    %v4587 = vmul.f32 %v1061, %v4581
    %v4588 = vadd.f32 %v4474, %v4582
    %v4589 = vadd.f32 %v4475, %v4583
    %v4590 = vadd.f32 %v4476, %v4584
    %v4591 = vadd.f32 %v4477, %v4585
    %v4592 = vadd.f32 %v4478, %v4586
    %v4593 = vadd.f32 %v4479, %v4587
    %v4594 = vmul.f32 %v1190, %v3578
    %v4595 = vmul.f32 %v1190, %v3651
    %v4596 = vmul.f32 %v1190, %v3724
    %v4597 = vmul.f32 %v1190, %v3797
    %v4598 = vmul.f32 %v1190, %v3870
    %v4599 = vmul.f32 %v1190, %v3943
    %v4600 = vadd.f32 %v4510, %v4594
    %v4601 = vadd.f32 %v4511, %v4595
    %v4602 = vadd.f32 %v4512, %v4596
    %v4603 = vadd.f32 %v4513, %v4597
    %v4604 = vadd.f32 %v4514, %v4598
    %v4605 = vadd.f32 %v4515, %v4599
    %4606 = vrot.lane.b32.xlu0 %v4546, 127
    %v4607 = vpop.permute.xlu0 %4606
    %4608 = vrot.lane.b32.xlu0 %v4547, 127
    %v4609 = vpop.permute.xlu0 %4608
    %4610 = vrot.lane.b32.xlu0 %v4548, 127
    %v4611 = vpop.permute.xlu0 %4610
    %4612 = vrot.lane.b32.xlu0 %v4549, 127
    %v4613 = vpop.permute.xlu0 %4612
    %4614 = vrot.lane.b32.xlu0 %v4550, 127
    %v4615 = vpop.permute.xlu0 %4614
    %4616 = vrot.lane.b32.xlu0 %v4551, 127
    %v4617 = vpop.permute.xlu0 %4616
    %v4624 = vsel %vm2702, %v4607, 0.0
    %v4625 = vsel %vm2702, %v4609, 0.0
    %v4626 = vsel %vm2702, %v4611, 0.0
    %v4627 = vsel %vm2702, %v4613, 0.0
    %v4628 = vsel %vm2702, %v4615, 0.0
    %v4629 = vsel %vm2702, %v4617, 0.0
    %v4630 = vmul.f32 %v1319, %v4624
    %v4631 = vmul.f32 %v1319, %v4625
    %v4632 = vmul.f32 %v1319, %v4626
    %v4633 = vmul.f32 %v1319, %v4627
    %v4634 = vmul.f32 %v1319, %v4628
    %v4635 = vmul.f32 %v1319, %v4629
    %v4636 = vadd.f32 %v4588, %v4630
    %v4637 = vadd.f32 %v4589, %v4631
    %v4638 = vadd.f32 %v4590, %v4632
    %v4639 = vadd.f32 %v4591, %v4633
    %v4640 = vadd.f32 %v4592, %v4634
    %v4641 = vadd.f32 %v4593, %v4635
    %4642 = vrot.lane.b32.xlu0 %v4384, 8
    %v4643 = vpop.permute.xlu0 %4642
    %v4644 = vsel %vm2703, %v4643, %v4384
    %4645 = vrot.lane.b32.xlu0 %v4385, 8
    %v4646 = vpop.permute.xlu0 %4645
    %v4647 = vsel %vm2703, %v4646, %v4385
    %4648 = vrot.lane.b32.xlu0 %v4386, 8
    %v4649 = vpop.permute.xlu0 %4648
    %v4650 = vsel %vm2703, %v4649, %v4386
    %4651 = vrot.lane.b32.xlu0 %v4387, 8
    %v4652 = vpop.permute.xlu0 %4651
    %v4653 = vsel %vm2703, %v4652, %v4387
    %4654 = vrot.lane.b32.xlu0 %v4388, 8
    %v4655 = vpop.permute.xlu0 %4654
    %v4656 = vsel %vm2703, %v4655, %v4388
    %4657 = vrot.lane.b32.xlu0 %v4389, 8
    %v4658 = vpop.permute.xlu0 %4657
    %v4659 = vsel %vm2703, %v4658, %v4389
    %4660 = vrot.lane.b32.xlu0 %v4644, 8
    %v4661 = vpop.permute.xlu0 %4660
    %4662 = vrot.lane.b32.xlu0 %v4647, 8
    %v4663 = vpop.permute.xlu0 %4662
    %4664 = vrot.lane.b32.xlu0 %v4650, 8
    %v4665 = vpop.permute.xlu0 %4664
    %4666 = vrot.lane.b32.xlu0 %v4653, 8
    %v4667 = vpop.permute.xlu0 %4666
    %4668 = vrot.lane.b32.xlu0 %v4656, 8
    %v4669 = vpop.permute.xlu0 %4668
    %4670 = vrot.lane.b32.xlu0 %v4659, 8
    %v4671 = vpop.permute.xlu0 %4670
    %v4672 = vsel %vm2703, %v4661, %v4384
    %v4673 = vsel %vm2703, %v4663, %v4385
    %v4674 = vsel %vm2703, %v4665, %v4386
    %v4675 = vsel %vm2703, %v4667, %v4387
    %v4676 = vsel %vm2703, %v4669, %v4388
    %v4677 = vsel %vm2703, %v4671, %v4389
    %4684 = vrot.lane.b32.xlu0 %v4672, 121
    %v4685 = vpop.permute.xlu0 %4684
    %4686 = vrot.lane.b32.xlu0 %v4673, 121
    %v4687 = vpop.permute.xlu0 %4686
    %4688 = vrot.lane.b32.xlu0 %v4674, 121
    %v4689 = vpop.permute.xlu0 %4688
    %4690 = vrot.lane.b32.xlu0 %v4675, 121
    %v4691 = vpop.permute.xlu0 %4690
    %4692 = vrot.lane.b32.xlu0 %v4676, 121
    %v4693 = vpop.permute.xlu0 %4692
    %4694 = vrot.lane.b32.xlu0 %v4677, 121
    %v4695 = vpop.permute.xlu0 %4694
    %v4702 = vsel %vm978, %v4685, 0.0
    %v4703 = vsel %vm978, %v4687, 0.0
    %v4704 = vsel %vm978, %v4689, 0.0
    %v4705 = vsel %vm978, %v4691, 0.0
    %v4706 = vsel %vm978, %v4693, 0.0
    %v4707 = vsel %vm978, %v4695, 0.0
    %v4708 = vmul.f32 %v1098, %v4702
    %v4709 = vmul.f32 %v1098, %v4703
    %v4710 = vmul.f32 %v1098, %v4704
    %v4711 = vmul.f32 %v1098, %v4705
    %v4712 = vmul.f32 %v1098, %v4706
    %v4713 = vmul.f32 %v1098, %v4707
    %v4714 = vadd.f32 %v4600, %v4708
    %v4715 = vadd.f32 %v4601, %v4709
    %v4716 = vadd.f32 %v4602, %v4710
    %v4717 = vadd.f32 %v4603, %v4711
    %v4718 = vadd.f32 %v4604, %v4712
    %v4719 = vadd.f32 %v4605, %v4713
    %v4720 = vmul.f32 %v1227, %v4384
    %v4721 = vmul.f32 %v1227, %v4385
    %v4722 = vmul.f32 %v1227, %v4386
    %v4723 = vmul.f32 %v1227, %v4387
    %v4724 = vmul.f32 %v1227, %v4388
    %v4725 = vmul.f32 %v1227, %v4389
    %v4726 = vadd.f32 %v4636, %v4720
    %v4727 = vadd.f32 %v4637, %v4721
    %v4728 = vadd.f32 %v4638, %v4722
    %v4729 = vadd.f32 %v4639, %v4723
    %v4730 = vadd.f32 %v4640, %v4724
    %v4731 = vadd.f32 %v4641, %v4725
    %4732 = vrot.lane.b32.xlu0 %v4672, 127
    %v4733 = vpop.permute.xlu0 %4732
    %4734 = vrot.lane.b32.xlu0 %v4673, 127
    %v4735 = vpop.permute.xlu0 %4734
    %4736 = vrot.lane.b32.xlu0 %v4674, 127
    %v4737 = vpop.permute.xlu0 %4736
    %4738 = vrot.lane.b32.xlu0 %v4675, 127
    %v4739 = vpop.permute.xlu0 %4738
    %4740 = vrot.lane.b32.xlu0 %v4676, 127
    %v4741 = vpop.permute.xlu0 %4740
    %4742 = vrot.lane.b32.xlu0 %v4677, 127
    %v4743 = vpop.permute.xlu0 %4742
    %v4750 = vsel %vm2702, %v4733, 0.0
    %v4751 = vsel %vm2702, %v4735, 0.0
    %v4752 = vsel %vm2702, %v4737, 0.0
    %v4753 = vsel %vm2702, %v4739, 0.0
    %v4754 = vsel %vm2702, %v4741, 0.0
    %v4755 = vsel %vm2702, %v4743, 0.0
    %v4756 = vmul.f32 %v1356, %v4750
    %v4757 = vmul.f32 %v1356, %v4751
    %v4758 = vmul.f32 %v1356, %v4752
    %v4759 = vmul.f32 %v1356, %v4753
    %v4760 = vmul.f32 %v1356, %v4754
    %v4761 = vmul.f32 %v1356, %v4755
    %v4762 = vadd.f32 %v4714, %v4756
    %v4763 = vadd.f32 %v4715, %v4757
    %v4764 = vadd.f32 %v4716, %v4758
    %v4765 = vadd.f32 %v4717, %v4759
    %v4766 = vadd.f32 %v4718, %v4760
    %v4767 = vadd.f32 %v4719, %v4761
    %v4768 = vadd.f32 %v4762, %v4726
    %v4769 = vadd.f32 %v4763, %v4727
    %v4770 = vadd.f32 %v4764, %v4728
    %v4771 = vadd.f32 %v4765, %v4729
    %v4772 = vadd.f32 %v4766, %v4730
    %v4773 = vadd.f32 %v4767, %v4731
    %v4774 = vsub.f32 %v4013, %v4768
    %v4775 = vsub.f32 %v4083, %v4769
    %v4776 = vsub.f32 %v4153, %v4770
    %v4777 = vsub.f32 %v4223, %v4771
    %v4778 = vsub.f32 %v4293, %v4772
    %v4779 = vsub.f32 %v4363, %v4773
    %v4780 = vrot.slane %v4774, 7
    %v4781 = vrot.slane %v4775, 7
    %v4782 = vrot.slane %v4776, 7
    %v4783 = vrot.slane %v4777, 7
    %v4784 = vrot.slane %v4778, 7
    %v4785 = vrot.slane %v4779, 7
    %v4786 = vsel %vm952, %v4780, 0.0
    %v4787 = vsel %vm952, %v4781, 0.0
    %v4788 = vsel %vm952, %v4782, 0.0
    %v4789 = vsel %vm952, %v4783, 0.0
    %v4790 = vsel %vm952, %v4784, 0.0
    %v4791 = vsel %vm952, %v4785, 0.0
    %v4792 = vrot.slane %v4774, 1
    %v4793 = vrot.slane %v4775, 1
    %v4794 = vrot.slane %v4776, 1
    %v4795 = vrot.slane %v4777, 1
    %v4796 = vrot.slane %v4778, 1
    %v4797 = vrot.slane %v4779, 1
    %v4798 = vsel %vm965, %v4792, 0.0
    %v4799 = vsel %vm965, %v4793, 0.0
    %v4800 = vsel %vm965, %v4794, 0.0
    %v4801 = vsel %vm965, %v4795, 0.0
    %v4802 = vsel %vm965, %v4796, 0.0
    %v4803 = vsel %vm965, %v4797, 0.0
    %4804 = vrot.lane.b32.xlu0 %v4786, 8
    %v4805 = vpop.permute.xlu0 %4804
    %v4806 = vsel %vm2703, %v4805, %v4786
    %4807 = vrot.lane.b32.xlu0 %v4787, 8
    %v4808 = vpop.permute.xlu0 %4807
    %v4809 = vsel %vm2703, %v4808, %v4787
    %4810 = vrot.lane.b32.xlu0 %v4788, 8
    %v4811 = vpop.permute.xlu0 %4810
    %v4812 = vsel %vm2703, %v4811, %v4788
    %4813 = vrot.lane.b32.xlu0 %v4789, 8
    %v4814 = vpop.permute.xlu0 %4813
    %v4815 = vsel %vm2703, %v4814, %v4789
    %4816 = vrot.lane.b32.xlu0 %v4790, 8
    %v4817 = vpop.permute.xlu0 %4816
    %v4818 = vsel %vm2703, %v4817, %v4790
    %4819 = vrot.lane.b32.xlu0 %v4791, 8
    %v4820 = vpop.permute.xlu0 %4819
    %v4821 = vsel %vm2703, %v4820, %v4791
    %4822 = vrot.lane.b32.xlu0 %v4806, 8
    %v4823 = vpop.permute.xlu0 %4822
    %4824 = vrot.lane.b32.xlu0 %v4809, 8
    %v4825 = vpop.permute.xlu0 %4824
    %4826 = vrot.lane.b32.xlu0 %v4812, 8
    %v4827 = vpop.permute.xlu0 %4826
    %4828 = vrot.lane.b32.xlu0 %v4815, 8
    %v4829 = vpop.permute.xlu0 %4828
    %4830 = vrot.lane.b32.xlu0 %v4818, 8
    %v4831 = vpop.permute.xlu0 %4830
    %4832 = vrot.lane.b32.xlu0 %v4821, 8
    %v4833 = vpop.permute.xlu0 %4832
    %v4834 = vsel %vm2703, %v4823, %v4786
    %v4835 = vsel %vm2703, %v4825, %v4787
    %v4836 = vsel %vm2703, %v4827, %v4788
    %v4837 = vsel %vm2703, %v4829, %v4789
    %v4838 = vsel %vm2703, %v4831, %v4790
    %v4839 = vsel %vm2703, %v4833, %v4791
    %4846 = vrot.lane.b32.xlu0 %v4834, 121
    %v4847 = vpop.permute.xlu0 %4846
    %4848 = vrot.lane.b32.xlu0 %v4835, 121
    %v4849 = vpop.permute.xlu0 %4848
    %4850 = vrot.lane.b32.xlu0 %v4836, 121
    %v4851 = vpop.permute.xlu0 %4850
    %4852 = vrot.lane.b32.xlu0 %v4837, 121
    %v4853 = vpop.permute.xlu0 %4852
    %4854 = vrot.lane.b32.xlu0 %v4838, 121
    %v4855 = vpop.permute.xlu0 %4854
    %4856 = vrot.lane.b32.xlu0 %v4839, 121
    %v4857 = vpop.permute.xlu0 %4856
    %v4864 = vsel %vm978, %v4847, 0.0
    %v4865 = vsel %vm978, %v4849, 0.0
    %v4866 = vsel %vm978, %v4851, 0.0
    %v4867 = vsel %vm978, %v4853, 0.0
    %v4868 = vsel %vm978, %v4855, 0.0
    %v4869 = vsel %vm978, %v4857, 0.0
    %v4870 = vmul.f32 %v1472, %v4864
    %v4871 = vmul.f32 %v1472, %v4865
    %v4872 = vmul.f32 %v1472, %v4866
    %v4873 = vmul.f32 %v1472, %v4867
    %v4874 = vmul.f32 %v1472, %v4868
    %v4875 = vmul.f32 %v1472, %v4869
    %v4876 = vadd.f32 %v1405, %v4870
    %v4877 = vadd.f32 %v1405, %v4871
    %v4878 = vadd.f32 %v1405, %v4872
    %v4879 = vadd.f32 %v1405, %v4873
    %v4880 = vadd.f32 %v1405, %v4874
    %v4881 = vadd.f32 %v1405, %v4875
    %v4882 = vmul.f32 %v1601, %v4786
    %v4883 = vmul.f32 %v1601, %v4787
    %v4884 = vmul.f32 %v1601, %v4788
    %v4885 = vmul.f32 %v1601, %v4789
    %v4886 = vmul.f32 %v1601, %v4790
    %v4887 = vmul.f32 %v1601, %v4791
    %v4888 = vadd.f32 %v4882, 0.0
    %v4889 = vadd.f32 %v4883, 0.0
    %v4890 = vadd.f32 %v4884, 0.0
    %v4891 = vadd.f32 %v4885, 0.0
    %v4892 = vadd.f32 %v4886, 0.0
    %v4893 = vadd.f32 %v4887, 0.0
    %4894 = vrot.lane.b32.xlu0 %v4834, 127
    %v4895 = vpop.permute.xlu0 %4894
    %4896 = vrot.lane.b32.xlu0 %v4835, 127
    %v4897 = vpop.permute.xlu0 %4896
    %4898 = vrot.lane.b32.xlu0 %v4836, 127
    %v4899 = vpop.permute.xlu0 %4898
    %4900 = vrot.lane.b32.xlu0 %v4837, 127
    %v4901 = vpop.permute.xlu0 %4900
    %4902 = vrot.lane.b32.xlu0 %v4838, 127
    %v4903 = vpop.permute.xlu0 %4902
    %4904 = vrot.lane.b32.xlu0 %v4839, 127
    %v4905 = vpop.permute.xlu0 %4904
    %v4912 = vsel %vm2702, %v4895, 0.0
    %v4913 = vsel %vm2702, %v4897, 0.0
    %v4914 = vsel %vm2702, %v4899, 0.0
    %v4915 = vsel %vm2702, %v4901, 0.0
    %v4916 = vsel %vm2702, %v4903, 0.0
    %v4917 = vsel %vm2702, %v4905, 0.0
    %v4918 = vmul.f32 %v1730, %v4912
    %v4919 = vmul.f32 %v1730, %v4913
    %v4920 = vmul.f32 %v1730, %v4914
    %v4921 = vmul.f32 %v1730, %v4915
    %v4922 = vmul.f32 %v1730, %v4916
    %v4923 = vmul.f32 %v1730, %v4917
    %v4924 = vadd.f32 %v4876, %v4918
    %v4925 = vadd.f32 %v4877, %v4919
    %v4926 = vadd.f32 %v4878, %v4920
    %v4927 = vadd.f32 %v4879, %v4921
    %v4928 = vadd.f32 %v4880, %v4922
    %v4929 = vadd.f32 %v4881, %v4923
    %4930 = vrot.lane.b32.xlu0 %v4774, 8
    %v4931 = vpop.permute.xlu0 %4930
    %v4932 = vsel %vm2703, %v4931, %v4774
    %4933 = vrot.lane.b32.xlu0 %v4775, 8
    %v4934 = vpop.permute.xlu0 %4933
    %v4935 = vsel %vm2703, %v4934, %v4775
    %4936 = vrot.lane.b32.xlu0 %v4776, 8
    %v4937 = vpop.permute.xlu0 %4936
    %v4938 = vsel %vm2703, %v4937, %v4776
    %4939 = vrot.lane.b32.xlu0 %v4777, 8
    %v4940 = vpop.permute.xlu0 %4939
    %v4941 = vsel %vm2703, %v4940, %v4777
    %4942 = vrot.lane.b32.xlu0 %v4778, 8
    %v4943 = vpop.permute.xlu0 %4942
    %v4944 = vsel %vm2703, %v4943, %v4778
    %4945 = vrot.lane.b32.xlu0 %v4779, 8
    %v4946 = vpop.permute.xlu0 %4945
    %v4947 = vsel %vm2703, %v4946, %v4779
    %4948 = vrot.lane.b32.xlu0 %v4932, 8
    %v4949 = vpop.permute.xlu0 %4948
    %4950 = vrot.lane.b32.xlu0 %v4935, 8
    %v4951 = vpop.permute.xlu0 %4950
    %4952 = vrot.lane.b32.xlu0 %v4938, 8
    %v4953 = vpop.permute.xlu0 %4952
    %4954 = vrot.lane.b32.xlu0 %v4941, 8
    %v4955 = vpop.permute.xlu0 %4954
    %4956 = vrot.lane.b32.xlu0 %v4944, 8
    %v4957 = vpop.permute.xlu0 %4956
    %4958 = vrot.lane.b32.xlu0 %v4947, 8
    %v4959 = vpop.permute.xlu0 %4958
    %v4960 = vsel %vm2703, %v4949, %v4774
    %v4961 = vsel %vm2703, %v4951, %v4775
    %v4962 = vsel %vm2703, %v4953, %v4776
    %v4963 = vsel %vm2703, %v4955, %v4777
    %v4964 = vsel %vm2703, %v4957, %v4778
    %v4965 = vsel %vm2703, %v4959, %v4779
    %4972 = vrot.lane.b32.xlu0 %v4960, 121
    %v4973 = vpop.permute.xlu0 %4972
    %4974 = vrot.lane.b32.xlu0 %v4961, 121
    %v4975 = vpop.permute.xlu0 %4974
    %4976 = vrot.lane.b32.xlu0 %v4962, 121
    %v4977 = vpop.permute.xlu0 %4976
    %4978 = vrot.lane.b32.xlu0 %v4963, 121
    %v4979 = vpop.permute.xlu0 %4978
    %4980 = vrot.lane.b32.xlu0 %v4964, 121
    %v4981 = vpop.permute.xlu0 %4980
    %4982 = vrot.lane.b32.xlu0 %v4965, 121
    %v4983 = vpop.permute.xlu0 %4982
    %v4990 = vsel %vm978, %v4973, 0.0
    %v4991 = vsel %vm978, %v4975, 0.0
    %v4992 = vsel %vm978, %v4977, 0.0
    %v4993 = vsel %vm978, %v4979, 0.0
    %v4994 = vsel %vm978, %v4981, 0.0
    %v4995 = vsel %vm978, %v4983, 0.0
    %v4996 = vmul.f32 %v1485, %v4990
    %v4997 = vmul.f32 %v1485, %v4991
    %v4998 = vmul.f32 %v1485, %v4992
    %v4999 = vmul.f32 %v1485, %v4993
    %v5000 = vmul.f32 %v1485, %v4994
    %v5001 = vmul.f32 %v1485, %v4995
    %v5002 = vadd.f32 %v4888, %v4996
    %v5003 = vadd.f32 %v4889, %v4997
    %v5004 = vadd.f32 %v4890, %v4998
    %v5005 = vadd.f32 %v4891, %v4999
    %v5006 = vadd.f32 %v4892, %v5000
    %v5007 = vadd.f32 %v4893, %v5001
    %v5008 = vmul.f32 %v1614, %v4774
    %v5009 = vmul.f32 %v1614, %v4775
    %v5010 = vmul.f32 %v1614, %v4776
    %v5011 = vmul.f32 %v1614, %v4777
    %v5012 = vmul.f32 %v1614, %v4778
    %v5013 = vmul.f32 %v1614, %v4779
    %v5014 = vadd.f32 %v4924, %v5008
    %v5015 = vadd.f32 %v4925, %v5009
    %v5016 = vadd.f32 %v4926, %v5010
    %v5017 = vadd.f32 %v4927, %v5011
    %v5018 = vadd.f32 %v4928, %v5012
    %v5019 = vadd.f32 %v4929, %v5013
    %5020 = vrot.lane.b32.xlu0 %v4960, 127
    %v5021 = vpop.permute.xlu0 %5020
    %5022 = vrot.lane.b32.xlu0 %v4961, 127
    %v5023 = vpop.permute.xlu0 %5022
    %5024 = vrot.lane.b32.xlu0 %v4962, 127
    %v5025 = vpop.permute.xlu0 %5024
    %5026 = vrot.lane.b32.xlu0 %v4963, 127
    %v5027 = vpop.permute.xlu0 %5026
    %5028 = vrot.lane.b32.xlu0 %v4964, 127
    %v5029 = vpop.permute.xlu0 %5028
    %5030 = vrot.lane.b32.xlu0 %v4965, 127
    %v5031 = vpop.permute.xlu0 %5030
    %v5038 = vsel %vm2702, %v5021, 0.0
    %v5039 = vsel %vm2702, %v5023, 0.0
    %v5040 = vsel %vm2702, %v5025, 0.0
    %v5041 = vsel %vm2702, %v5027, 0.0
    %v5042 = vsel %vm2702, %v5029, 0.0
    %v5043 = vsel %vm2702, %v5031, 0.0
    %v5044 = vmul.f32 %v1743, %v5038
    %v5045 = vmul.f32 %v1743, %v5039
    %v5046 = vmul.f32 %v1743, %v5040
    %v5047 = vmul.f32 %v1743, %v5041
    %v5048 = vmul.f32 %v1743, %v5042
    %v5049 = vmul.f32 %v1743, %v5043
    %v5050 = vadd.f32 %v5002, %v5044
    %v5051 = vadd.f32 %v5003, %v5045
    %v5052 = vadd.f32 %v5004, %v5046
    %v5053 = vadd.f32 %v5005, %v5047
    %v5054 = vadd.f32 %v5006, %v5048
    %v5055 = vadd.f32 %v5007, %v5049
    %5056 = vrot.lane.b32.xlu0 %v4798, 8
    %v5057 = vpop.permute.xlu0 %5056
    %v5058 = vsel %vm2703, %v5057, %v4798
    %5059 = vrot.lane.b32.xlu0 %v4799, 8
    %v5060 = vpop.permute.xlu0 %5059
    %v5061 = vsel %vm2703, %v5060, %v4799
    %5062 = vrot.lane.b32.xlu0 %v4800, 8
    %v5063 = vpop.permute.xlu0 %5062
    %v5064 = vsel %vm2703, %v5063, %v4800
    %5065 = vrot.lane.b32.xlu0 %v4801, 8
    %v5066 = vpop.permute.xlu0 %5065
    %v5067 = vsel %vm2703, %v5066, %v4801
    %5068 = vrot.lane.b32.xlu0 %v4802, 8
    %v5069 = vpop.permute.xlu0 %5068
    %v5070 = vsel %vm2703, %v5069, %v4802
    %5071 = vrot.lane.b32.xlu0 %v4803, 8
    %v5072 = vpop.permute.xlu0 %5071
    %v5073 = vsel %vm2703, %v5072, %v4803
    %5074 = vrot.lane.b32.xlu0 %v5058, 8
    %v5075 = vpop.permute.xlu0 %5074
    %5076 = vrot.lane.b32.xlu0 %v5061, 8
    %v5077 = vpop.permute.xlu0 %5076
    %5078 = vrot.lane.b32.xlu0 %v5064, 8
    %v5079 = vpop.permute.xlu0 %5078
    %5080 = vrot.lane.b32.xlu0 %v5067, 8
    %v5081 = vpop.permute.xlu0 %5080
    %5082 = vrot.lane.b32.xlu0 %v5070, 8
    %v5083 = vpop.permute.xlu0 %5082
    %5084 = vrot.lane.b32.xlu0 %v5073, 8
    %v5085 = vpop.permute.xlu0 %5084
    %v5086 = vsel %vm2703, %v5075, %v4798
    %v5087 = vsel %vm2703, %v5077, %v4799
    %v5088 = vsel %vm2703, %v5079, %v4800
    %v5089 = vsel %vm2703, %v5081, %v4801
    %v5090 = vsel %vm2703, %v5083, %v4802
    %v5091 = vsel %vm2703, %v5085, %v4803
    %5098 = vrot.lane.b32.xlu0 %v5086, 121
    %v5099 = vpop.permute.xlu0 %5098
    %5100 = vrot.lane.b32.xlu0 %v5087, 121
    %v5101 = vpop.permute.xlu0 %5100
    %5102 = vrot.lane.b32.xlu0 %v5088, 121
    %v5103 = vpop.permute.xlu0 %5102
    %5104 = vrot.lane.b32.xlu0 %v5089, 121
    %v5105 = vpop.permute.xlu0 %5104
    %5106 = vrot.lane.b32.xlu0 %v5090, 121
    %v5107 = vpop.permute.xlu0 %5106
    %5108 = vrot.lane.b32.xlu0 %v5091, 121
    %v5109 = vpop.permute.xlu0 %5108
    %v5116 = vsel %vm978, %v5099, 0.0
    %v5117 = vsel %vm978, %v5101, 0.0
    %v5118 = vsel %vm978, %v5103, 0.0
    %v5119 = vsel %vm978, %v5105, 0.0
    %v5120 = vsel %vm978, %v5107, 0.0
    %v5121 = vsel %vm978, %v5109, 0.0
    %v5122 = vmul.f32 %v1522, %v5116
    %v5123 = vmul.f32 %v1522, %v5117
    %v5124 = vmul.f32 %v1522, %v5118
    %v5125 = vmul.f32 %v1522, %v5119
    %v5126 = vmul.f32 %v1522, %v5120
    %v5127 = vmul.f32 %v1522, %v5121
    %v5128 = vadd.f32 %v5014, %v5122
    %v5129 = vadd.f32 %v5015, %v5123
    %v5130 = vadd.f32 %v5016, %v5124
    %v5131 = vadd.f32 %v5017, %v5125
    %v5132 = vadd.f32 %v5018, %v5126
    %v5133 = vadd.f32 %v5019, %v5127
    %v5134 = vmul.f32 %v1651, %v4798
    %v5135 = vmul.f32 %v1651, %v4799
    %v5136 = vmul.f32 %v1651, %v4800
    %v5137 = vmul.f32 %v1651, %v4801
    %v5138 = vmul.f32 %v1651, %v4802
    %v5139 = vmul.f32 %v1651, %v4803
    %v5140 = vadd.f32 %v5050, %v5134
    %v5141 = vadd.f32 %v5051, %v5135
    %v5142 = vadd.f32 %v5052, %v5136
    %v5143 = vadd.f32 %v5053, %v5137
    %v5144 = vadd.f32 %v5054, %v5138
    %v5145 = vadd.f32 %v5055, %v5139
    %5146 = vrot.lane.b32.xlu0 %v5086, 127
    %v5147 = vpop.permute.xlu0 %5146
    %5148 = vrot.lane.b32.xlu0 %v5087, 127
    %v5149 = vpop.permute.xlu0 %5148
    %5150 = vrot.lane.b32.xlu0 %v5088, 127
    %v5151 = vpop.permute.xlu0 %5150
    %5152 = vrot.lane.b32.xlu0 %v5089, 127
    %v5153 = vpop.permute.xlu0 %5152
    %5154 = vrot.lane.b32.xlu0 %v5090, 127
    %v5155 = vpop.permute.xlu0 %5154
    %5156 = vrot.lane.b32.xlu0 %v5091, 127
    %v5157 = vpop.permute.xlu0 %5156
    %v5164 = vsel %vm2702, %v5147, 0.0
    %v5165 = vsel %vm2702, %v5149, 0.0
    %v5166 = vsel %vm2702, %v5151, 0.0
    %v5167 = vsel %vm2702, %v5153, 0.0
    %v5168 = vsel %vm2702, %v5155, 0.0
    %v5169 = vsel %vm2702, %v5157, 0.0
    %v5170 = vmul.f32 %v1780, %v5164
    %v5171 = vmul.f32 %v1780, %v5165
    %v5172 = vmul.f32 %v1780, %v5166
    %v5173 = vmul.f32 %v1780, %v5167
    %v5174 = vmul.f32 %v1780, %v5168
    %v5175 = vmul.f32 %v1780, %v5169
    %v5176 = vadd.f32 %v5128, %v5170
    %v5177 = vadd.f32 %v5129, %v5171
    %v5178 = vadd.f32 %v5130, %v5172
    %v5179 = vadd.f32 %v5131, %v5173
    %v5180 = vadd.f32 %v5132, %v5174
    %v5181 = vadd.f32 %v5133, %v5175
    %v5182 = vadd.f32 %v5176, %v5140
    %v5183 = vadd.f32 %v5177, %v5141
    %v5184 = vadd.f32 %v5178, %v5142
    %v5185 = vadd.f32 %v5179, %v5143
    %v5186 = vadd.f32 %v5180, %v5144
    %v5187 = vadd.f32 %v5181, %v5145
    %v5188 = vadd.f32 %v3578, %v5182
    %v5189 = vadd.f32 %v3651, %v5183
    %v5190 = vadd.f32 %v3724, %v5184
    %v5191 = vadd.f32 %v3797, %v5185
    %v5192 = vadd.f32 %v3870, %v5186
    %v5193 = vadd.f32 %v3943, %v5187
    %vm5194 = vcmask 64512
    %5195 = vst.msk [vmem:[%s5] sm:$0xff] %vm5194, %v3502
    %5196 = vst.msk [vmem:[%s5 + $0x8] sm:$0xff] %vm5194, %v3503
    %5197 = vst.msk [vmem:[%s5 + $0x10] sm:$0xff] %vm5194, %v3504
    %5198 = vst.msk [vmem:[%s5 + $0x60] sm:$0xff] %vm5194, %v3505
    %5199 = vst.msk [vmem:[%s5 + $0x68] sm:$0xff] %vm5194, %v3506
    %5200 = vst.msk [vmem:[%s5 + $0x70] sm:$0xff] %vm5194, %v3507
    %s5201 = scalar_lea.vmem %s5, 24
    %5202 = vst.msk [vmem:[%s5201] sm:$0xff] %vm5194, %v3088
    %5203 = vst.msk [vmem:[%s5201 + $0x8] sm:$0xff] %vm5194, %v3089
    %5204 = vst.msk [vmem:[%s5201 + $0x10] sm:$0xff] %vm5194, %v3090
    %5205 = vst.msk [vmem:[%s5201 + $0x60] sm:$0xff] %vm5194, %v3091
    %5206 = vst.msk [vmem:[%s5201 + $0x68] sm:$0xff] %vm5194, %v3092
    %5207 = vst.msk [vmem:[%s5201 + $0x70] sm:$0xff] %vm5194, %v3093
    %s5208 = scalar_lea.vmem %s5, 48
    %5209 = vst.msk [vmem:[%s5208] sm:$0xff] %vm5194, %v5188
    %5210 = vst.msk [vmem:[%s5208 + $0x8] sm:$0xff] %vm5194, %v5189
    %5211 = vst.msk [vmem:[%s5208 + $0x10] sm:$0xff] %vm5194, %v5190
    %5212 = vst.msk [vmem:[%s5208 + $0x60] sm:$0xff] %vm5194, %v5191
    %5213 = vst.msk [vmem:[%s5208 + $0x68] sm:$0xff] %vm5194, %v5192
    %5214 = vst.msk [vmem:[%s5208 + $0x70] sm:$0xff] %vm5194, %v5193
    %s5215 = scalar_lea.vmem %s5, 72
    %5216 = vst.msk [vmem:[%s5215] sm:$0xff] %vm5194, %v4774
    %5217 = vst.msk [vmem:[%s5215 + $0x8] sm:$0xff] %vm5194, %v4775
    %5218 = vst.msk [vmem:[%s5215 + $0x10] sm:$0xff] %vm5194, %v4776
    %5219 = vst.msk [vmem:[%s5215 + $0x60] sm:$0xff] %vm5194, %v4777
    %5220 = vst.msk [vmem:[%s5215 + $0x68] sm:$0xff] %vm5194, %v4778
    %5221 = vst.msk [vmem:[%s5215 + $0x70] sm:$0xff] %vm5194, %v4779
    // Predicated region
    $region34: #{wavenet_forward.1} parent=1 // pred_check
      _
    $region35: #{wavenet_forward.1} parent=1 // pred_check_branch
      %5223 = sbr.rel (0) target = $region37
    $region36: #{wavenet_forward.1} parent=1 // pred_region
      _
    $region37: #{wavenet_forward.1} parent=1 // pred_fallthru
      _
    // Predicated region
    $region38: #{wavenet_forward.1} parent=1 // pred_check
      _
    $region39: #{wavenet_forward.1} parent=1 // pred_check_branch
      %5225 = sbr.rel (0) target = $region41
    $region40: #{wavenet_forward.1} parent=1 // pred_region
      _
    $region41: #{wavenet_forward.1} parent=1 // pred_fallthru
      _
    %5226 = vsyncpa [#allocation5], 1
    %5227 = vsyncpa [#allocation6], 1
    %5228 = vsyncpa [#allocation8], 1

</llo_original>
